<compile_context>
chip_gen: v5e
topology: v5e:2x2
jax: 0.10.0
libtpu: 0.0.40
codegen_flags: <defaults>
</compile_context>

<pallas_src>
import functools

import jax
import jax.numpy as jnp
from jax import lax
from jax.experimental import pallas as pl
from jax.experimental.pallas import tpu as pltpu


def _round_up(n, m):
    return ((n + m - 1) // m) * m


def _pad_gate_cols(w, h, hp):
    """Pad the last (4*h) axis per-gate to 4*hp, keeping PyTorch [i,f,g,o] order."""
    if hp == h:
        return w
    parts = jnp.split(w, 4, axis=-1)
    cfg = [(0, 0)] * (w.ndim - 1) + [(0, hp - h)]
    return jnp.concatenate([jnp.pad(p, cfg) for p in parts], axis=-1)


# ----------------------------------------------------------------------------
# Fused kernel: all LSTM layers + full time recurrence + Linear(H, 1) head.
# ----------------------------------------------------------------------------
def _fused_lstm_kernel(x_ref, wih_ref, whh_ref, b_ref, h0_ref, c0_ref,
                       fcw_ref, fcb_ref,
                       out_ref, hn_ref, cn_ref,
                       seq_scr, gproj_scr):
    T, Bb, P = x_ref.shape
    L, Hp, G = whh_ref.shape            # G == 4 * Hp
    TC = gproj_scr.shape[0]             # time-chunk length (static)

    n_full, rem = divmod(T, TC)
    chunk_sizes = [TC] * n_full + ([rem] if rem else [])

    h_last = None
    for l in range(L):                  # static (unrolled) layer loop
        w_hh = whh_ref[l]               # (Hp, G) stays VMEM resident for the layer
        bias = b_ref[l]                 # (1, G) f32
        if l == 0:
            w_ih = wih_ref[0]           # (P, G)
            in_w = P
        else:
            w_full = wih_ref[l]
            w_ih = w_full[:Hp, :] if P != Hp else w_full   # only first Hp rows used
            in_w = Hp
        write_seq = l < L - 1           # last layer's per-step output is never needed

        h = h0_ref[l]                   # (Bb, Hp) f32 carries
        c = c0_ref[l]
        t0 = 0
        for tc in chunk_sizes:          # static chunk loop (bounds peak VMEM)
            # ---- phase 1 (per chunk): x @ W_ih (+ bias) as one MXU matmul ----
            if l == 0:
                xin = x_ref[t0:t0 + tc]          # (tc, Bb, P)
            else:
                xin = seq_scr[t0:t0 + tc]        # (tc, Bb, Hp)
            proj = (jnp.dot(xin.reshape(tc * Bb, in_w).astype(w_ih.dtype), w_ih,
                            preferred_element_type=jnp.float32)
                    + bias)                                  # (tc*Bb, G) f32
            gproj_scr[0:tc] = proj.reshape(tc, Bb, G)

            # ---- phase 2: serial recurrence; only h @ W_hh on the critical path --
            def step(t, carry, _t0=t0, _write=write_seq):
                h, c = carry
                gates = gproj_scr[t] + jnp.dot(h.astype(w_hh.dtype), w_hh,
                                               preferred_element_type=jnp.float32)
                i = jax.nn.sigmoid(gates[:, 0 * Hp:1 * Hp])  # 128-aligned lane slices
                f = jax.nn.sigmoid(gates[:, 1 * Hp:2 * Hp])
                g = jnp.tanh(gates[:, 2 * Hp:3 * Hp])
                o = jax.nn.sigmoid(gates[:, 3 * Hp:4 * Hp])
                c_new = f * c + i * g
                h_new = o * jnp.tanh(c_new)
                if _write:              # feed next layer through VMEM, never HBM
                    seq_scr[_t0 + t] = h_new.astype(seq_scr.dtype)
                return h_new, c_new

            if tc <= 8:
                unroll = tc
            elif tc % 8 == 0:
                unroll = 8
            elif tc % 4 == 0:
                unroll = 4
            elif tc % 2 == 0:
                unroll = 2
            else:
                unroll = 1
            h, c = lax.fori_loop(0, tc, step, (h, c), unroll=unroll)
            t0 += tc

        hn_ref[l] = h                   # written once per layer, not per step
        cn_ref[l] = c
        h_last = h

    # ---- fused FC head on the last step of the last layer (lane-dense output) ----
    out_ref[...] = (jnp.dot(h_last.astype(fcw_ref.dtype), fcw_ref[...],
                            preferred_element_type=jnp.float32)
                    + fcb_ref[...])


def _fused_lstm_call(x_p, w_ih_p, w_hh_p, b_p, h0_p, c0_p, fcw_p, fcb_p,
                     b_block, t_chunk, vmem_limit):
    T, Bp, P = x_p.shape
    L, Hp, G = w_hh_p.shape
    Fp = fcw_p.shape[1]
    nb = Bp // b_block
    seq_t = T if L > 1 else 1           # layer-handoff scratch only needed for L > 1
    return pl.pallas_call(
        _fused_lstm_kernel,
        out_shape=(
            jax.ShapeDtypeStruct((Bp, Fp), jnp.float32),
            jax.ShapeDtypeStruct((L, Bp, Hp), jnp.float32),
            jax.ShapeDtypeStruct((L, Bp, Hp), jnp.float32),
        ),
        grid_spec=pltpu.PrefetchScalarGridSpec(
            num_scalar_prefetch=0,
            grid=(nb,),                                          # batch blocks only
            in_specs=[
                pl.BlockSpec((T, b_block, P), lambda b: (0, b, 0)),   # x (time-major)
                pl.BlockSpec((L, P, G), lambda b: (0, 0, 0)),         # stacked W_ih
                pl.BlockSpec((L, Hp, G), lambda b: (0, 0, 0)),        # stacked W_hh
                pl.BlockSpec((L, 1, G), lambda b: (0, 0, 0)),         # fused biases
                pl.BlockSpec((L, b_block, Hp), lambda b: (0, b, 0)),  # h0
                pl.BlockSpec((L, b_block, Hp), lambda b: (0, b, 0)),  # c0
                pl.BlockSpec((Hp, Fp), lambda b: (0, 0)),             # fc_w
                pl.BlockSpec((1, Fp), lambda b: (0, 0)),              # fc_b
            ],
            out_specs=[
                pl.BlockSpec((b_block, Fp), lambda b: (b, 0)),        # fc output
                pl.BlockSpec((L, b_block, Hp), lambda b: (0, b, 0)),  # h_n
                pl.BlockSpec((L, b_block, Hp), lambda b: (0, b, 0)),  # c_n
            ],
            scratch_shapes=[
                pltpu.VMEM((seq_t, b_block, Hp), x_p.dtype),   # layer-to-layer seq
                pltpu.VMEM((t_chunk, b_block, G), jnp.float32),  # chunked x@W_ih+b
            ],
        ),
        compiler_params=pltpu.CompilerParams(
            dimension_semantics=("parallel",),         # batch blocks independent
            vmem_limit_bytes=vmem_limit),
    )(x_p, w_ih_p, w_hh_p, b_p, h0_p, c0_p, fcw_p, fcb_p)


# ----------------------------------------------------------------------------
# Model wrapper: pad/pack to (8,128)-aligned shapes, call the fused kernel, slice.
# ----------------------------------------------------------------------------
def lstm_model_forward(x, params, num_layers, hidden_size, hidden_state=None,
                       param_dtype=jnp.float32):
    B, T, Din = x.shape
    H, L = hidden_size, num_layers
    Hp = _round_up(H, 128)
    P = max(_round_up(Din, 128), Hp)       # padded width for layer-0 input
    G = 4 * Hp
    Fp = 128                               # padded FC output width (lane dense)

    # Batch padding / block choice: >= 2 blocks when possible (v7x has 2 TCs),
    # padding waste bounded by < b_block rows for big batches.
    Bp = _round_up(B, 8)
    if Bp <= 8:
        b_block = Bp
    elif Bp <= 512:
        Bp = _round_up(Bp, 16)
        b_block = Bp // 2
    else:
        Bp = _round_up(Bp, 128)
        b_block = 128

    t_chunk = min(T, 16)                   # time-chunk for the input projection

    if hidden_state is None:
        h0 = jnp.zeros((L, B, H), jnp.float32)
        c0 = jnp.zeros((L, B, H), jnp.float32)
    else:
        h0, c0 = hidden_state

    # Pack per-layer weights into padded stacks (zero padding is mathematically
    # inert: padded gate columns get 0 pre-activation and start from h=c=0).
    w_ih_list, w_hh_list, b_list = [], [], []
    for l in range(L):
        w_ih = _pad_gate_cols(params[f"w_ih_{l}"], H, Hp)
        w_ih = jnp.pad(w_ih, ((0, P - w_ih.shape[0]), (0, 0)))
        w_hh = _pad_gate_cols(params[f"w_hh_{l}"], H, Hp)
        w_hh = jnp.pad(w_hh, ((0, Hp - H), (0, 0)))
        b = _pad_gate_cols(params[f"b_{l}"], H, Hp)
        w_ih_list.append(w_ih)
        w_hh_list.append(w_hh)
        b_list.append(b)
    w_ih_p = jnp.stack(w_ih_list).astype(param_dtype)      # (L, P, 4Hp)
    w_hh_p = jnp.stack(w_hh_list).astype(param_dtype)      # (L, Hp, 4Hp)
    b_p = jnp.stack(b_list).astype(jnp.float32)            # (L, 1, 4Hp)  f32 biases
    fcw_p = jnp.pad(params["fc_w"], ((0, Hp - H), (0, Fp - 1))).astype(param_dtype)
    fcb_p = jnp.pad(params["fc_b"], ((0, 0), (0, Fp - 1))).astype(jnp.float32)

    x_p = jnp.pad(jnp.transpose(x, (1, 0, 2)),             # (T, B, Din) time-major
                  ((0, 0), (0, Bp - B), (0, P - Din))).astype(param_dtype)
    h0_p = jnp.pad(h0, ((0, 0), (0, Bp - B), (0, Hp - H))).astype(jnp.float32)
    c0_p = jnp.pad(c0, ((0, 0), (0, Bp - B), (0, Hp - H))).astype(jnp.float32)

    # Explicit VMEM budget: scratches + double-buffered blocks + headroom.
    isz = jnp.dtype(param_dtype).itemsize
    seq_t = T if L > 1 else 1
    vmem_est = (
        2 * T * b_block * P * isz                      # x block (double-buffered)
        + seq_t * b_block * Hp * isz                   # layer-handoff scratch
        + 2 * t_chunk * b_block * G * 4                # gproj scratch + chunk temp
        + 2 * L * (P + Hp) * G * isz                   # weight stacks
        + 2 * L * G * 4                                # biases
        + 2 * (Hp * Fp * isz + Fp * 4)                 # fc weights/bias
        + 2 * 2 * L * b_block * Hp * 4                 # h0 / c0 blocks
        + 2 * (b_block * Fp + 2 * L * b_block * Hp) * 4  # outputs
    )
    vmem_limit = int(min(100 * 2 ** 20, max(32 * 2 ** 20, int(vmem_est * 1.5))))

    out_p, hn_p, cn_p = _fused_lstm_call(x_p, w_ih_p, w_hh_p, b_p, h0_p, c0_p,
                                         fcw_p, fcb_p, b_block, t_chunk, vmem_limit)
    out = out_p[:B, :1]
    h_n = hn_p[:, :B, :H]
    c_n = cn_p[:, :B, :H]
    return out, (h_n, c_n)


# ----------------------------------------------------------------------------
# Deterministic parameter init (mimics PyTorch uniform(-1/sqrt(H), 1/sqrt(H)))
# ----------------------------------------------------------------------------
def init_params(key, input_size, hidden_size, num_layers):
    params = {}
    k = 1.0 / jnp.sqrt(hidden_size)
    for l in range(num_layers):
        din = input_size if l == 0 else hidden_size
        key, k1, k2, k3, k4 = jax.random.split(key, 5)
        # Stored pre-transposed: (D_in, 4H) / (H, 4H) so the kernel does x @ W.
        params[f"w_ih_{l}"] = jax.random.uniform(k1, (din, 4 * hidden_size),
                                                 jnp.float32, -k, k)
        params[f"w_hh_{l}"] = jax.random.uniform(k2, (hidden_size, 4 * hidden_size),
                                                 jnp.float32, -k, k)
        b_ih = jax.random.uniform(k3, (4 * hidden_size,), jnp.float32, -k, k)
        b_hh = jax.random.uniform(k4, (4 * hidden_size,), jnp.float32, -k, k)
        params[f"b_{l}"] = (b_ih + b_hh).reshape(1, 4 * hidden_size)
    key, k5, k6 = jax.random.split(key, 3)
    kf = 1.0 / jnp.sqrt(hidden_size)
    params["fc_w"] = jax.random.uniform(k5, (hidden_size, 1), jnp.float32, -kf, kf)
    params["fc_b"] = jax.random.uniform(k6, (1, 1), jnp.float32, -kf, kf)
    return params


# ----------------------------------------------------------------------------
# Pure-JAX reference (same math, no Pallas) for a correctness check.
# ----------------------------------------------------------------------------
def lstm_model_ref(x, params, num_layers, H):
    B, T, _ = x.shape
    h = [jnp.zeros((B, H), jnp.float32) for _ in range(num_layers)]
    c = [jnp.zeros((B, H), jnp.float32) for _ in range(num_layers)]
    last = None
    for t in range(T):
        inp = x[:, t, :]
        for l in range(num_layers):
            g = inp @ params[f"w_ih_{l}"] + h[l] @ params[f"w_hh_{l}"] + params[f"b_{l}"]
            i = jax.nn.sigmoid(g[:, :H])
            f = jax.nn.sigmoid(g[:, H:2 * H])
            gg = jnp.tanh(g[:, 2 * H:3 * H])
            o = jax.nn.sigmoid(g[:, 3 * H:4 * H])
            c[l] = f * c[l] + i * gg
            h[l] = o * jnp.tanh(c[l])
            inp = h[l]
        last = inp
    out = last @ params["fc_w"] + params["fc_b"]
    return out, (jnp.stack(h), jnp.stack(c))


if __name__ == "__main__":
    input_size, hidden_size, num_layers = 4, 32, 2
    B, T = 2, 8

    key = jax.random.PRNGKey(0)
    key, xk, pk = jax.random.split(key, 3)
    x = jax.random.normal(xk, (B, T, input_size), jnp.float32)
    params = init_params(pk, input_size, hidden_size, num_layers)

    out_ref, (h_ref, c_ref) = lstm_model_ref(x, params, num_layers, hidden_size)

    # Exact float32 path (matches PyTorch semantics).
    fwd32 = jax.jit(functools.partial(lstm_model_forward,
                                      num_layers=num_layers,
                                      hidden_size=hidden_size,
                                      param_dtype=jnp.float32))
    out, (h_n, c_n) = fwd32(x, params)
    jax.block_until_ready((out, h_n, c_n))
    assert out.shape == (B, 1)
    assert h_n.shape == (num_layers, B, hidden_size)
    assert c_n.shape == (num_layers, B, hidden_size)
    assert jnp.allclose(out, out_ref, atol=2e-4), float(jnp.abs(out - out_ref).max())
    assert jnp.allclose(h_n, h_ref, atol=2e-4), float(jnp.abs(h_n - h_ref).max())
    assert jnp.allclose(c_n, c_ref, atol=2e-4), float(jnp.abs(c_n - c_ref).max())

    # bf16-weights MXU path (f32 gate/state accumulation) with dtype-aware tolerance.
    fwd_bf16 = jax.jit(functools.partial(lstm_model_forward,
                                         num_layers=num_layers,
                                         hidden_size=hidden_size,
                                         param_dtype=jnp.bfloat16))
    out_b, (h_b, c_b) = fwd_bf16(x, params)
    jax.block_until_ready((out_b, h_b, c_b))
    assert jnp.allclose(out_b, out_ref, atol=5e-2), float(jnp.abs(out_b - out_ref).max())
    assert jnp.allclose(h_b, h_ref, atol=5e-2), float(jnp.abs(h_b - h_ref).max())
    assert jnp.allclose(c_b, c_ref, atol=5e-2), float(jnp.abs(c_b - c_ref).max())

    print("KERNEL_OK")
</pallas_src>

<mosaic_0001>
module attributes {stable_mosaic.version = 11 : i64} {
  func.func @_fused_lstm_kernel(%arg0: i32, %arg1: memref<8x8x128xf32, #tpu.memory_space<vmem>>, %arg2: memref<2x128x512xf32, #tpu.memory_space<vmem>>, %arg3: memref<2x128x512xf32, #tpu.memory_space<vmem>>, %arg4: memref<2x1x512xf32, #tpu.memory_space<vmem>>, %arg5: memref<2x8x128xf32, #tpu.memory_space<vmem>>, %arg6: memref<2x8x128xf32, #tpu.memory_space<vmem>>, %arg7: memref<128x128xf32, #tpu.memory_space<vmem>>, %arg8: memref<1x128xf32, #tpu.memory_space<vmem>>, %arg9: memref<8x128xf32, #tpu.memory_space<vmem>>, %arg10: memref<2x8x128xf32, #tpu.memory_space<vmem>>, %arg11: memref<2x8x128xf32, #tpu.memory_space<vmem>>, %arg12: memref<8x8x128xf32, #tpu.memory_space<vmem>>, %arg13: memref<8x8x512xf32, #tpu.memory_space<vmem>>) attributes {dimension_semantics = [#tpu.dimension_semantics<parallel>], iteration_bounds = array<i64: 1>, scalar_prefetch = 0 : i64, scratch_operands = 2 : i64, tpu.core_type = #tpu.core_type<tc>, window_params = [{transform_indices = @transform_0, window_bounds = array<i64: 8, 8, 128>}, {pipeline_mode = #tpu.pipeline_mode<synchronous>, transform_indices = @transform_1, window_bounds = array<i64: 2, 128, 512>}, {pipeline_mode = #tpu.pipeline_mode<synchronous>, transform_indices = @transform_2, window_bounds = array<i64: 2, 128, 512>}, {pipeline_mode = #tpu.pipeline_mode<synchronous>, transform_indices = @transform_3, window_bounds = array<i64: 2, 1, 512>}, {transform_indices = @transform_4, window_bounds = array<i64: 2, 8, 128>}, {transform_indices = @transform_5, window_bounds = array<i64: 2, 8, 128>}, {pipeline_mode = #tpu.pipeline_mode<synchronous>, transform_indices = @transform_6, window_bounds = array<i64: 128, 128>}, {pipeline_mode = #tpu.pipeline_mode<synchronous>, transform_indices = @transform_7, window_bounds = array<i64: 1, 128>}, {transform_indices = @transform_8, window_bounds = array<i64: 8, 128>}, {transform_indices = @transform_9, window_bounds = array<i64: 2, 8, 128>}, {transform_indices = @transform_10, window_bounds = array<i64: 2, 8, 128>}]} {
    %c0 = arith.constant 0 : index
    %c0_0 = arith.constant 0 : index
    %c0_1 = arith.constant 0 : index
    %0 = vector.load %arg3[%c0, %c0_0, %c0_1] : memref<2x128x512xf32, #tpu.memory_space<vmem>>, vector<1x128x512xf32>
    %1 = vector.shape_cast %0 : vector<1x128x512xf32> to vector<128x512xf32>
    %c0_2 = arith.constant 0 : index
    %c0_3 = arith.constant 0 : index
    %c0_4 = arith.constant 0 : index
    %2 = vector.load %arg4[%c0_2, %c0_3, %c0_4] : memref<2x1x512xf32, #tpu.memory_space<vmem>>, vector<1x1x512xf32>
    %3 = vector.shape_cast %2 : vector<1x1x512xf32> to vector<1x512xf32>
    %c0_5 = arith.constant 0 : index
    %c0_6 = arith.constant 0 : index
    %c0_7 = arith.constant 0 : index
    %4 = vector.load %arg2[%c0_5, %c0_6, %c0_7] : memref<2x128x512xf32, #tpu.memory_space<vmem>>, vector<1x128x512xf32>
    %5 = vector.shape_cast %4 : vector<1x128x512xf32> to vector<128x512xf32>
    %c0_8 = arith.constant 0 : index
    %c0_9 = arith.constant 0 : index
    %c0_10 = arith.constant 0 : index
    %6 = vector.load %arg5[%c0_8, %c0_9, %c0_10] : memref<2x8x128xf32, #tpu.memory_space<vmem>>, vector<1x8x128xf32>
    %7 = vector.shape_cast %6 : vector<1x8x128xf32> to vector<8x128xf32>
    %c0_11 = arith.constant 0 : index
    %c0_12 = arith.constant 0 : index
    %c0_13 = arith.constant 0 : index
    %8 = vector.load %arg6[%c0_11, %c0_12, %c0_13] : memref<2x8x128xf32, #tpu.memory_space<vmem>>, vector<1x8x128xf32>
    %9 = vector.shape_cast %8 : vector<1x8x128xf32> to vector<8x128xf32>
    %c0_14 = arith.constant 0 : index
    %c0_15 = arith.constant 0 : index
    %c0_16 = arith.constant 0 : index
    %10 = vector.load %arg1[%c0_14, %c0_15, %c0_16] : memref<8x8x128xf32, #tpu.memory_space<vmem>>, vector<8x8x128xf32>
    %11 = vector.shape_cast %10 : vector<8x8x128xf32> to vector<64x128xf32>
    %cst = arith.constant dense<0.000000e+00> : vector<64x512xf32>
    %12 = tpu.matmul %11, %5, %cst {dimension_numbers = #tpu.dot_dimension_numbers<[1], [0], [0], [1], [0, 0, 1, 1], [], []>} : vector<64x128xf32>, vector<128x512xf32>, vector<64x512xf32> -> vector<64x512xf32>
    %13 = vector.broadcast %3 : vector<1x512xf32> to vector<64x512xf32>
    %14 = arith.addf %12, %13 : vector<64x512xf32>
    %15 = vector.shape_cast %14 : vector<64x512xf32> to vector<8x8x512xf32>
    %c0_17 = arith.constant 0 : index
    %c0_18 = arith.constant 0 : index
    %c0_19 = arith.constant 0 : index
    %16 = vector.load %arg13[%c0_17, %c0_18, %c0_19] : memref<8x8x512xf32, #tpu.memory_space<vmem>>, vector<8x8x512xf32>
    tpu.vector_store %arg13[%c0_17, %c0_18, %c0_19], %15 {strides = array<i32>} : memref<8x8x512xf32, #tpu.memory_space<vmem>>, vector<8x8x512xf32>,
    %c0_i32 = arith.constant 0 : i32
    %17 = arith.index_cast %c0_i32 : i32 to index
    %c0_20 = arith.constant 0 : index
    %c0_21 = arith.constant 0 : index
    %18 = vector.load %arg13[%17, %c0_20, %c0_21] : memref<8x8x512xf32, #tpu.memory_space<vmem>>, vector<1x8x512xf32>
    %19 = vector.shape_cast %18 : vector<1x8x512xf32> to vector<8x512xf32>
    %cst_22 = arith.constant dense<0.000000e+00> : vector<8x512xf32>
    %20 = tpu.matmul %7, %1, %cst_22 {dimension_numbers = #tpu.dot_dimension_numbers<[1], [0], [0], [1], [0, 0, 1, 1], [], []>} : vector<8x128xf32>, vector<128x512xf32>, vector<8x512xf32> -> vector<8x512xf32>
    %21 = arith.addf %19, %20 : vector<8x512xf32>
    %22 = vector.extract_strided_slice %21 {offsets = [0, 0], sizes = [8, 128], strides = [1, 1]} : vector<8x512xf32> to vector<8x128xf32>
    %23 = arith.negf %22 : vector<8x128xf32>
    %24 = math.exp %23 : vector<8x128xf32>
    %cst_23 = arith.constant 1.000000e+00 : f32
    %25 = vector.broadcast %cst_23 : f32 to vector<8x128xf32>
    %26 = arith.addf %25, %24 : vector<8x128xf32>
    %27 = arith.divf %25, %26 : vector<8x128xf32>
    %28 = vector.extract_strided_slice %21 {offsets = [0, 128], sizes = [8, 128], strides = [1, 1]} : vector<8x512xf32> to vector<8x128xf32>
    %29 = arith.negf %28 : vector<8x128xf32>
    %30 = math.exp %29 : vector<8x128xf32>
    %cst_24 = arith.constant 1.000000e+00 : f32
    %31 = vector.broadcast %cst_24 : f32 to vector<8x128xf32>
    %32 = arith.addf %31, %30 : vector<8x128xf32>
    %33 = arith.divf %31, %32 : vector<8x128xf32>
    %34 = vector.extract_strided_slice %21 {offsets = [0, 256], sizes = [8, 128], strides = [1, 1]} : vector<8x512xf32> to vector<8x128xf32>
    %35 = math.tanh %34 : vector<8x128xf32>
    %36 = vector.extract_strided_slice %21 {offsets = [0, 384], sizes = [8, 128], strides = [1, 1]} : vector<8x512xf32> to vector<8x128xf32>
    %37 = arith.negf %36 : vector<8x128xf32>
    %38 = math.exp %37 : vector<8x128xf32>
    %cst_25 = arith.constant 1.000000e+00 : f32
    %39 = vector.broadcast %cst_25 : f32 to vector<8x128xf32>
    %40 = arith.addf %39, %38 : vector<8x128xf32>
    %41 = arith.divf %39, %40 : vector<8x128xf32>
    %42 = arith.mulf %33, %9 : vector<8x128xf32>
    %43 = arith.mulf %27, %35 : vector<8x128xf32>
    %44 = arith.addf %42, %43 : vector<8x128xf32>
    %45 = math.tanh %44 : vector<8x128xf32>
    %46 = arith.mulf %41, %45 : vector<8x128xf32>
    %c0_i32_26 = arith.constant 0 : i32
    %47 = arith.addi %c0_i32_26, %c0_i32 : i32
    %48 = arith.index_cast %47 : i32 to index
    %c0_27 = arith.constant 0 : index
    %c0_28 = arith.constant 0 : index
    %49 = vector.load %arg12[%48, %c0_27, %c0_28] : memref<8x8x128xf32, #tpu.memory_space<vmem>>, vector<1x8x128xf32>
    %50 = vector.shape_cast %49 : vector<1x8x128xf32> to vector<8x128xf32>
    %51 = vector.shape_cast %46 : vector<8x128xf32> to vector<1x8x128xf32>
    tpu.vector_store %arg12[%48, %c0_27, %c0_28], %51 {strides = array<i32>} : memref<8x8x128xf32, #tpu.memory_space<vmem>>, vector<1x8x128xf32>,
    %c1_i32 = arith.constant 1 : i32
    %52 = arith.index_cast %c1_i32 : i32 to index
    %c0_29 = arith.constant 0 : index
    %c0_30 = arith.constant 0 : index
    %53 = vector.load %arg13[%52, %c0_29, %c0_30] : memref<8x8x512xf32, #tpu.memory_space<vmem>>, vector<1x8x512xf32>
    %54 = vector.shape_cast %53 : vector<1x8x512xf32> to vector<8x512xf32>
    %cst_31 = arith.constant dense<0.000000e+00> : vector<8x512xf32>
    %55 = tpu.matmul %46, %1, %cst_31 {dimension_numbers = #tpu.dot_dimension_numbers<[1], [0], [0], [1], [0, 0, 1, 1], [], []>} : vector<8x128xf32>, vector<128x512xf32>, vector<8x512xf32> -> vector<8x512xf32>
    %56 = arith.addf %54, %55 : vector<8x512xf32>
    %57 = vector.extract_strided_slice %56 {offsets = [0, 0], sizes = [8, 128], strides = [1, 1]} : vector<8x512xf32> to vector<8x128xf32>
    %58 = arith.negf %57 : vector<8x128xf32>
    %59 = math.exp %58 : vector<8x128xf32>
    %cst_32 = arith.constant 1.000000e+00 : f32
    %60 = vector.broadcast %cst_32 : f32 to vector<8x128xf32>
    %61 = arith.addf %60, %59 : vector<8x128xf32>
    %62 = arith.divf %60, %61 : vector<8x128xf32>
    %63 = vector.extract_strided_slice %56 {offsets = [0, 128], sizes = [8, 128], strides = [1, 1]} : vector<8x512xf32> to vector<8x128xf32>
    %64 = arith.negf %63 : vector<8x128xf32>
    %65 = math.exp %64 : vector<8x128xf32>
    %cst_33 = arith.constant 1.000000e+00 : f32
    %66 = vector.broadcast %cst_33 : f32 to vector<8x128xf32>
    %67 = arith.addf %66, %65 : vector<8x128xf32>
    %68 = arith.divf %66, %67 : vector<8x128xf32>
    %69 = vector.extract_strided_slice %56 {offsets = [0, 256], sizes = [8, 128], strides = [1, 1]} : vector<8x512xf32> to vector<8x128xf32>
    %70 = math.tanh %69 : vector<8x128xf32>
    %71 = vector.extract_strided_slice %56 {offsets = [0, 384], sizes = [8, 128], strides = [1, 1]} : vector<8x512xf32> to vector<8x128xf32>
    %72 = arith.negf %71 : vector<8x128xf32>
    %73 = math.exp %72 : vector<8x128xf32>
    %cst_34 = arith.constant 1.000000e+00 : f32
    %74 = vector.broadcast %cst_34 : f32 to vector<8x128xf32>
    %75 = arith.addf %74, %73 : vector<8x128xf32>
    %76 = arith.divf %74, %75 : vector<8x128xf32>
    %77 = arith.mulf %68, %44 : vector<8x128xf32>
    %78 = arith.mulf %62, %70 : vector<8x128xf32>
    %79 = arith.addf %77, %78 : vector<8x128xf32>
    %80 = math.tanh %79 : vector<8x128xf32>
    %81 = arith.mulf %76, %80 : vector<8x128xf32>
    %c0_i32_35 = arith.constant 0 : i32
    %82 = arith.addi %c0_i32_35, %c1_i32 : i32
    %83 = arith.index_cast %82 : i32 to index
    %c0_36 = arith.constant 0 : index
    %c0_37 = arith.constant 0 : index
    %84 = vector.load %arg12[%83, %c0_36, %c0_37] : memref<8x8x128xf32, #tpu.memory_space<vmem>>, vector<1x8x128xf32>
    %85 = vector.shape_cast %84 : vector<1x8x128xf32> to vector<8x128xf32>
    %86 = vector.shape_cast %81 : vector<8x128xf32> to vector<1x8x128xf32>
    tpu.vector_store %arg12[%83, %c0_36, %c0_37], %86 {strides = array<i32>} : memref<8x8x128xf32, #tpu.memory_space<vmem>>, vector<1x8x128xf32>,
    %c2_i32 = arith.constant 2 : i32
    %87 = arith.index_cast %c2_i32 : i32 to index
    %c0_38 = arith.constant 0 : index
    %c0_39 = arith.constant 0 : index
    %88 = vector.load %arg13[%87, %c0_38, %c0_39] : memref<8x8x512xf32, #tpu.memory_space<vmem>>, vector<1x8x512xf32>
    %89 = vector.shape_cast %88 : vector<1x8x512xf32> to vector<8x512xf32>
    %cst_40 = arith.constant dense<0.000000e+00> : vector<8x512xf32>
    %90 = tpu.matmul %81, %1, %cst_40 {dimension_numbers = #tpu.dot_dimension_numbers<[1], [0], [0], [1], [0, 0, 1, 1], [], []>} : vector<8x128xf32>, vector<128x512xf32>, vector<8x512xf32> -> vector<8x512xf32>
    %91 = arith.addf %89, %90 : vector<8x512xf32>
    %92 = vector.extract_strided_slice %91 {offsets = [0, 0], sizes = [8, 128], strides = [1, 1]} : vector<8x512xf32> to vector<8x128xf32>
    %93 = arith.negf %92 : vector<8x128xf32>
    %94 = math.exp %93 : vector<8x128xf32>
    %cst_41 = arith.constant 1.000000e+00 : f32
    %95 = vector.broadcast %cst_41 : f32 to vector<8x128xf32>
    %96 = arith.addf %95, %94 : vector<8x128xf32>
    %97 = arith.divf %95, %96 : vector<8x128xf32>
    %98 = vector.extract_strided_slice %91 {offsets = [0, 128], sizes = [8, 128], strides = [1, 1]} : vector<8x512xf32> to vector<8x128xf32>
    %99 = arith.negf %98 : vector<8x128xf32>
    %100 = math.exp %99 : vector<8x128xf32>
    %cst_42 = arith.constant 1.000000e+00 : f32
    %101 = vector.broadcast %cst_42 : f32 to vector<8x128xf32>
    %102 = arith.addf %101, %100 : vector<8x128xf32>
    %103 = arith.divf %101, %102 : vector<8x128xf32>
    %104 = vector.extract_strided_slice %91 {offsets = [0, 256], sizes = [8, 128], strides = [1, 1]} : vector<8x512xf32> to vector<8x128xf32>
    %105 = math.tanh %104 : vector<8x128xf32>
    %106 = vector.extract_strided_slice %91 {offsets = [0, 384], sizes = [8, 128], strides = [1, 1]} : vector<8x512xf32> to vector<8x128xf32>
    %107 = arith.negf %106 : vector<8x128xf32>
    %108 = math.exp %107 : vector<8x128xf32>
    %cst_43 = arith.constant 1.000000e+00 : f32
    %109 = vector.broadcast %cst_43 : f32 to vector<8x128xf32>
    %110 = arith.addf %109, %108 : vector<8x128xf32>
    %111 = arith.divf %109, %110 : vector<8x128xf32>
    %112 = arith.mulf %103, %79 : vector<8x128xf32>
    %113 = arith.mulf %97, %105 : vector<8x128xf32>
    %114 = arith.addf %112, %113 : vector<8x128xf32>
    %115 = math.tanh %114 : vector<8x128xf32>
    %116 = arith.mulf %111, %115 : vector<8x128xf32>
    %c0_i32_44 = arith.constant 0 : i32
    %117 = arith.addi %c0_i32_44, %c2_i32 : i32
    %118 = arith.index_cast %117 : i32 to index
    %c0_45 = arith.constant 0 : index
    %c0_46 = arith.constant 0 : index
    %119 = vector.load %arg12[%118, %c0_45, %c0_46] : memref<8x8x128xf32, #tpu.memory_space<vmem>>, vector<1x8x128xf32>
    %120 = vector.shape_cast %119 : vector<1x8x128xf32> to vector<8x128xf32>
    %121 = vector.shape_cast %116 : vector<8x128xf32> to vector<1x8x128xf32>
    tpu.vector_store %arg12[%118, %c0_45, %c0_46], %121 {strides = array<i32>} : memref<8x8x128xf32, #tpu.memory_space<vmem>>, vector<1x8x128xf32>,
    %c3_i32 = arith.constant 3 : i32
    %122 = arith.index_cast %c3_i32 : i32 to index
    %c0_47 = arith.constant 0 : index
    %c0_48 = arith.constant 0 : index
    %123 = vector.load %arg13[%122, %c0_47, %c0_48] : memref<8x8x512xf32, #tpu.memory_space<vmem>>, vector<1x8x512xf32>
    %124 = vector.shape_cast %123 : vector<1x8x512xf32> to vector<8x512xf32>
    %cst_49 = arith.constant dense<0.000000e+00> : vector<8x512xf32>
    %125 = tpu.matmul %116, %1, %cst_49 {dimension_numbers = #tpu.dot_dimension_numbers<[1], [0], [0], [1], [0, 0, 1, 1], [], []>} : vector<8x128xf32>, vector<128x512xf32>, vector<8x512xf32> -> vector<8x512xf32>
    %126 = arith.addf %124, %125 : vector<8x512xf32>
    %127 = vector.extract_strided_slice %126 {offsets = [0, 0], sizes = [8, 128], strides = [1, 1]} : vector<8x512xf32> to vector<8x128xf32>
    %128 = arith.negf %127 : vector<8x128xf32>
    %129 = math.exp %128 : vector<8x128xf32>
    %cst_50 = arith.constant 1.000000e+00 : f32
    %130 = vector.broadcast %cst_50 : f32 to vector<8x128xf32>
    %131 = arith.addf %130, %129 : vector<8x128xf32>
    %132 = arith.divf %130, %131 : vector<8x128xf32>
    %133 = vector.extract_strided_slice %126 {offsets = [0, 128], sizes = [8, 128], strides = [1, 1]} : vector<8x512xf32> to vector<8x128xf32>
    %134 = arith.negf %133 : vector<8x128xf32>
    %135 = math.exp %134 : vector<8x128xf32>
    %cst_51 = arith.constant 1.000000e+00 : f32
    %136 = vector.broadcast %cst_51 : f32 to vector<8x128xf32>
    %137 = arith.addf %136, %135 : vector<8x128xf32>
    %138 = arith.divf %136, %137 : vector<8x128xf32>
    %139 = vector.extract_strided_slice %126 {offsets = [0, 256], sizes = [8, 128], strides = [1, 1]} : vector<8x512xf32> to vector<8x128xf32>
    %140 = math.tanh %139 : vector<8x128xf32>
    %141 = vector.extract_strided_slice %126 {offsets = [0, 384], sizes = [8, 128], strides = [1, 1]} : vector<8x512xf32> to vector<8x128xf32>
    %142 = arith.negf %141 : vector<8x128xf32>
    %143 = math.exp %142 : vector<8x128xf32>
    %cst_52 = arith.constant 1.000000e+00 : f32
    %144 = vector.broadcast %cst_52 : f32 to vector<8x128xf32>
    %145 = arith.addf %144, %143 : vector<8x128xf32>
    %146 = arith.divf %144, %145 : vector<8x128xf32>
    %147 = arith.mulf %138, %114 : vector<8x128xf32>
    %148 = arith.mulf %132, %140 : vector<8x128xf32>
    %149 = arith.addf %147, %148 : vector<8x128xf32>
    %150 = math.tanh %149 : vector<8x128xf32>
    %151 = arith.mulf %146, %150 : vector<8x128xf32>
    %c0_i32_53 = arith.constant 0 : i32
    %152 = arith.addi %c0_i32_53, %c3_i32 : i32
    %153 = arith.index_cast %152 : i32 to index
    %c0_54 = arith.constant 0 : index
    %c0_55 = arith.constant 0 : index
    %154 = vector.load %arg12[%153, %c0_54, %c0_55] : memref<8x8x128xf32, #tpu.memory_space<vmem>>, vector<1x8x128xf32>
    %155 = vector.shape_cast %154 : vector<1x8x128xf32> to vector<8x128xf32>
    %156 = vector.shape_cast %151 : vector<8x128xf32> to vector<1x8x128xf32>
    tpu.vector_store %arg12[%153, %c0_54, %c0_55], %156 {strides = array<i32>} : memref<8x8x128xf32, #tpu.memory_space<vmem>>, vector<1x8x128xf32>,
    %c4_i32 = arith.constant 4 : i32
    %157 = arith.index_cast %c4_i32 : i32 to index
    %c0_56 = arith.constant 0 : index
    %c0_57 = arith.constant 0 : index
    %158 = vector.load %arg13[%157, %c0_56, %c0_57] : memref<8x8x512xf32, #tpu.memory_space<vmem>>, vector<1x8x512xf32>
    %159 = vector.shape_cast %158 : vector<1x8x512xf32> to vector<8x512xf32>
    %cst_58 = arith.constant dense<0.000000e+00> : vector<8x512xf32>
    %160 = tpu.matmul %151, %1, %cst_58 {dimension_numbers = #tpu.dot_dimension_numbers<[1], [0], [0], [1], [0, 0, 1, 1], [], []>} : vector<8x128xf32>, vector<128x512xf32>, vector<8x512xf32> -> vector<8x512xf32>
    %161 = arith.addf %159, %160 : vector<8x512xf32>
    %162 = vector.extract_strided_slice %161 {offsets = [0, 0], sizes = [8, 128], strides = [1, 1]} : vector<8x512xf32> to vector<8x128xf32>
    %163 = arith.negf %162 : vector<8x128xf32>
    %164 = math.exp %163 : vector<8x128xf32>
    %cst_59 = arith.constant 1.000000e+00 : f32
    %165 = vector.broadcast %cst_59 : f32 to vector<8x128xf32>
    %166 = arith.addf %165, %164 : vector<8x128xf32>
    %167 = arith.divf %165, %166 : vector<8x128xf32>
    %168 = vector.extract_strided_slice %161 {offsets = [0, 128], sizes = [8, 128], strides = [1, 1]} : vector<8x512xf32> to vector<8x128xf32>
    %169 = arith.negf %168 : vector<8x128xf32>
    %170 = math.exp %169 : vector<8x128xf32>
    %cst_60 = arith.constant 1.000000e+00 : f32
    %171 = vector.broadcast %cst_60 : f32 to vector<8x128xf32>
    %172 = arith.addf %171, %170 : vector<8x128xf32>
    %173 = arith.divf %171, %172 : vector<8x128xf32>
    %174 = vector.extract_strided_slice %161 {offsets = [0, 256], sizes = [8, 128], strides = [1, 1]} : vector<8x512xf32> to vector<8x128xf32>
    %175 = math.tanh %174 : vector<8x128xf32>
    %176 = vector.extract_strided_slice %161 {offsets = [0, 384], sizes = [8, 128], strides = [1, 1]} : vector<8x512xf32> to vector<8x128xf32>
    %177 = arith.negf %176 : vector<8x128xf32>
    %178 = math.exp %177 : vector<8x128xf32>
    %cst_61 = arith.constant 1.000000e+00 : f32
    %179 = vector.broadcast %cst_61 : f32 to vector<8x128xf32>
    %180 = arith.addf %179, %178 : vector<8x128xf32>
    %181 = arith.divf %179, %180 : vector<8x128xf32>
    %182 = arith.mulf %173, %149 : vector<8x128xf32>
    %183 = arith.mulf %167, %175 : vector<8x128xf32>
    %184 = arith.addf %182, %183 : vector<8x128xf32>
    %185 = math.tanh %184 : vector<8x128xf32>
    %186 = arith.mulf %181, %185 : vector<8x128xf32>
    %c0_i32_62 = arith.constant 0 : i32
    %187 = arith.addi %c0_i32_62, %c4_i32 : i32
    %188 = arith.index_cast %187 : i32 to index
    %c0_63 = arith.constant 0 : index
    %c0_64 = arith.constant 0 : index
    %189 = vector.load %arg12[%188, %c0_63, %c0_64] : memref<8x8x128xf32, #tpu.memory_space<vmem>>, vector<1x8x128xf32>
    %190 = vector.shape_cast %189 : vector<1x8x128xf32> to vector<8x128xf32>
    %191 = vector.shape_cast %186 : vector<8x128xf32> to vector<1x8x128xf32>
    tpu.vector_store %arg12[%188, %c0_63, %c0_64], %191 {strides = array<i32>} : memref<8x8x128xf32, #tpu.memory_space<vmem>>, vector<1x8x128xf32>,
    %c5_i32 = arith.constant 5 : i32
    %192 = arith.index_cast %c5_i32 : i32 to index
    %c0_65 = arith.constant 0 : index
    %c0_66 = arith.constant 0 : index
    %193 = vector.load %arg13[%192, %c0_65, %c0_66] : memref<8x8x512xf32, #tpu.memory_space<vmem>>, vector<1x8x512xf32>
    %194 = vector.shape_cast %193 : vector<1x8x512xf32> to vector<8x512xf32>
    %cst_67 = arith.constant dense<0.000000e+00> : vector<8x512xf32>
    %195 = tpu.matmul %186, %1, %cst_67 {dimension_numbers = #tpu.dot_dimension_numbers<[1], [0], [0], [1], [0, 0, 1, 1], [], []>} : vector<8x128xf32>, vector<128x512xf32>, vector<8x512xf32> -> vector<8x512xf32>
    %196 = arith.addf %194, %195 : vector<8x512xf32>
    %197 = vector.extract_strided_slice %196 {offsets = [0, 0], sizes = [8, 128], strides = [1, 1]} : vector<8x512xf32> to vector<8x128xf32>
    %198 = arith.negf %197 : vector<8x128xf32>
    %199 = math.exp %198 : vector<8x128xf32>
    %cst_68 = arith.constant 1.000000e+00 : f32
    %200 = vector.broadcast %cst_68 : f32 to vector<8x128xf32>
    %201 = arith.addf %200, %199 : vector<8x128xf32>
    %202 = arith.divf %200, %201 : vector<8x128xf32>
    %203 = vector.extract_strided_slice %196 {offsets = [0, 128], sizes = [8, 128], strides = [1, 1]} : vector<8x512xf32> to vector<8x128xf32>
    %204 = arith.negf %203 : vector<8x128xf32>
    %205 = math.exp %204 : vector<8x128xf32>
    %cst_69 = arith.constant 1.000000e+00 : f32
    %206 = vector.broadcast %cst_69 : f32 to vector<8x128xf32>
    %207 = arith.addf %206, %205 : vector<8x128xf32>
    %208 = arith.divf %206, %207 : vector<8x128xf32>
    %209 = vector.extract_strided_slice %196 {offsets = [0, 256], sizes = [8, 128], strides = [1, 1]} : vector<8x512xf32> to vector<8x128xf32>
    %210 = math.tanh %209 : vector<8x128xf32>
    %211 = vector.extract_strided_slice %196 {offsets = [0, 384], sizes = [8, 128], strides = [1, 1]} : vector<8x512xf32> to vector<8x128xf32>
    %212 = arith.negf %211 : vector<8x128xf32>
    %213 = math.exp %212 : vector<8x128xf32>
    %cst_70 = arith.constant 1.000000e+00 : f32
    %214 = vector.broadcast %cst_70 : f32 to vector<8x128xf32>
    %215 = arith.addf %214, %213 : vector<8x128xf32>
    %216 = arith.divf %214, %215 : vector<8x128xf32>
    %217 = arith.mulf %208, %184 : vector<8x128xf32>
    %218 = arith.mulf %202, %210 : vector<8x128xf32>
    %219 = arith.addf %217, %218 : vector<8x128xf32>
    %220 = math.tanh %219 : vector<8x128xf32>
    %221 = arith.mulf %216, %220 : vector<8x128xf32>
    %c0_i32_71 = arith.constant 0 : i32
    %222 = arith.addi %c0_i32_71, %c5_i32 : i32
    %223 = arith.index_cast %222 : i32 to index
    %c0_72 = arith.constant 0 : index
    %c0_73 = arith.constant 0 : index
    %224 = vector.load %arg12[%223, %c0_72, %c0_73] : memref<8x8x128xf32, #tpu.memory_space<vmem>>, vector<1x8x128xf32>
    %225 = vector.shape_cast %224 : vector<1x8x128xf32> to vector<8x128xf32>
    %226 = vector.shape_cast %221 : vector<8x128xf32> to vector<1x8x128xf32>
    tpu.vector_store %arg12[%223, %c0_72, %c0_73], %226 {strides = array<i32>} : memref<8x8x128xf32, #tpu.memory_space<vmem>>, vector<1x8x128xf32>,
    %c6_i32 = arith.constant 6 : i32
    %227 = arith.index_cast %c6_i32 : i32 to index
    %c0_74 = arith.constant 0 : index
    %c0_75 = arith.constant 0 : index
    %228 = vector.load %arg13[%227, %c0_74, %c0_75] : memref<8x8x512xf32, #tpu.memory_space<vmem>>, vector<1x8x512xf32>
    %229 = vector.shape_cast %228 : vector<1x8x512xf32> to vector<8x512xf32>
    %cst_76 = arith.constant dense<0.000000e+00> : vector<8x512xf32>
    %230 = tpu.matmul %221, %1, %cst_76 {dimension_numbers = #tpu.dot_dimension_numbers<[1], [0], [0], [1], [0, 0, 1, 1], [], []>} : vector<8x128xf32>, vector<128x512xf32>, vector<8x512xf32> -> vector<8x512xf32>
    %231 = arith.addf %229, %230 : vector<8x512xf32>
    %232 = vector.extract_strided_slice %231 {offsets = [0, 0], sizes = [8, 128], strides = [1, 1]} : vector<8x512xf32> to vector<8x128xf32>
    %233 = arith.negf %232 : vector<8x128xf32>
    %234 = math.exp %233 : vector<8x128xf32>
    %cst_77 = arith.constant 1.000000e+00 : f32
    %235 = vector.broadcast %cst_77 : f32 to vector<8x128xf32>
    %236 = arith.addf %235, %234 : vector<8x128xf32>
    %237 = arith.divf %235, %236 : vector<8x128xf32>
    %238 = vector.extract_strided_slice %231 {offsets = [0, 128], sizes = [8, 128], strides = [1, 1]} : vector<8x512xf32> to vector<8x128xf32>
    %239 = arith.negf %238 : vector<8x128xf32>
    %240 = math.exp %239 : vector<8x128xf32>
    %cst_78 = arith.constant 1.000000e+00 : f32
    %241 = vector.broadcast %cst_78 : f32 to vector<8x128xf32>
    %242 = arith.addf %241, %240 : vector<8x128xf32>
    %243 = arith.divf %241, %242 : vector<8x128xf32>
    %244 = vector.extract_strided_slice %231 {offsets = [0, 256], sizes = [8, 128], strides = [1, 1]} : vector<8x512xf32> to vector<8x128xf32>
    %245 = math.tanh %244 : vector<8x128xf32>
    %246 = vector.extract_strided_slice %231 {offsets = [0, 384], sizes = [8, 128], strides = [1, 1]} : vector<8x512xf32> to vector<8x128xf32>
    %247 = arith.negf %246 : vector<8x128xf32>
    %248 = math.exp %247 : vector<8x128xf32>
    %cst_79 = arith.constant 1.000000e+00 : f32
    %249 = vector.broadcast %cst_79 : f32 to vector<8x128xf32>
    %250 = arith.addf %249, %248 : vector<8x128xf32>
    %251 = arith.divf %249, %250 : vector<8x128xf32>
    %252 = arith.mulf %243, %219 : vector<8x128xf32>
    %253 = arith.mulf %237, %245 : vector<8x128xf32>
    %254 = arith.addf %252, %253 : vector<8x128xf32>
    %255 = math.tanh %254 : vector<8x128xf32>
    %256 = arith.mulf %251, %255 : vector<8x128xf32>
    %c0_i32_80 = arith.constant 0 : i32
    %257 = arith.addi %c0_i32_80, %c6_i32 : i32
    %258 = arith.index_cast %257 : i32 to index
    %c0_81 = arith.constant 0 : index
    %c0_82 = arith.constant 0 : index
    %259 = vector.load %arg12[%258, %c0_81, %c0_82] : memref<8x8x128xf32, #tpu.memory_space<vmem>>, vector<1x8x128xf32>
    %260 = vector.shape_cast %259 : vector<1x8x128xf32> to vector<8x128xf32>
    %261 = vector.shape_cast %256 : vector<8x128xf32> to vector<1x8x128xf32>
    tpu.vector_store %arg12[%258, %c0_81, %c0_82], %261 {strides = array<i32>} : memref<8x8x128xf32, #tpu.memory_space<vmem>>, vector<1x8x128xf32>,
    %c7_i32 = arith.constant 7 : i32
    %262 = arith.index_cast %c7_i32 : i32 to index
    %c0_83 = arith.constant 0 : index
    %c0_84 = arith.constant 0 : index
    %263 = vector.load %arg13[%262, %c0_83, %c0_84] : memref<8x8x512xf32, #tpu.memory_space<vmem>>, vector<1x8x512xf32>
    %264 = vector.shape_cast %263 : vector<1x8x512xf32> to vector<8x512xf32>
    %cst_85 = arith.constant dense<0.000000e+00> : vector<8x512xf32>
    %265 = tpu.matmul %256, %1, %cst_85 {dimension_numbers = #tpu.dot_dimension_numbers<[1], [0], [0], [1], [0, 0, 1, 1], [], []>} : vector<8x128xf32>, vector<128x512xf32>, vector<8x512xf32> -> vector<8x512xf32>
    %266 = arith.addf %264, %265 : vector<8x512xf32>
    %267 = vector.extract_strided_slice %266 {offsets = [0, 0], sizes = [8, 128], strides = [1, 1]} : vector<8x512xf32> to vector<8x128xf32>
    %268 = arith.negf %267 : vector<8x128xf32>
    %269 = math.exp %268 : vector<8x128xf32>
    %cst_86 = arith.constant 1.000000e+00 : f32
    %270 = vector.broadcast %cst_86 : f32 to vector<8x128xf32>
    %271 = arith.addf %270, %269 : vector<8x128xf32>
    %272 = arith.divf %270, %271 : vector<8x128xf32>
    %273 = vector.extract_strided_slice %266 {offsets = [0, 128], sizes = [8, 128], strides = [1, 1]} : vector<8x512xf32> to vector<8x128xf32>
    %274 = arith.negf %273 : vector<8x128xf32>
    %275 = math.exp %274 : vector<8x128xf32>
    %cst_87 = arith.constant 1.000000e+00 : f32
    %276 = vector.broadcast %cst_87 : f32 to vector<8x128xf32>
    %277 = arith.addf %276, %275 : vector<8x128xf32>
    %278 = arith.divf %276, %277 : vector<8x128xf32>
    %279 = vector.extract_strided_slice %266 {offsets = [0, 256], sizes = [8, 128], strides = [1, 1]} : vector<8x512xf32> to vector<8x128xf32>
    %280 = math.tanh %279 : vector<8x128xf32>
    %281 = vector.extract_strided_slice %266 {offsets = [0, 384], sizes = [8, 128], strides = [1, 1]} : vector<8x512xf32> to vector<8x128xf32>
    %282 = arith.negf %281 : vector<8x128xf32>
    %283 = math.exp %282 : vector<8x128xf32>
    %cst_88 = arith.constant 1.000000e+00 : f32
    %284 = vector.broadcast %cst_88 : f32 to vector<8x128xf32>
    %285 = arith.addf %284, %283 : vector<8x128xf32>
    %286 = arith.divf %284, %285 : vector<8x128xf32>
    %287 = arith.mulf %278, %254 : vector<8x128xf32>
    %288 = arith.mulf %272, %280 : vector<8x128xf32>
    %289 = arith.addf %287, %288 : vector<8x128xf32>
    %290 = math.tanh %289 : vector<8x128xf32>
    %291 = arith.mulf %286, %290 : vector<8x128xf32>
    %c0_i32_89 = arith.constant 0 : i32
    %292 = arith.addi %c0_i32_89, %c7_i32 : i32
    %293 = arith.index_cast %292 : i32 to index
    %c0_90 = arith.constant 0 : index
    %c0_91 = arith.constant 0 : index
    %294 = vector.load %arg12[%293, %c0_90, %c0_91] : memref<8x8x128xf32, #tpu.memory_space<vmem>>, vector<1x8x128xf32>
    %295 = vector.shape_cast %294 : vector<1x8x128xf32> to vector<8x128xf32>
    %296 = vector.shape_cast %291 : vector<8x128xf32> to vector<1x8x128xf32>
    tpu.vector_store %arg12[%293, %c0_90, %c0_91], %296 {strides = array<i32>} : memref<8x8x128xf32, #tpu.memory_space<vmem>>, vector<1x8x128xf32>,
    %c8_i32 = arith.constant 8 : i32
    %c0_92 = arith.constant 0 : index
    %c0_93 = arith.constant 0 : index
    %c0_94 = arith.constant 0 : index
    %297 = vector.load %arg10[%c0_92, %c0_93, %c0_94] : memref<2x8x128xf32, #tpu.memory_space<vmem>>, vector<1x8x128xf32>
    %298 = vector.shape_cast %297 : vector<1x8x128xf32> to vector<8x128xf32>
    %299 = vector.shape_cast %291 : vector<8x128xf32> to vector<1x8x128xf32>
    tpu.vector_store %arg10[%c0_92, %c0_93, %c0_94], %299 {strides = array<i32>} : memref<2x8x128xf32, #tpu.memory_space<vmem>>, vector<1x8x128xf32>,
    %c0_95 = arith.constant 0 : index
    %c0_96 = arith.constant 0 : index
    %c0_97 = arith.constant 0 : index
    %300 = vector.load %arg11[%c0_95, %c0_96, %c0_97] : memref<2x8x128xf32, #tpu.memory_space<vmem>>, vector<1x8x128xf32>
    %301 = vector.shape_cast %300 : vector<1x8x128xf32> to vector<8x128xf32>
    %302 = vector.shape_cast %289 : vector<8x128xf32> to vector<1x8x128xf32>
    tpu.vector_store %arg11[%c0_95, %c0_96, %c0_97], %302 {strides = array<i32>} : memref<2x8x128xf32, #tpu.memory_space<vmem>>, vector<1x8x128xf32>,
    %c1 = arith.constant 1 : index
    %c0_98 = arith.constant 0 : index
    %c0_99 = arith.constant 0 : index
    %303 = vector.load %arg3[%c1, %c0_98, %c0_99] : memref<2x128x512xf32, #tpu.memory_space<vmem>>, vector<1x128x512xf32>
    %304 = vector.shape_cast %303 : vector<1x128x512xf32> to vector<128x512xf32>
    %c1_100 = arith.constant 1 : index
    %c0_101 = arith.constant 0 : index
    %c0_102 = arith.constant 0 : index
    %305 = vector.load %arg4[%c1_100, %c0_101, %c0_102] : memref<2x1x512xf32, #tpu.memory_space<vmem>>, vector<1x1x512xf32>
    %306 = vector.shape_cast %305 : vector<1x1x512xf32> to vector<1x512xf32>
    %c1_103 = arith.constant 1 : index
    %c0_104 = arith.constant 0 : index
    %c0_105 = arith.constant 0 : index
    %307 = vector.load %arg2[%c1_103, %c0_104, %c0_105] : memref<2x128x512xf32, #tpu.memory_space<vmem>>, vector<1x128x512xf32>
    %308 = vector.shape_cast %307 : vector<1x128x512xf32> to vector<128x512xf32>
    %c1_106 = arith.constant 1 : index
    %c0_107 = arith.constant 0 : index
    %c0_108 = arith.constant 0 : index
    %309 = vector.load %arg5[%c1_106, %c0_107, %c0_108] : memref<2x8x128xf32, #tpu.memory_space<vmem>>, vector<1x8x128xf32>
    %310 = vector.shape_cast %309 : vector<1x8x128xf32> to vector<8x128xf32>
    %c1_109 = arith.constant 1 : index
    %c0_110 = arith.constant 0 : index
    %c0_111 = arith.constant 0 : index
    %311 = vector.load %arg6[%c1_109, %c0_110, %c0_111] : memref<2x8x128xf32, #tpu.memory_space<vmem>>, vector<1x8x128xf32>
    %312 = vector.shape_cast %311 : vector<1x8x128xf32> to vector<8x128xf32>
    %c0_112 = arith.constant 0 : index
    %c0_113 = arith.constant 0 : index
    %c0_114 = arith.constant 0 : index
    %313 = vector.load %arg12[%c0_112, %c0_113, %c0_114] : memref<8x8x128xf32, #tpu.memory_space<vmem>>, vector<8x8x128xf32>
    %314 = vector.shape_cast %313 : vector<8x8x128xf32> to vector<64x128xf32>
    %cst_115 = arith.constant dense<0.000000e+00> : vector<64x512xf32>
    %315 = tpu.matmul %314, %308, %cst_115 {dimension_numbers = #tpu.dot_dimension_numbers<[1], [0], [0], [1], [0, 0, 1, 1], [], []>} : vector<64x128xf32>, vector<128x512xf32>, vector<64x512xf32> -> vector<64x512xf32>
    %316 = vector.broadcast %306 : vector<1x512xf32> to vector<64x512xf32>
    %317 = arith.addf %315, %316 : vector<64x512xf32>
    %318 = vector.shape_cast %317 : vector<64x512xf32> to vector<8x8x512xf32>
    %c0_116 = arith.constant 0 : index
    %c0_117 = arith.constant 0 : index
    %c0_118 = arith.constant 0 : index
    %319 = vector.load %arg13[%c0_116, %c0_117, %c0_118] : memref<8x8x512xf32, #tpu.memory_space<vmem>>, vector<8x8x512xf32>
    tpu.vector_store %arg13[%c0_116, %c0_117, %c0_118], %318 {strides = array<i32>} : memref<8x8x512xf32, #tpu.memory_space<vmem>>, vector<8x8x512xf32>,
    %c0_i32_119 = arith.constant 0 : i32
    %320 = arith.index_cast %c0_i32_119 : i32 to index
    %c0_120 = arith.constant 0 : index
    %c0_121 = arith.constant 0 : index
    %321 = vector.load %arg13[%320, %c0_120, %c0_121] : memref<8x8x512xf32, #tpu.memory_space<vmem>>, vector<1x8x512xf32>
    %322 = vector.shape_cast %321 : vector<1x8x512xf32> to vector<8x512xf32>
    %cst_122 = arith.constant dense<0.000000e+00> : vector<8x512xf32>
    %323 = tpu.matmul %310, %304, %cst_122 {dimension_numbers = #tpu.dot_dimension_numbers<[1], [0], [0], [1], [0, 0, 1, 1], [], []>} : vector<8x128xf32>, vector<128x512xf32>, vector<8x512xf32> -> vector<8x512xf32>
    %324 = arith.addf %322, %323 : vector<8x512xf32>
    %325 = vector.extract_strided_slice %324 {offsets = [0, 0], sizes = [8, 128], strides = [1, 1]} : vector<8x512xf32> to vector<8x128xf32>
    %326 = arith.negf %325 : vector<8x128xf32>
    %327 = math.exp %326 : vector<8x128xf32>
    %cst_123 = arith.constant 1.000000e+00 : f32
    %328 = vector.broadcast %cst_123 : f32 to vector<8x128xf32>
    %329 = arith.addf %328, %327 : vector<8x128xf32>
    %330 = arith.divf %328, %329 : vector<8x128xf32>
    %331 = vector.extract_strided_slice %324 {offsets = [0, 128], sizes = [8, 128], strides = [1, 1]} : vector<8x512xf32> to vector<8x128xf32>
    %332 = arith.negf %331 : vector<8x128xf32>
    %333 = math.exp %332 : vector<8x128xf32>
    %cst_124 = arith.constant 1.000000e+00 : f32
    %334 = vector.broadcast %cst_124 : f32 to vector<8x128xf32>
    %335 = arith.addf %334, %333 : vector<8x128xf32>
    %336 = arith.divf %334, %335 : vector<8x128xf32>
    %337 = vector.extract_strided_slice %324 {offsets = [0, 256], sizes = [8, 128], strides = [1, 1]} : vector<8x512xf32> to vector<8x128xf32>
    %338 = math.tanh %337 : vector<8x128xf32>
    %339 = vector.extract_strided_slice %324 {offsets = [0, 384], sizes = [8, 128], strides = [1, 1]} : vector<8x512xf32> to vector<8x128xf32>
    %340 = arith.negf %339 : vector<8x128xf32>
    %341 = math.exp %340 : vector<8x128xf32>
    %cst_125 = arith.constant 1.000000e+00 : f32
    %342 = vector.broadcast %cst_125 : f32 to vector<8x128xf32>
    %343 = arith.addf %342, %341 : vector<8x128xf32>
    %344 = arith.divf %342, %343 : vector<8x128xf32>
    %345 = arith.mulf %336, %312 : vector<8x128xf32>
    %346 = arith.mulf %330, %338 : vector<8x128xf32>
    %347 = arith.addf %345, %346 : vector<8x128xf32>
    %348 = math.tanh %347 : vector<8x128xf32>
    %349 = arith.mulf %344, %348 : vector<8x128xf32>
    %c1_i32_126 = arith.constant 1 : i32
    %350 = arith.index_cast %c1_i32_126 : i32 to index
    %c0_127 = arith.constant 0 : index
    %c0_128 = arith.constant 0 : index
    %351 = vector.load %arg13[%350, %c0_127, %c0_128] : memref<8x8x512xf32, #tpu.memory_space<vmem>>, vector<1x8x512xf32>
    %352 = vector.shape_cast %351 : vector<1x8x512xf32> to vector<8x512xf32>
    %cst_129 = arith.constant dense<0.000000e+00> : vector<8x512xf32>
    %353 = tpu.matmul %349, %304, %cst_129 {dimension_numbers = #tpu.dot_dimension_numbers<[1], [0], [0], [1], [0, 0, 1, 1], [], []>} : vector<8x128xf32>, vector<128x512xf32>, vector<8x512xf32> -> vector<8x512xf32>
    %354 = arith.addf %352, %353 : vector<8x512xf32>
    %355 = vector.extract_strided_slice %354 {offsets = [0, 0], sizes = [8, 128], strides = [1, 1]} : vector<8x512xf32> to vector<8x128xf32>
    %356 = arith.negf %355 : vector<8x128xf32>
    %357 = math.exp %356 : vector<8x128xf32>
    %cst_130 = arith.constant 1.000000e+00 : f32
    %358 = vector.broadcast %cst_130 : f32 to vector<8x128xf32>
    %359 = arith.addf %358, %357 : vector<8x128xf32>
    %360 = arith.divf %358, %359 : vector<8x128xf32>
    %361 = vector.extract_strided_slice %354 {offsets = [0, 128], sizes = [8, 128], strides = [1, 1]} : vector<8x512xf32> to vector<8x128xf32>
    %362 = arith.negf %361 : vector<8x128xf32>
    %363 = math.exp %362 : vector<8x128xf32>
    %cst_131 = arith.constant 1.000000e+00 : f32
    %364 = vector.broadcast %cst_131 : f32 to vector<8x128xf32>
    %365 = arith.addf %364, %363 : vector<8x128xf32>
    %366 = arith.divf %364, %365 : vector<8x128xf32>
    %367 = vector.extract_strided_slice %354 {offsets = [0, 256], sizes = [8, 128], strides = [1, 1]} : vector<8x512xf32> to vector<8x128xf32>
    %368 = math.tanh %367 : vector<8x128xf32>
    %369 = vector.extract_strided_slice %354 {offsets = [0, 384], sizes = [8, 128], strides = [1, 1]} : vector<8x512xf32> to vector<8x128xf32>
    %370 = arith.negf %369 : vector<8x128xf32>
    %371 = math.exp %370 : vector<8x128xf32>
    %cst_132 = arith.constant 1.000000e+00 : f32
    %372 = vector.broadcast %cst_132 : f32 to vector<8x128xf32>
    %373 = arith.addf %372, %371 : vector<8x128xf32>
    %374 = arith.divf %372, %373 : vector<8x128xf32>
    %375 = arith.mulf %366, %347 : vector<8x128xf32>
    %376 = arith.mulf %360, %368 : vector<8x128xf32>
    %377 = arith.addf %375, %376 : vector<8x128xf32>
    %378 = math.tanh %377 : vector<8x128xf32>
    %379 = arith.mulf %374, %378 : vector<8x128xf32>
    %c2_i32_133 = arith.constant 2 : i32
    %380 = arith.index_cast %c2_i32_133 : i32 to index
    %c0_134 = arith.constant 0 : index
    %c0_135 = arith.constant 0 : index
    %381 = vector.load %arg13[%380, %c0_134, %c0_135] : memref<8x8x512xf32, #tpu.memory_space<vmem>>, vector<1x8x512xf32>
    %382 = vector.shape_cast %381 : vector<1x8x512xf32> to vector<8x512xf32>
    %cst_136 = arith.constant dense<0.000000e+00> : vector<8x512xf32>
    %383 = tpu.matmul %379, %304, %cst_136 {dimension_numbers = #tpu.dot_dimension_numbers<[1], [0], [0], [1], [0, 0, 1, 1], [], []>} : vector<8x128xf32>, vector<128x512xf32>, vector<8x512xf32> -> vector<8x512xf32>
    %384 = arith.addf %382, %383 : vector<8x512xf32>
    %385 = vector.extract_strided_slice %384 {offsets = [0, 0], sizes = [8, 128], strides = [1, 1]} : vector<8x512xf32> to vector<8x128xf32>
    %386 = arith.negf %385 : vector<8x128xf32>
    %387 = math.exp %386 : vector<8x128xf32>
    %cst_137 = arith.constant 1.000000e+00 : f32
    %388 = vector.broadcast %cst_137 : f32 to vector<8x128xf32>
    %389 = arith.addf %388, %387 : vector<8x128xf32>
    %390 = arith.divf %388, %389 : vector<8x128xf32>
    %391 = vector.extract_strided_slice %384 {offsets = [0, 128], sizes = [8, 128], strides = [1, 1]} : vector<8x512xf32> to vector<8x128xf32>
    %392 = arith.negf %391 : vector<8x128xf32>
    %393 = math.exp %392 : vector<8x128xf32>
    %cst_138 = arith.constant 1.000000e+00 : f32
    %394 = vector.broadcast %cst_138 : f32 to vector<8x128xf32>
    %395 = arith.addf %394, %393 : vector<8x128xf32>
    %396 = arith.divf %394, %395 : vector<8x128xf32>
    %397 = vector.extract_strided_slice %384 {offsets = [0, 256], sizes = [8, 128], strides = [1, 1]} : vector<8x512xf32> to vector<8x128xf32>
    %398 = math.tanh %397 : vector<8x128xf32>
    %399 = vector.extract_strided_slice %384 {offsets = [0, 384], sizes = [8, 128], strides = [1, 1]} : vector<8x512xf32> to vector<8x128xf32>
    %400 = arith.negf %399 : vector<8x128xf32>
    %401 = math.exp %400 : vector<8x128xf32>
    %cst_139 = arith.constant 1.000000e+00 : f32
    %402 = vector.broadcast %cst_139 : f32 to vector<8x128xf32>
    %403 = arith.addf %402, %401 : vector<8x128xf32>
    %404 = arith.divf %402, %403 : vector<8x128xf32>
    %405 = arith.mulf %396, %377 : vector<8x128xf32>
    %406 = arith.mulf %390, %398 : vector<8x128xf32>
    %407 = arith.addf %405, %406 : vector<8x128xf32>
    %408 = math.tanh %407 : vector<8x128xf32>
    %409 = arith.mulf %404, %408 : vector<8x128xf32>
    %c3_i32_140 = arith.constant 3 : i32
    %410 = arith.index_cast %c3_i32_140 : i32 to index
    %c0_141 = arith.constant 0 : index
    %c0_142 = arith.constant 0 : index
    %411 = vector.load %arg13[%410, %c0_141, %c0_142] : memref<8x8x512xf32, #tpu.memory_space<vmem>>, vector<1x8x512xf32>
    %412 = vector.shape_cast %411 : vector<1x8x512xf32> to vector<8x512xf32>
    %cst_143 = arith.constant dense<0.000000e+00> : vector<8x512xf32>
    %413 = tpu.matmul %409, %304, %cst_143 {dimension_numbers = #tpu.dot_dimension_numbers<[1], [0], [0], [1], [0, 0, 1, 1], [], []>} : vector<8x128xf32>, vector<128x512xf32>, vector<8x512xf32> -> vector<8x512xf32>
    %414 = arith.addf %412, %413 : vector<8x512xf32>
    %415 = vector.extract_strided_slice %414 {offsets = [0, 0], sizes = [8, 128], strides = [1, 1]} : vector<8x512xf32> to vector<8x128xf32>
    %416 = arith.negf %415 : vector<8x128xf32>
    %417 = math.exp %416 : vector<8x128xf32>
    %cst_144 = arith.constant 1.000000e+00 : f32
    %418 = vector.broadcast %cst_144 : f32 to vector<8x128xf32>
    %419 = arith.addf %418, %417 : vector<8x128xf32>
    %420 = arith.divf %418, %419 : vector<8x128xf32>
    %421 = vector.extract_strided_slice %414 {offsets = [0, 128], sizes = [8, 128], strides = [1, 1]} : vector<8x512xf32> to vector<8x128xf32>
    %422 = arith.negf %421 : vector<8x128xf32>
    %423 = math.exp %422 : vector<8x128xf32>
    %cst_145 = arith.constant 1.000000e+00 : f32
    %424 = vector.broadcast %cst_145 : f32 to vector<8x128xf32>
    %425 = arith.addf %424, %423 : vector<8x128xf32>
    %426 = arith.divf %424, %425 : vector<8x128xf32>
    %427 = vector.extract_strided_slice %414 {offsets = [0, 256], sizes = [8, 128], strides = [1, 1]} : vector<8x512xf32> to vector<8x128xf32>
    %428 = math.tanh %427 : vector<8x128xf32>
    %429 = vector.extract_strided_slice %414 {offsets = [0, 384], sizes = [8, 128], strides = [1, 1]} : vector<8x512xf32> to vector<8x128xf32>
    %430 = arith.negf %429 : vector<8x128xf32>
    %431 = math.exp %430 : vector<8x128xf32>
    %cst_146 = arith.constant 1.000000e+00 : f32
    %432 = vector.broadcast %cst_146 : f32 to vector<8x128xf32>
    %433 = arith.addf %432, %431 : vector<8x128xf32>
    %434 = arith.divf %432, %433 : vector<8x128xf32>
    %435 = arith.mulf %426, %407 : vector<8x128xf32>
    %436 = arith.mulf %420, %428 : vector<8x128xf32>
    %437 = arith.addf %435, %436 : vector<8x128xf32>
    %438 = math.tanh %437 : vector<8x128xf32>
    %439 = arith.mulf %434, %438 : vector<8x128xf32>
    %c4_i32_147 = arith.constant 4 : i32
    %440 = arith.index_cast %c4_i32_147 : i32 to index
    %c0_148 = arith.constant 0 : index
    %c0_149 = arith.constant 0 : index
    %441 = vector.load %arg13[%440, %c0_148, %c0_149] : memref<8x8x512xf32, #tpu.memory_space<vmem>>, vector<1x8x512xf32>
    %442 = vector.shape_cast %441 : vector<1x8x512xf32> to vector<8x512xf32>
    %cst_150 = arith.constant dense<0.000000e+00> : vector<8x512xf32>
    %443 = tpu.matmul %439, %304, %cst_150 {dimension_numbers = #tpu.dot_dimension_numbers<[1], [0], [0], [1], [0, 0, 1, 1], [], []>} : vector<8x128xf32>, vector<128x512xf32>, vector<8x512xf32> -> vector<8x512xf32>
    %444 = arith.addf %442, %443 : vector<8x512xf32>
    %445 = vector.extract_strided_slice %444 {offsets = [0, 0], sizes = [8, 128], strides = [1, 1]} : vector<8x512xf32> to vector<8x128xf32>
    %446 = arith.negf %445 : vector<8x128xf32>
    %447 = math.exp %446 : vector<8x128xf32>
    %cst_151 = arith.constant 1.000000e+00 : f32
    %448 = vector.broadcast %cst_151 : f32 to vector<8x128xf32>
    %449 = arith.addf %448, %447 : vector<8x128xf32>
    %450 = arith.divf %448, %449 : vector<8x128xf32>
    %451 = vector.extract_strided_slice %444 {offsets = [0, 128], sizes = [8, 128], strides = [1, 1]} : vector<8x512xf32> to vector<8x128xf32>
    %452 = arith.negf %451 : vector<8x128xf32>
    %453 = math.exp %452 : vector<8x128xf32>
    %cst_152 = arith.constant 1.000000e+00 : f32
    %454 = vector.broadcast %cst_152 : f32 to vector<8x128xf32>
    %455 = arith.addf %454, %453 : vector<8x128xf32>
    %456 = arith.divf %454, %455 : vector<8x128xf32>
    %457 = vector.extract_strided_slice %444 {offsets = [0, 256], sizes = [8, 128], strides = [1, 1]} : vector<8x512xf32> to vector<8x128xf32>
    %458 = math.tanh %457 : vector<8x128xf32>
    %459 = vector.extract_strided_slice %444 {offsets = [0, 384], sizes = [8, 128], strides = [1, 1]} : vector<8x512xf32> to vector<8x128xf32>
    %460 = arith.negf %459 : vector<8x128xf32>
    %461 = math.exp %460 : vector<8x128xf32>
    %cst_153 = arith.constant 1.000000e+00 : f32
    %462 = vector.broadcast %cst_153 : f32 to vector<8x128xf32>
    %463 = arith.addf %462, %461 : vector<8x128xf32>
    %464 = arith.divf %462, %463 : vector<8x128xf32>
    %465 = arith.mulf %456, %437 : vector<8x128xf32>
    %466 = arith.mulf %450, %458 : vector<8x128xf32>
    %467 = arith.addf %465, %466 : vector<8x128xf32>
    %468 = math.tanh %467 : vector<8x128xf32>
    %469 = arith.mulf %464, %468 : vector<8x128xf32>
    %c5_i32_154 = arith.constant 5 : i32
    %470 = arith.index_cast %c5_i32_154 : i32 to index
    %c0_155 = arith.constant 0 : index
    %c0_156 = arith.constant 0 : index
    %471 = vector.load %arg13[%470, %c0_155, %c0_156] : memref<8x8x512xf32, #tpu.memory_space<vmem>>, vector<1x8x512xf32>
    %472 = vector.shape_cast %471 : vector<1x8x512xf32> to vector<8x512xf32>
    %cst_157 = arith.constant dense<0.000000e+00> : vector<8x512xf32>
    %473 = tpu.matmul %469, %304, %cst_157 {dimension_numbers = #tpu.dot_dimension_numbers<[1], [0], [0], [1], [0, 0, 1, 1], [], []>} : vector<8x128xf32>, vector<128x512xf32>, vector<8x512xf32> -> vector<8x512xf32>
    %474 = arith.addf %472, %473 : vector<8x512xf32>
    %475 = vector.extract_strided_slice %474 {offsets = [0, 0], sizes = [8, 128], strides = [1, 1]} : vector<8x512xf32> to vector<8x128xf32>
    %476 = arith.negf %475 : vector<8x128xf32>
    %477 = math.exp %476 : vector<8x128xf32>
    %cst_158 = arith.constant 1.000000e+00 : f32
    %478 = vector.broadcast %cst_158 : f32 to vector<8x128xf32>
    %479 = arith.addf %478, %477 : vector<8x128xf32>
    %480 = arith.divf %478, %479 : vector<8x128xf32>
    %481 = vector.extract_strided_slice %474 {offsets = [0, 128], sizes = [8, 128], strides = [1, 1]} : vector<8x512xf32> to vector<8x128xf32>
    %482 = arith.negf %481 : vector<8x128xf32>
    %483 = math.exp %482 : vector<8x128xf32>
    %cst_159 = arith.constant 1.000000e+00 : f32
    %484 = vector.broadcast %cst_159 : f32 to vector<8x128xf32>
    %485 = arith.addf %484, %483 : vector<8x128xf32>
    %486 = arith.divf %484, %485 : vector<8x128xf32>
    %487 = vector.extract_strided_slice %474 {offsets = [0, 256], sizes = [8, 128], strides = [1, 1]} : vector<8x512xf32> to vector<8x128xf32>
    %488 = math.tanh %487 : vector<8x128xf32>
    %489 = vector.extract_strided_slice %474 {offsets = [0, 384], sizes = [8, 128], strides = [1, 1]} : vector<8x512xf32> to vector<8x128xf32>
    %490 = arith.negf %489 : vector<8x128xf32>
    %491 = math.exp %490 : vector<8x128xf32>
    %cst_160 = arith.constant 1.000000e+00 : f32
    %492 = vector.broadcast %cst_160 : f32 to vector<8x128xf32>
    %493 = arith.addf %492, %491 : vector<8x128xf32>
    %494 = arith.divf %492, %493 : vector<8x128xf32>
    %495 = arith.mulf %486, %467 : vector<8x128xf32>
    %496 = arith.mulf %480, %488 : vector<8x128xf32>
    %497 = arith.addf %495, %496 : vector<8x128xf32>
    %498 = math.tanh %497 : vector<8x128xf32>
    %499 = arith.mulf %494, %498 : vector<8x128xf32>
    %c6_i32_161 = arith.constant 6 : i32
    %500 = arith.index_cast %c6_i32_161 : i32 to index
    %c0_162 = arith.constant 0 : index
    %c0_163 = arith.constant 0 : index
    %501 = vector.load %arg13[%500, %c0_162, %c0_163] : memref<8x8x512xf32, #tpu.memory_space<vmem>>, vector<1x8x512xf32>
    %502 = vector.shape_cast %501 : vector<1x8x512xf32> to vector<8x512xf32>
    %cst_164 = arith.constant dense<0.000000e+00> : vector<8x512xf32>
    %503 = tpu.matmul %499, %304, %cst_164 {dimension_numbers = #tpu.dot_dimension_numbers<[1], [0], [0], [1], [0, 0, 1, 1], [], []>} : vector<8x128xf32>, vector<128x512xf32>, vector<8x512xf32> -> vector<8x512xf32>
    %504 = arith.addf %502, %503 : vector<8x512xf32>
    %505 = vector.extract_strided_slice %504 {offsets = [0, 0], sizes = [8, 128], strides = [1, 1]} : vector<8x512xf32> to vector<8x128xf32>
    %506 = arith.negf %505 : vector<8x128xf32>
    %507 = math.exp %506 : vector<8x128xf32>
    %cst_165 = arith.constant 1.000000e+00 : f32
    %508 = vector.broadcast %cst_165 : f32 to vector<8x128xf32>
    %509 = arith.addf %508, %507 : vector<8x128xf32>
    %510 = arith.divf %508, %509 : vector<8x128xf32>
    %511 = vector.extract_strided_slice %504 {offsets = [0, 128], sizes = [8, 128], strides = [1, 1]} : vector<8x512xf32> to vector<8x128xf32>
    %512 = arith.negf %511 : vector<8x128xf32>
    %513 = math.exp %512 : vector<8x128xf32>
    %cst_166 = arith.constant 1.000000e+00 : f32
    %514 = vector.broadcast %cst_166 : f32 to vector<8x128xf32>
    %515 = arith.addf %514, %513 : vector<8x128xf32>
    %516 = arith.divf %514, %515 : vector<8x128xf32>
    %517 = vector.extract_strided_slice %504 {offsets = [0, 256], sizes = [8, 128], strides = [1, 1]} : vector<8x512xf32> to vector<8x128xf32>
    %518 = math.tanh %517 : vector<8x128xf32>
    %519 = vector.extract_strided_slice %504 {offsets = [0, 384], sizes = [8, 128], strides = [1, 1]} : vector<8x512xf32> to vector<8x128xf32>
    %520 = arith.negf %519 : vector<8x128xf32>
    %521 = math.exp %520 : vector<8x128xf32>
    %cst_167 = arith.constant 1.000000e+00 : f32
    %522 = vector.broadcast %cst_167 : f32 to vector<8x128xf32>
    %523 = arith.addf %522, %521 : vector<8x128xf32>
    %524 = arith.divf %522, %523 : vector<8x128xf32>
    %525 = arith.mulf %516, %497 : vector<8x128xf32>
    %526 = arith.mulf %510, %518 : vector<8x128xf32>
    %527 = arith.addf %525, %526 : vector<8x128xf32>
    %528 = math.tanh %527 : vector<8x128xf32>
    %529 = arith.mulf %524, %528 : vector<8x128xf32>
    %c7_i32_168 = arith.constant 7 : i32
    %530 = arith.index_cast %c7_i32_168 : i32 to index
    %c0_169 = arith.constant 0 : index
    %c0_170 = arith.constant 0 : index
    %531 = vector.load %arg13[%530, %c0_169, %c0_170] : memref<8x8x512xf32, #tpu.memory_space<vmem>>, vector<1x8x512xf32>
    %532 = vector.shape_cast %531 : vector<1x8x512xf32> to vector<8x512xf32>
    %cst_171 = arith.constant dense<0.000000e+00> : vector<8x512xf32>
    %533 = tpu.matmul %529, %304, %cst_171 {dimension_numbers = #tpu.dot_dimension_numbers<[1], [0], [0], [1], [0, 0, 1, 1], [], []>} : vector<8x128xf32>, vector<128x512xf32>, vector<8x512xf32> -> vector<8x512xf32>
    %534 = arith.addf %532, %533 : vector<8x512xf32>
    %535 = vector.extract_strided_slice %534 {offsets = [0, 0], sizes = [8, 128], strides = [1, 1]} : vector<8x512xf32> to vector<8x128xf32>
    %536 = arith.negf %535 : vector<8x128xf32>
    %537 = math.exp %536 : vector<8x128xf32>
    %cst_172 = arith.constant 1.000000e+00 : f32
    %538 = vector.broadcast %cst_172 : f32 to vector<8x128xf32>
    %539 = arith.addf %538, %537 : vector<8x128xf32>
    %540 = arith.divf %538, %539 : vector<8x128xf32>
    %541 = vector.extract_strided_slice %534 {offsets = [0, 128], sizes = [8, 128], strides = [1, 1]} : vector<8x512xf32> to vector<8x128xf32>
    %542 = arith.negf %541 : vector<8x128xf32>
    %543 = math.exp %542 : vector<8x128xf32>
    %cst_173 = arith.constant 1.000000e+00 : f32
    %544 = vector.broadcast %cst_173 : f32 to vector<8x128xf32>
    %545 = arith.addf %544, %543 : vector<8x128xf32>
    %546 = arith.divf %544, %545 : vector<8x128xf32>
    %547 = vector.extract_strided_slice %534 {offsets = [0, 256], sizes = [8, 128], strides = [1, 1]} : vector<8x512xf32> to vector<8x128xf32>
    %548 = math.tanh %547 : vector<8x128xf32>
    %549 = vector.extract_strided_slice %534 {offsets = [0, 384], sizes = [8, 128], strides = [1, 1]} : vector<8x512xf32> to vector<8x128xf32>
    %550 = arith.negf %549 : vector<8x128xf32>
    %551 = math.exp %550 : vector<8x128xf32>
    %cst_174 = arith.constant 1.000000e+00 : f32
    %552 = vector.broadcast %cst_174 : f32 to vector<8x128xf32>
    %553 = arith.addf %552, %551 : vector<8x128xf32>
    %554 = arith.divf %552, %553 : vector<8x128xf32>
    %555 = arith.mulf %546, %527 : vector<8x128xf32>
    %556 = arith.mulf %540, %548 : vector<8x128xf32>
    %557 = arith.addf %555, %556 : vector<8x128xf32>
    %558 = math.tanh %557 : vector<8x128xf32>
    %559 = arith.mulf %554, %558 : vector<8x128xf32>
    %c8_i32_175 = arith.constant 8 : i32
    %c1_176 = arith.constant 1 : index
    %c0_177 = arith.constant 0 : index
    %c0_178 = arith.constant 0 : index
    %560 = vector.load %arg10[%c1_176, %c0_177, %c0_178] : memref<2x8x128xf32, #tpu.memory_space<vmem>>, vector<1x8x128xf32>
    %561 = vector.shape_cast %560 : vector<1x8x128xf32> to vector<8x128xf32>
    %562 = vector.shape_cast %559 : vector<8x128xf32> to vector<1x8x128xf32>
    tpu.vector_store %arg10[%c1_176, %c0_177, %c0_178], %562 {strides = array<i32>} : memref<2x8x128xf32, #tpu.memory_space<vmem>>, vector<1x8x128xf32>,
    %c1_179 = arith.constant 1 : index
    %c0_180 = arith.constant 0 : index
    %c0_181 = arith.constant 0 : index
    %563 = vector.load %arg11[%c1_179, %c0_180, %c0_181] : memref<2x8x128xf32, #tpu.memory_space<vmem>>, vector<1x8x128xf32>
    %564 = vector.shape_cast %563 : vector<1x8x128xf32> to vector<8x128xf32>
    %565 = vector.shape_cast %557 : vector<8x128xf32> to vector<1x8x128xf32>
    tpu.vector_store %arg11[%c1_179, %c0_180, %c0_181], %565 {strides = array<i32>} : memref<2x8x128xf32, #tpu.memory_space<vmem>>, vector<1x8x128xf32>,
    %c0_182 = arith.constant 0 : index
    %c0_183 = arith.constant 0 : index
    %566 = vector.load %arg7[%c0_182, %c0_183] : memref<128x128xf32, #tpu.memory_space<vmem>>, vector<128x128xf32>
    %cst_184 = arith.constant dense<0.000000e+00> : vector<8x128xf32>
    %567 = tpu.matmul %559, %566, %cst_184 {dimension_numbers = #tpu.dot_dimension_numbers<[1], [0], [0], [1], [0, 0, 1, 1], [], []>} : vector<8x128xf32>, vector<128x128xf32>, vector<8x128xf32> -> vector<8x128xf32>
    %c0_185 = arith.constant 0 : index
    %c0_186 = arith.constant 0 : index
    %568 = vector.load %arg8[%c0_185, %c0_186] : memref<1x128xf32, #tpu.memory_space<vmem>>, vector<1x128xf32>
    %569 = vector.broadcast %568 : vector<1x128xf32> to vector<8x128xf32>
    %570 = arith.addf %567, %569 : vector<8x128xf32>
    %c0_187 = arith.constant 0 : index
    %c0_188 = arith.constant 0 : index
    %571 = vector.load %arg9[%c0_187, %c0_188] : memref<8x128xf32, #tpu.memory_space<vmem>>, vector<8x128xf32>
    tpu.vector_store %arg9[%c0_187, %c0_188], %570 {strides = array<i32>} : memref<8x128xf32, #tpu.memory_space<vmem>>, vector<8x128xf32>,
    return
  }
  func.func @transform_0(%arg0: i32) -> (i32, i32, i32) {
    %c0_i32 = arith.constant 0 : i32
    %c0_i32_0 = arith.constant 0 : i32
    %c0_i32_1 = arith.constant 0 : i32
    return %c0_i32, %arg0, %c0_i32_0 : i32, i32, i32
  }
  func.func @transform_1(%arg0: i32) -> (i32, i32, i32) {
    %c0_i32 = arith.constant 0 : i32
    %c0_i32_0 = arith.constant 0 : i32
    %c0_i32_1 = arith.constant 0 : i32
    %c0_i32_2 = arith.constant 0 : i32
    return %c0_i32, %c0_i32_0, %c0_i32_1 : i32, i32, i32
  }
  func.func @transform_2(%arg0: i32) -> (i32, i32, i32) {
    %c0_i32 = arith.constant 0 : i32
    %c0_i32_0 = arith.constant 0 : i32
    %c0_i32_1 = arith.constant 0 : i32
    %c0_i32_2 = arith.constant 0 : i32
    return %c0_i32, %c0_i32_0, %c0_i32_1 : i32, i32, i32
  }
  func.func @transform_3(%arg0: i32) -> (i32, i32, i32) {
    %c0_i32 = arith.constant 0 : i32
    %c0_i32_0 = arith.constant 0 : i32
    %c0_i32_1 = arith.constant 0 : i32
    %c0_i32_2 = arith.constant 0 : i32
    return %c0_i32, %c0_i32_0, %c0_i32_1 : i32, i32, i32
  }
  func.func @transform_4(%arg0: i32) -> (i32, i32, i32) {
    %c0_i32 = arith.constant 0 : i32
    %c0_i32_0 = arith.constant 0 : i32
    %c0_i32_1 = arith.constant 0 : i32
    return %c0_i32, %arg0, %c0_i32_0 : i32, i32, i32
  }
  func.func @transform_5(%arg0: i32) -> (i32, i32, i32) {
    %c0_i32 = arith.constant 0 : i32
    %c0_i32_0 = arith.constant 0 : i32
    %c0_i32_1 = arith.constant 0 : i32
    return %c0_i32, %arg0, %c0_i32_0 : i32, i32, i32
  }
  func.func @transform_6(%arg0: i32) -> (i32, i32) {
    %c0_i32 = arith.constant 0 : i32
    %c0_i32_0 = arith.constant 0 : i32
    %c0_i32_1 = arith.constant 0 : i32
    return %c0_i32, %c0_i32_0 : i32, i32
  }
  func.func @transform_7(%arg0: i32) -> (i32, i32) {
    %c0_i32 = arith.constant 0 : i32
    %c0_i32_0 = arith.constant 0 : i32
    %c0_i32_1 = arith.constant 0 : i32
    return %c0_i32, %c0_i32_0 : i32, i32
  }
  func.func @transform_8(%arg0: i32) -> (i32, i32) {
    %c0_i32 = arith.constant 0 : i32
    %c0_i32_0 = arith.constant 0 : i32
    return %arg0, %c0_i32 : i32, i32
  }
  func.func @transform_9(%arg0: i32) -> (i32, i32, i32) {
    %c0_i32 = arith.constant 0 : i32
    %c0_i32_0 = arith.constant 0 : i32
    %c0_i32_1 = arith.constant 0 : i32
    return %c0_i32, %arg0, %c0_i32_0 : i32, i32, i32
  }
  func.func @transform_10(%arg0: i32) -> (i32, i32, i32) {
    %c0_i32 = arith.constant 0 : i32
    %c0_i32_0 = arith.constant 0 : i32
    %c0_i32_1 = arith.constant 0 : i32
    return %c0_i32, %arg0, %c0_i32_0 : i32, i32, i32
  }
}

</mosaic_0001>

<llo_original>
// kernel: lstm_model_forward.1
$region0: #{lstm_model_forward.1}
  #allocation0 [shape = 'u32[]', space=smem, size = 0x4, offset = 0x4, fixed_abs, tag = 'smem constant byte address 0x4 - core index']
  #allocation1 [shape = 'u32[72,128]{1,0:T(1,128)}', space=vmem, size = 0x9000, scoped, tag = 'internal scratch']
  #allocation2 [shape = 'f32[8,8,128]{2,1,0:T(8,128)}', space=vmem, size = 0x8000, scoped, tag = 'scratch operand']
  #allocation3 [shape = 'f32[8,8,512]{2,1,0:T(8,128)}', space=vmem, size = 0x20000, scoped, tag = 'scratch operand']
  %s0 = inlined_call_operand.vmem [shape: f32[8,8,128], index: 0, kind: input, shape index: {}]
  %s1 = inlined_call_operand.vmem [shape: f32[2,128,512], index: 1, kind: input, shape index: {}]
  %s2 = inlined_call_operand.vmem [shape: f32[2,128,512], index: 2, kind: input, shape index: {}]
  %s3 = inlined_call_operand.vmem [shape: f32[2,1,512], index: 3, kind: input, shape index: {}]
  %s4 = inlined_call_operand.vmem [shape: f32[2,8,128], index: 4, kind: input, shape index: {}, may-alias: {4,5}]
  %s5 = inlined_call_operand.vmem [shape: f32[2,8,128], index: 5, kind: input, shape index: {}, may-alias: {4,5}]
  %s6 = inlined_call_operand.vmem [shape: f32[128,128], index: 6, kind: input, shape index: {}]
  %s7 = inlined_call_operand.vmem [shape: f32[1,128], index: 7, kind: input, shape index: {}]
  %s8 = inlined_call_operand.vmem [shape: f32[8,128], index: 8, kind: output, shape index: {0}]
  %s9 = inlined_call_operand.vmem [shape: f32[2,8,128], index: 9, kind: output, shape index: {1}]
  %s10 = inlined_call_operand.vmem [shape: f32[2,8,128], index: 10, kind: output, shape index: {2}]
  %11 = xla_tuple %s8, %s9, %s10
  %s12 = sld [smem:[#allocation0]]
  $region58: #{lstm_model_forward.1} parent=0
    _
  %s14 = ssub.s32 1, %s12
  %s15 = scalar_select 0, %s14, %s12
  // Predicated region
  $region2: #{lstm_model_forward.1} parent=0 // pred_check
    _
  $region3: #{lstm_model_forward.1} parent=0 // pred_check_branch
    %17 = sbr.rel (0) target = $region5
  $region4: #{lstm_model_forward.1} parent=0 // pred_region
    _
  $region5: #{lstm_model_forward.1} parent=0 // pred_fallthru
    _
  // Predicated region
  $region6: #{lstm_model_forward.1} parent=0 // pred_check
    _
  $region7: #{lstm_model_forward.1} parent=0 // pred_check_branch
    %19 = sbr.rel (0) target = $region9
  $region8: #{lstm_model_forward.1} parent=0 // pred_region
    _
  $region9: #{lstm_model_forward.1} parent=0 // pred_fallthru
    _
  // Predicated region
  $region10: #{lstm_model_forward.1} parent=0 // pred_check
    _
  $region11: #{lstm_model_forward.1} parent=0 // pred_check_branch
    %21 = sbr.rel (0) target = $region13
  $region12: #{lstm_model_forward.1} parent=0 // pred_region
    _
  $region13: #{lstm_model_forward.1} parent=0 // pred_fallthru
    _
  // Predicated region
  $region14: #{lstm_model_forward.1} parent=0 // pred_check
    _
  $region15: #{lstm_model_forward.1} parent=0 // pred_check_branch
    %23 = sbr.rel (0) target = $region17
  $region16: #{lstm_model_forward.1} parent=0 // pred_region
    _
  $region17: #{lstm_model_forward.1} parent=0 // pred_fallthru
    _
  // Predicated region
  $region18: #{lstm_model_forward.1} parent=0 // pred_check
    _
  $region19: #{lstm_model_forward.1} parent=0 // pred_check_branch
    %25 = sbr.rel (0) target = $region21
  $region20: #{lstm_model_forward.1} parent=0 // pred_region
    _
  $region21: #{lstm_model_forward.1} parent=0 // pred_fallthru
    _
  // Predicated region
  $region22: #{lstm_model_forward.1} parent=0 // pred_check
    _
  $region23: #{lstm_model_forward.1} parent=0 // pred_check_branch
    %27 = sbr.rel (0) target = $region25
  $region24: #{lstm_model_forward.1} parent=0 // pred_region
    _
  $region25: #{lstm_model_forward.1} parent=0 // pred_fallthru
    _
  // Predicated region
  $region26: #{lstm_model_forward.1} parent=0 // pred_check
    _
  $region27: #{lstm_model_forward.1} parent=0 // pred_check_branch
    %29 = sbr.rel (0) target = $region29
  $region28: #{lstm_model_forward.1} parent=0 // pred_region
    _
  $region29: #{lstm_model_forward.1} parent=0 // pred_fallthru
    _
  // Predicated region
  $region30: #{lstm_model_forward.1} parent=0 // pred_check
    _
  $region31: #{lstm_model_forward.1} parent=0 // pred_check_branch
    %31 = sbr.rel (0) target = $region33
  $region32: #{lstm_model_forward.1} parent=0 // pred_region
    _
  $region33: #{lstm_model_forward.1} parent=0 // pred_fallthru
    _
  %v32 = vld [vmem:[%s2] sm:$0xff]
  %v33 = vld [vmem:[%s2 + $0x8] sm:$0xff]
  %v34 = vld [vmem:[%s2 + $0x10] sm:$0xff]
  %v35 = vld [vmem:[%s2 + $0x18] sm:$0xff]
  %v36 = vld [vmem:[%s2 + $0x20] sm:$0xff]
  %v37 = vld [vmem:[%s2 + $0x28] sm:$0xff]
  %v38 = vld [vmem:[%s2 + $0x30] sm:$0xff]
  %v39 = vld [vmem:[%s2 + $0x38] sm:$0xff]
  %v40 = vld [vmem:[%s2 + $0x40] sm:$0xff]
  %v41 = vld [vmem:[%s2 + $0x48] sm:$0xff]
  %v42 = vld [vmem:[%s2 + $0x50] sm:$0xff]
  %v43 = vld [vmem:[%s2 + $0x58] sm:$0xff]
  %v44 = vld [vmem:[%s2 + $0x60] sm:$0xff]
  %v45 = vld [vmem:[%s2 + $0x68] sm:$0xff]
  %v46 = vld [vmem:[%s2 + $0x70] sm:$0xff]
  %v47 = vld [vmem:[%s2 + $0x78] sm:$0xff]
  %v48 = vld [vmem:[%s2 + $0x80] sm:$0xff]
  %v49 = vld [vmem:[%s2 + $0x88] sm:$0xff]
  %v50 = vld [vmem:[%s2 + $0x90] sm:$0xff]
  %v51 = vld [vmem:[%s2 + $0x98] sm:$0xff]
  %v52 = vld [vmem:[%s2 + $0xa0] sm:$0xff]
  %v53 = vld [vmem:[%s2 + $0xa8] sm:$0xff]
  %v54 = vld [vmem:[%s2 + $0xb0] sm:$0xff]
  %v55 = vld [vmem:[%s2 + $0xb8] sm:$0xff]
  %v56 = vld [vmem:[%s2 + $0xc0] sm:$0xff]
  %v57 = vld [vmem:[%s2 + $0xc8] sm:$0xff]
  %v58 = vld [vmem:[%s2 + $0xd0] sm:$0xff]
  %v59 = vld [vmem:[%s2 + $0xd8] sm:$0xff]
  %v60 = vld [vmem:[%s2 + $0xe0] sm:$0xff]
  %v61 = vld [vmem:[%s2 + $0xe8] sm:$0xff]
  %v62 = vld [vmem:[%s2 + $0xf0] sm:$0xff]
  %v63 = vld [vmem:[%s2 + $0xf8] sm:$0xff]
  %v64 = vld [vmem:[%s2 + $0x100] sm:$0xff]
  %v65 = vld [vmem:[%s2 + $0x108] sm:$0xff]
  %v66 = vld [vmem:[%s2 + $0x110] sm:$0xff]
  %v67 = vld [vmem:[%s2 + $0x118] sm:$0xff]
  %v68 = vld [vmem:[%s2 + $0x120] sm:$0xff]
  %v69 = vld [vmem:[%s2 + $0x128] sm:$0xff]
  %v70 = vld [vmem:[%s2 + $0x130] sm:$0xff]
  %v71 = vld [vmem:[%s2 + $0x138] sm:$0xff]
  %v72 = vld [vmem:[%s2 + $0x140] sm:$0xff]
  %v73 = vld [vmem:[%s2 + $0x148] sm:$0xff]
  %v74 = vld [vmem:[%s2 + $0x150] sm:$0xff]
  %v75 = vld [vmem:[%s2 + $0x158] sm:$0xff]
  %v76 = vld [vmem:[%s2 + $0x160] sm:$0xff]
  %v77 = vld [vmem:[%s2 + $0x168] sm:$0xff]
  %v78 = vld [vmem:[%s2 + $0x170] sm:$0xff]
  %v79 = vld [vmem:[%s2 + $0x178] sm:$0xff]
  %v80 = vld [vmem:[%s2 + $0x180] sm:$0xff]
  %v81 = vld [vmem:[%s2 + $0x188] sm:$0xff]
  %v82 = vld [vmem:[%s2 + $0x190] sm:$0xff]
  %v83 = vld [vmem:[%s2 + $0x198] sm:$0xff]
  %v84 = vld [vmem:[%s2 + $0x1a0] sm:$0xff]
  %v85 = vld [vmem:[%s2 + $0x1a8] sm:$0xff]
  %v86 = vld [vmem:[%s2 + $0x1b0] sm:$0xff]
  %v87 = vld [vmem:[%s2 + $0x1b8] sm:$0xff]
  %v88 = vld [vmem:[%s2 + $0x1c0] sm:$0xff]
  %v89 = vld [vmem:[%s2 + $0x1c8] sm:$0xff]
  %v90 = vld [vmem:[%s2 + $0x1d0] sm:$0xff]
  %v91 = vld [vmem:[%s2 + $0x1d8] sm:$0xff]
  %v92 = vld [vmem:[%s2 + $0x1e0] sm:$0xff]
  %v93 = vld [vmem:[%s2 + $0x1e8] sm:$0xff]
  %v94 = vld [vmem:[%s2 + $0x1f0] sm:$0xff]
  %v95 = vld [vmem:[%s2 + $0x1f8] sm:$0xff]
  %v96 = vld [vmem:[%s3] sm:$0xf]
  %v97 = vld [vmem:[%s1] sm:$0xff]
  %v98 = vld [vmem:[%s1 + $0x8] sm:$0xff]
  %v99 = vld [vmem:[%s1 + $0x10] sm:$0xff]
  %v100 = vld [vmem:[%s1 + $0x18] sm:$0xff]
  %v101 = vld [vmem:[%s1 + $0x20] sm:$0xff]
  %v102 = vld [vmem:[%s1 + $0x28] sm:$0xff]
  %v103 = vld [vmem:[%s1 + $0x30] sm:$0xff]
  %v104 = vld [vmem:[%s1 + $0x38] sm:$0xff]
  %v105 = vld [vmem:[%s1 + $0x40] sm:$0xff]
  %v106 = vld [vmem:[%s1 + $0x48] sm:$0xff]
  %v107 = vld [vmem:[%s1 + $0x50] sm:$0xff]
  %v108 = vld [vmem:[%s1 + $0x58] sm:$0xff]
  %v109 = vld [vmem:[%s1 + $0x60] sm:$0xff]
  %v110 = vld [vmem:[%s1 + $0x68] sm:$0xff]
  %v111 = vld [vmem:[%s1 + $0x70] sm:$0xff]
  %v112 = vld [vmem:[%s1 + $0x78] sm:$0xff]
  %v113 = vld [vmem:[%s1 + $0x80] sm:$0xff]
  %v114 = vld [vmem:[%s1 + $0x88] sm:$0xff]
  %v115 = vld [vmem:[%s1 + $0x90] sm:$0xff]
  %v116 = vld [vmem:[%s1 + $0x98] sm:$0xff]
  %v117 = vld [vmem:[%s1 + $0xa0] sm:$0xff]
  %v118 = vld [vmem:[%s1 + $0xa8] sm:$0xff]
  %v119 = vld [vmem:[%s1 + $0xb0] sm:$0xff]
  %v120 = vld [vmem:[%s1 + $0xb8] sm:$0xff]
  %v121 = vld [vmem:[%s1 + $0xc0] sm:$0xff]
  %v122 = vld [vmem:[%s1 + $0xc8] sm:$0xff]
  %v123 = vld [vmem:[%s1 + $0xd0] sm:$0xff]
  %v124 = vld [vmem:[%s1 + $0xd8] sm:$0xff]
  %v125 = vld [vmem:[%s1 + $0xe0] sm:$0xff]
  %v126 = vld [vmem:[%s1 + $0xe8] sm:$0xff]
  %v127 = vld [vmem:[%s1 + $0xf0] sm:$0xff]
  %v128 = vld [vmem:[%s1 + $0xf8] sm:$0xff]
  %v129 = vld [vmem:[%s1 + $0x100] sm:$0xff]
  %v130 = vld [vmem:[%s1 + $0x108] sm:$0xff]
  %v131 = vld [vmem:[%s1 + $0x110] sm:$0xff]
  %v132 = vld [vmem:[%s1 + $0x118] sm:$0xff]
  %v133 = vld [vmem:[%s1 + $0x120] sm:$0xff]
  %v134 = vld [vmem:[%s1 + $0x128] sm:$0xff]
  %v135 = vld [vmem:[%s1 + $0x130] sm:$0xff]
  %v136 = vld [vmem:[%s1 + $0x138] sm:$0xff]
  %v137 = vld [vmem:[%s1 + $0x140] sm:$0xff]
  %v138 = vld [vmem:[%s1 + $0x148] sm:$0xff]
  %v139 = vld [vmem:[%s1 + $0x150] sm:$0xff]
  %v140 = vld [vmem:[%s1 + $0x158] sm:$0xff]
  %v141 = vld [vmem:[%s1 + $0x160] sm:$0xff]
  %v142 = vld [vmem:[%s1 + $0x168] sm:$0xff]
  %v143 = vld [vmem:[%s1 + $0x170] sm:$0xff]
  %v144 = vld [vmem:[%s1 + $0x178] sm:$0xff]
  %v145 = vld [vmem:[%s1 + $0x180] sm:$0xff]
  %v146 = vld [vmem:[%s1 + $0x188] sm:$0xff]
  %v147 = vld [vmem:[%s1 + $0x190] sm:$0xff]
  %v148 = vld [vmem:[%s1 + $0x198] sm:$0xff]
  %v149 = vld [vmem:[%s1 + $0x1a0] sm:$0xff]
  %v150 = vld [vmem:[%s1 + $0x1a8] sm:$0xff]
  %v151 = vld [vmem:[%s1 + $0x1b0] sm:$0xff]
  %v152 = vld [vmem:[%s1 + $0x1b8] sm:$0xff]
  %v153 = vld [vmem:[%s1 + $0x1c0] sm:$0xff]
  %v154 = vld [vmem:[%s1 + $0x1c8] sm:$0xff]
  %v155 = vld [vmem:[%s1 + $0x1d0] sm:$0xff]
  %v156 = vld [vmem:[%s1 + $0x1d8] sm:$0xff]
  %v157 = vld [vmem:[%s1 + $0x1e0] sm:$0xff]
  %v158 = vld [vmem:[%s1 + $0x1e8] sm:$0xff]
  %v159 = vld [vmem:[%s1 + $0x1f0] sm:$0xff]
  %v160 = vld [vmem:[%s1 + $0x1f8] sm:$0xff]
  %v161 = vld [vmem:[%s4] sm:$0xff]
  %v162 = vld [vmem:[%s5] sm:$0xff]
  %v163 = vld [vmem:[%s0] sm:$0xff]
  %v164 = vld [vmem:[%s0 + $0x8] sm:$0xff]
  %v165 = vld [vmem:[%s0 + $0x10] sm:$0xff]
  %v166 = vld [vmem:[%s0 + $0x18] sm:$0xff]
  %v167 = vld [vmem:[%s0 + $0x20] sm:$0xff]
  %v168 = vld [vmem:[%s0 + $0x28] sm:$0xff]
  %v169 = vld [vmem:[%s0 + $0x30] sm:$0xff]
  %v170 = vld [vmem:[%s0 + $0x38] sm:$0xff]
  %v172 = vperm.slane %v96, 0
  %v173 = vperm.slane %v96, 1
  %v174 = vperm.slane %v96, 2
  %v175 = vperm.slane %v96, 3
  %180 = vmatpush.msra.mxu0 %v157
  %181 = vmatpush.msra.mxu0 %v153
  %182 = vmatpush.msra.mxu0 %v149
  %183 = vmatpush.msra.mxu0 %v145
  %184 = vmatpush.msra.mxu0 %v141
  %185 = vmatpush.msra.mxu0 %v137
  %186 = vmatpush.msra.mxu0 %v133
  %187 = vmatpush.msra.mxu0 %v129
  %188 = vmatpush.msra.mxu0 %v125
  %189 = vmatpush.msra.mxu0 %v121
  %190 = vmatpush.msra.mxu0 %v117
  %191 = vmatpush.msra.mxu0 %v113
  %192 = vmatpush.msra.mxu0 %v109
  %193 = vmatpush.msra.mxu0 %v105
  %194 = vmatpush.msra.mxu0 %v101
  %195 = vmatpush.msra.mxu0 %v97
  %196 = vmatmul.f32.gmra.mxu0 %v163
  %v197 = vpop.f32.mrf.mxu0
  %v198 = vadd.f32 %v172, %v197
  %199 = vmatmul.f32.gmra.mxu0 %v164
  %v200 = vpop.f32.mrf.mxu0
  %v201 = vadd.f32 %v172, %v200
  %202 = vmatmul.f32.gmra.mxu0 %v165
  %v203 = vpop.f32.mrf.mxu0
  %v204 = vadd.f32 %v172, %v203
  %205 = vmatmul.f32.gmra.mxu0 %v166
  %v206 = vpop.f32.mrf.mxu0
  %v207 = vadd.f32 %v172, %v206
  %208 = vmatmul.f32.gmra.mxu0 %v167
  %v209 = vpop.f32.mrf.mxu0
  %v210 = vadd.f32 %v172, %v209
  %211 = vmatmul.f32.gmra.mxu0 %v168
  %v212 = vpop.f32.mrf.mxu0
  %v213 = vadd.f32 %v172, %v212
  %214 = vmatmul.f32.gmra.mxu0 %v169
  %v215 = vpop.f32.mrf.mxu0
  %v216 = vadd.f32 %v172, %v215
  %217 = vmatmul.f32.gmra.mxu0 %v170
  %v218 = vpop.f32.mrf.mxu0
  %v219 = vadd.f32 %v172, %v218
  %220 = vdwg.mxu0
  %221 = vmatpush.msra.mxu0 %v158
  %222 = vmatpush.msra.mxu0 %v154
  %223 = vmatpush.msra.mxu0 %v150
  %224 = vmatpush.msra.mxu0 %v146
  %225 = vmatpush.msra.mxu0 %v142
  %226 = vmatpush.msra.mxu0 %v138
  %227 = vmatpush.msra.mxu0 %v134
  %228 = vmatpush.msra.mxu0 %v130
  %229 = vmatpush.msra.mxu0 %v126
  %230 = vmatpush.msra.mxu0 %v122
  %231 = vmatpush.msra.mxu0 %v118
  %232 = vmatpush.msra.mxu0 %v114
  %233 = vmatpush.msra.mxu0 %v110
  %234 = vmatpush.msra.mxu0 %v106
  %235 = vmatpush.msra.mxu0 %v102
  %236 = vmatpush.msra.mxu0 %v98
  %237 = vmatmul.f32.gmra.mxu0 %v163
  %v238 = vpop.f32.mrf.mxu0
  %v239 = vadd.f32 %v173, %v238
  %240 = vmatmul.f32.gmra.mxu0 %v164
  %v241 = vpop.f32.mrf.mxu0
  %v242 = vadd.f32 %v173, %v241
  %243 = vmatmul.f32.gmra.mxu0 %v165
  %v244 = vpop.f32.mrf.mxu0
  %v245 = vadd.f32 %v173, %v244
  %246 = vmatmul.f32.gmra.mxu0 %v166
  %v247 = vpop.f32.mrf.mxu0
  %v248 = vadd.f32 %v173, %v247
  %249 = vmatmul.f32.gmra.mxu0 %v167
  %v250 = vpop.f32.mrf.mxu0
  %v251 = vadd.f32 %v173, %v250
  %252 = vmatmul.f32.gmra.mxu0 %v168
  %v253 = vpop.f32.mrf.mxu0
  %v254 = vadd.f32 %v173, %v253
  %255 = vmatmul.f32.gmra.mxu0 %v169
  %v256 = vpop.f32.mrf.mxu0
  %v257 = vadd.f32 %v173, %v256
  %258 = vmatmul.f32.gmra.mxu0 %v170
  %v259 = vpop.f32.mrf.mxu0
  %v260 = vadd.f32 %v173, %v259
  %261 = vdwg.mxu0
  %262 = vmatpush.msra.mxu0 %v159
  %263 = vmatpush.msra.mxu0 %v155
  %264 = vmatpush.msra.mxu0 %v151
  %265 = vmatpush.msra.mxu0 %v147
  %266 = vmatpush.msra.mxu0 %v143
  %267 = vmatpush.msra.mxu0 %v139
  %268 = vmatpush.msra.mxu0 %v135
  %269 = vmatpush.msra.mxu0 %v131
  %270 = vmatpush.msra.mxu0 %v127
  %271 = vmatpush.msra.mxu0 %v123
  %272 = vmatpush.msra.mxu0 %v119
  %273 = vmatpush.msra.mxu0 %v115
  %274 = vmatpush.msra.mxu0 %v111
  %275 = vmatpush.msra.mxu0 %v107
  %276 = vmatpush.msra.mxu0 %v103
  %277 = vmatpush.msra.mxu0 %v99
  %278 = vmatmul.f32.gmra.mxu0 %v163
  %v279 = vpop.f32.mrf.mxu0
  %v280 = vadd.f32 %v174, %v279
  %281 = vmatmul.f32.gmra.mxu0 %v164
  %v282 = vpop.f32.mrf.mxu0
  %v283 = vadd.f32 %v174, %v282
  %284 = vmatmul.f32.gmra.mxu0 %v165
  %v285 = vpop.f32.mrf.mxu0
  %v286 = vadd.f32 %v174, %v285
  %287 = vmatmul.f32.gmra.mxu0 %v166
  %v288 = vpop.f32.mrf.mxu0
  %v289 = vadd.f32 %v174, %v288
  %290 = vmatmul.f32.gmra.mxu0 %v167
  %v291 = vpop.f32.mrf.mxu0
  %v292 = vadd.f32 %v174, %v291
  %293 = vmatmul.f32.gmra.mxu0 %v168
  %v294 = vpop.f32.mrf.mxu0
  %v295 = vadd.f32 %v174, %v294
  %296 = vmatmul.f32.gmra.mxu0 %v169
  %v297 = vpop.f32.mrf.mxu0
  %v298 = vadd.f32 %v174, %v297
  %299 = vmatmul.f32.gmra.mxu0 %v170
  %v300 = vpop.f32.mrf.mxu0
  %v301 = vadd.f32 %v174, %v300
  %302 = vdwg.mxu0
  %303 = vmatpush.msra.mxu0 %v160
  %304 = vmatpush.msra.mxu0 %v156
  %305 = vmatpush.msra.mxu0 %v152
  %306 = vmatpush.msra.mxu0 %v148
  %307 = vmatpush.msra.mxu0 %v144
  %308 = vmatpush.msra.mxu0 %v140
  %309 = vmatpush.msra.mxu0 %v136
  %310 = vmatpush.msra.mxu0 %v132
  %311 = vmatpush.msra.mxu0 %v128
  %312 = vmatpush.msra.mxu0 %v124
  %313 = vmatpush.msra.mxu0 %v120
  %314 = vmatpush.msra.mxu0 %v116
  %315 = vmatpush.msra.mxu0 %v112
  %316 = vmatpush.msra.mxu0 %v108
  %317 = vmatpush.msra.mxu0 %v104
  %318 = vmatpush.msra.mxu0 %v100
  %319 = vmatmul.f32.gmra.mxu0 %v163
  %v320 = vpop.f32.mrf.mxu0
  %v321 = vadd.f32 %v175, %v320
  %322 = vmatmul.f32.gmra.mxu0 %v164
  %v323 = vpop.f32.mrf.mxu0
  %v324 = vadd.f32 %v175, %v323
  %325 = vmatmul.f32.gmra.mxu0 %v165
  %v326 = vpop.f32.mrf.mxu0
  %v327 = vadd.f32 %v175, %v326
  %328 = vmatmul.f32.gmra.mxu0 %v166
  %v329 = vpop.f32.mrf.mxu0
  %v330 = vadd.f32 %v175, %v329
  %331 = vmatmul.f32.gmra.mxu0 %v167
  %v332 = vpop.f32.mrf.mxu0
  %v333 = vadd.f32 %v175, %v332
  %334 = vmatmul.f32.gmra.mxu0 %v168
  %v335 = vpop.f32.mrf.mxu0
  %v336 = vadd.f32 %v175, %v335
  %337 = vmatmul.f32.gmra.mxu0 %v169
  %v338 = vpop.f32.mrf.mxu0
  %v339 = vadd.f32 %v175, %v338
  %340 = vmatmul.f32.gmra.mxu0 %v170
  %v341 = vpop.f32.mrf.mxu0
  %v342 = vadd.f32 %v175, %v341
  %343 = vdwg.mxu0
  %344 = vst [vmem:[#allocation3] sm:$0xff] %v198
  %345 = vst [vmem:[#allocation3 + $0x8] sm:$0xff] %v239
  %346 = vst [vmem:[#allocation3 + $0x10] sm:$0xff] %v280
  %347 = vst [vmem:[#allocation3 + $0x18] sm:$0xff] %v321
  %348 = vst [vmem:[#allocation3 + $0x20] sm:$0xff] %v201
  %349 = vst [vmem:[#allocation3 + $0x28] sm:$0xff] %v242
  %350 = vst [vmem:[#allocation3 + $0x30] sm:$0xff] %v283
  %351 = vst [vmem:[#allocation3 + $0x38] sm:$0xff] %v324
  %352 = vst [vmem:[#allocation3 + $0x40] sm:$0xff] %v204
  %353 = vst [vmem:[#allocation3 + $0x48] sm:$0xff] %v245
  %354 = vst [vmem:[#allocation3 + $0x50] sm:$0xff] %v286
  %355 = vst [vmem:[#allocation3 + $0x58] sm:$0xff] %v327
  %356 = vst [vmem:[#allocation3 + $0x60] sm:$0xff] %v207
  %357 = vst [vmem:[#allocation3 + $0x68] sm:$0xff] %v248
  %358 = vst [vmem:[#allocation3 + $0x70] sm:$0xff] %v289
  %359 = vst [vmem:[#allocation3 + $0x78] sm:$0xff] %v330
  %360 = vst [vmem:[#allocation3 + $0x80] sm:$0xff] %v210
  %361 = vst [vmem:[#allocation3 + $0x88] sm:$0xff] %v251
  %362 = vst [vmem:[#allocation3 + $0x90] sm:$0xff] %v292
  %363 = vst [vmem:[#allocation3 + $0x98] sm:$0xff] %v333
  %364 = vst [vmem:[#allocation3 + $0xa0] sm:$0xff] %v213
  %365 = vst [vmem:[#allocation3 + $0xa8] sm:$0xff] %v254
  %366 = vst [vmem:[#allocation3 + $0xb0] sm:$0xff] %v295
  %367 = vst [vmem:[#allocation3 + $0xb8] sm:$0xff] %v336
  %368 = vst [vmem:[#allocation3 + $0xc0] sm:$0xff] %v216
  %369 = vst [vmem:[#allocation3 + $0xc8] sm:$0xff] %v257
  %370 = vst [vmem:[#allocation3 + $0xd0] sm:$0xff] %v298
  %371 = vst [vmem:[#allocation3 + $0xd8] sm:$0xff] %v339
  %372 = vst [vmem:[#allocation3 + $0xe0] sm:$0xff] %v219
  %373 = vst [vmem:[#allocation3 + $0xe8] sm:$0xff] %v260
  %374 = vst [vmem:[#allocation3 + $0xf0] sm:$0xff] %v301
  %375 = vst [vmem:[#allocation3 + $0xf8] sm:$0xff] %v342
  %v376 = vld [vmem:[#allocation3] sm:$0xff]
  %v377 = vld [vmem:[#allocation3 + $0x8] sm:$0xff]
  %v378 = vld [vmem:[#allocation3 + $0x10] sm:$0xff]
  %v379 = vld [vmem:[#allocation3 + $0x18] sm:$0xff]
  %380 = vmatpush.msra.mxu0 %v92
  %381 = vmatpush.msra.mxu0 %v88
  %382 = vmatpush.msra.mxu0 %v84
  %383 = vmatpush.msra.mxu0 %v80
  %384 = vmatpush.msra.mxu0 %v76
  %385 = vmatpush.msra.mxu0 %v72
  %386 = vmatpush.msra.mxu0 %v68
  %387 = vmatpush.msra.mxu0 %v64
  %388 = vmatpush.msra.mxu0 %v60
  %389 = vmatpush.msra.mxu0 %v56
  %390 = vmatpush.msra.mxu0 %v52
  %391 = vmatpush.msra.mxu0 %v48
  %392 = vmatpush.msra.mxu0 %v44
  %393 = vmatpush.msra.mxu0 %v40
  %394 = vmatpush.msra.mxu0 %v36
  %395 = vmatpush.msra.mxu0 %v32
  %396 = vmatmul.f32.gmra.mxu0 %v161
  %v397 = vpop.f32.mrf.mxu0
  %v398 = vadd.f32 0.0, %v397
  %399 = vdwg.mxu0
  %400 = vmatpush.msra.mxu0 %v93
  %401 = vmatpush.msra.mxu0 %v89
  %402 = vmatpush.msra.mxu0 %v85
  %403 = vmatpush.msra.mxu0 %v81
  %404 = vmatpush.msra.mxu0 %v77
  %405 = vmatpush.msra.mxu0 %v73
  %406 = vmatpush.msra.mxu0 %v69
  %407 = vmatpush.msra.mxu0 %v65
  %408 = vmatpush.msra.mxu0 %v61
  %409 = vmatpush.msra.mxu0 %v57
  %410 = vmatpush.msra.mxu0 %v53
  %411 = vmatpush.msra.mxu0 %v49
  %412 = vmatpush.msra.mxu0 %v45
  %413 = vmatpush.msra.mxu0 %v41
  %414 = vmatpush.msra.mxu0 %v37
  %415 = vmatpush.msra.mxu0 %v33
  %416 = vmatmul.f32.gmra.mxu0 %v161
  %v417 = vpop.f32.mrf.mxu0
  %v418 = vadd.f32 0.0, %v417
  %419 = vdwg.mxu0
  %420 = vmatpush.msra.mxu0 %v94
  %421 = vmatpush.msra.mxu0 %v90
  %422 = vmatpush.msra.mxu0 %v86
  %423 = vmatpush.msra.mxu0 %v82
  %424 = vmatpush.msra.mxu0 %v78
  %425 = vmatpush.msra.mxu0 %v74
  %426 = vmatpush.msra.mxu0 %v70
  %427 = vmatpush.msra.mxu0 %v66
  %428 = vmatpush.msra.mxu0 %v62
  %429 = vmatpush.msra.mxu0 %v58
  %430 = vmatpush.msra.mxu0 %v54
  %431 = vmatpush.msra.mxu0 %v50
  %432 = vmatpush.msra.mxu0 %v46
  %433 = vmatpush.msra.mxu0 %v42
  %434 = vmatpush.msra.mxu0 %v38
  %435 = vmatpush.msra.mxu0 %v34
  %436 = vmatmul.f32.gmra.mxu0 %v161
  %v437 = vpop.f32.mrf.mxu0
  %v438 = vadd.f32 0.0, %v437
  %439 = vdwg.mxu0
  %440 = vmatpush.msra.mxu0 %v95
  %441 = vmatpush.msra.mxu0 %v91
  %442 = vmatpush.msra.mxu0 %v87
  %443 = vmatpush.msra.mxu0 %v83
  %444 = vmatpush.msra.mxu0 %v79
  %445 = vmatpush.msra.mxu0 %v75
  %446 = vmatpush.msra.mxu0 %v71
  %447 = vmatpush.msra.mxu0 %v67
  %448 = vmatpush.msra.mxu0 %v63
  %449 = vmatpush.msra.mxu0 %v59
  %450 = vmatpush.msra.mxu0 %v55
  %451 = vmatpush.msra.mxu0 %v51
  %452 = vmatpush.msra.mxu0 %v47
  %453 = vmatpush.msra.mxu0 %v43
  %454 = vmatpush.msra.mxu0 %v39
  %455 = vmatpush.msra.mxu0 %v35
  %456 = vmatmul.f32.gmra.mxu0 %v161
  %v457 = vpop.f32.mrf.mxu0
  %v458 = vadd.f32 0.0, %v457
  %459 = vdwg.mxu0
  %v460 = vadd.f32 %v376, %v398
  %v461 = vadd.f32 %v377, %v418
  %v462 = vadd.f32 %v378, %v438
  %v463 = vadd.f32 %v379, %v458
  %v464 = vxor.u32 %v460, 2147483648
  %v465 = vmul.f32 %v464, 1.442695
  %v466 = vpow.pop %v465
  %v467 = vadd.f32 %v466, 1.0
  %v468 = vrcp.pop %v467
  %v469 = vmul.f32 %v467, %v468
  %v470 = vsub.f32 1.0, %v469
  %v471 = vmul.f32 %v468, %v470
  %v472 = vadd.f32 %v468, %v471
  %vm473 = vweird.f32 %v467
  %vm474 = vweird.f32 %v468
  %vm475 = vmor %vm473, %vm474
  %v476 = vsel %vm475, %v468, %v472
  %v477 = vand.u32 2147483647, %v467
  %vm478 = vcmp.eq.f32.partialorder %v477, 8.507059e+37
  %v479 = vand.u32 %v467, 2147483648
  %v480 = vor.u32 1.1754944e-38, %v479
  %v481 = vsel %vm478, %v480, %v476
  %v482 = vmul.f32 1.0, %v481
  %v483 = vxor.u32 %v461, 2147483648
  %v484 = vmul.f32 %v483, 1.442695
  %v485 = vpow.pop %v484
  %v486 = vadd.f32 %v485, 1.0
  %v487 = vrcp.pop %v486
  %v488 = vmul.f32 %v486, %v487
  %v489 = vsub.f32 1.0, %v488
  %v490 = vmul.f32 %v487, %v489
  %v491 = vadd.f32 %v487, %v490
  %vm492 = vweird.f32 %v486
  %vm493 = vweird.f32 %v487
  %vm494 = vmor %vm492, %vm493
  %v495 = vsel %vm494, %v487, %v491
  %v496 = vand.u32 2147483647, %v486
  %vm497 = vcmp.eq.f32.partialorder %v496, 8.507059e+37
  %v498 = vand.u32 %v486, 2147483648
  %v499 = vor.u32 1.1754944e-38, %v498
  %v500 = vsel %vm497, %v499, %v495
  %v501 = vmul.f32 1.0, %v500
  %v502 = vtanh.pop %v462
  %v503 = vxor.u32 %v463, 2147483648
  %v504 = vmul.f32 %v503, 1.442695
  %v505 = vpow.pop %v504
  %v506 = vadd.f32 %v505, 1.0
  %v507 = vrcp.pop %v506
  %v508 = vmul.f32 %v506, %v507
  %v509 = vsub.f32 1.0, %v508
  %v510 = vmul.f32 %v507, %v509
  %v511 = vadd.f32 %v507, %v510
  %vm512 = vweird.f32 %v506
  %vm513 = vweird.f32 %v507
  %vm514 = vmor %vm512, %vm513
  %v515 = vsel %vm514, %v507, %v511
  %v516 = vand.u32 2147483647, %v506
  %vm517 = vcmp.eq.f32.partialorder %v516, 8.507059e+37
  %v518 = vand.u32 %v506, 2147483648
  %v519 = vor.u32 1.1754944e-38, %v518
  %v520 = vsel %vm517, %v519, %v515
  %v521 = vmul.f32 1.0, %v520
  %v522 = vmul.f32 %v501, %v162
  %v523 = vmul.f32 %v482, %v502
  %v524 = vadd.f32 %v522, %v523
  %v525 = vtanh.pop %v524
  %v526 = vmul.f32 %v521, %v525
  %527 = vst [vmem:[#allocation2] sm:$0xff] %v526
  %s528 = scalar_lea.vmem [#allocation3], 32
  %v529 = vld [vmem:[%s528] sm:$0xff]
  %v530 = vld [vmem:[%s528 + $0x8] sm:$0xff]
  %v531 = vld [vmem:[%s528 + $0x10] sm:$0xff]
  %v532 = vld [vmem:[%s528 + $0x18] sm:$0xff]
  %533 = vmatpush.msra.mxu0 %v92
  %534 = vmatpush.msra.mxu0 %v88
  %535 = vmatpush.msra.mxu0 %v84
  %536 = vmatpush.msra.mxu0 %v80
  %537 = vmatpush.msra.mxu0 %v76
  %538 = vmatpush.msra.mxu0 %v72
  %539 = vmatpush.msra.mxu0 %v68
  %540 = vmatpush.msra.mxu0 %v64
  %541 = vmatpush.msra.mxu0 %v60
  %542 = vmatpush.msra.mxu0 %v56
  %543 = vmatpush.msra.mxu0 %v52
  %544 = vmatpush.msra.mxu0 %v48
  %545 = vmatpush.msra.mxu0 %v44
  %546 = vmatpush.msra.mxu0 %v40
  %547 = vmatpush.msra.mxu0 %v36
  %548 = vmatpush.msra.mxu0 %v32
  %549 = vmatmul.f32.gmra.mxu0 %v526
  %v550 = vpop.f32.mrf.mxu0
  %v551 = vadd.f32 0.0, %v550
  %552 = vdwg.mxu0
  %553 = vmatpush.msra.mxu0 %v93
  %554 = vmatpush.msra.mxu0 %v89
  %555 = vmatpush.msra.mxu0 %v85
  %556 = vmatpush.msra.mxu0 %v81
  %557 = vmatpush.msra.mxu0 %v77
  %558 = vmatpush.msra.mxu0 %v73
  %559 = vmatpush.msra.mxu0 %v69
  %560 = vmatpush.msra.mxu0 %v65
  %561 = vmatpush.msra.mxu0 %v61
  %562 = vmatpush.msra.mxu0 %v57
  %563 = vmatpush.msra.mxu0 %v53
  %564 = vmatpush.msra.mxu0 %v49
  %565 = vmatpush.msra.mxu0 %v45
  %566 = vmatpush.msra.mxu0 %v41
  %567 = vmatpush.msra.mxu0 %v37
  %568 = vmatpush.msra.mxu0 %v33
  %569 = vmatmul.f32.gmra.mxu0 %v526
  %v570 = vpop.f32.mrf.mxu0
  %v571 = vadd.f32 0.0, %v570
  %572 = vdwg.mxu0
  %573 = vmatpush.msra.mxu0 %v94
  %574 = vmatpush.msra.mxu0 %v90
  %575 = vmatpush.msra.mxu0 %v86
  %576 = vmatpush.msra.mxu0 %v82
  %577 = vmatpush.msra.mxu0 %v78
  %578 = vmatpush.msra.mxu0 %v74
  %579 = vmatpush.msra.mxu0 %v70
  %580 = vmatpush.msra.mxu0 %v66
  %581 = vmatpush.msra.mxu0 %v62
  %582 = vmatpush.msra.mxu0 %v58
  %583 = vmatpush.msra.mxu0 %v54
  %584 = vmatpush.msra.mxu0 %v50
  %585 = vmatpush.msra.mxu0 %v46
  %586 = vmatpush.msra.mxu0 %v42
  %587 = vmatpush.msra.mxu0 %v38
  %588 = vmatpush.msra.mxu0 %v34
  %589 = vmatmul.f32.gmra.mxu0 %v526
  %v590 = vpop.f32.mrf.mxu0
  %v591 = vadd.f32 0.0, %v590
  %592 = vdwg.mxu0
  %593 = vmatpush.msra.mxu0 %v95
  %594 = vmatpush.msra.mxu0 %v91
  %595 = vmatpush.msra.mxu0 %v87
  %596 = vmatpush.msra.mxu0 %v83
  %597 = vmatpush.msra.mxu0 %v79
  %598 = vmatpush.msra.mxu0 %v75
  %599 = vmatpush.msra.mxu0 %v71
  %600 = vmatpush.msra.mxu0 %v67
  %601 = vmatpush.msra.mxu0 %v63
  %602 = vmatpush.msra.mxu0 %v59
  %603 = vmatpush.msra.mxu0 %v55
  %604 = vmatpush.msra.mxu0 %v51
  %605 = vmatpush.msra.mxu0 %v47
  %606 = vmatpush.msra.mxu0 %v43
  %607 = vmatpush.msra.mxu0 %v39
  %608 = vmatpush.msra.mxu0 %v35
  %609 = vmatmul.f32.gmra.mxu0 %v526
  %v610 = vpop.f32.mrf.mxu0
  %v611 = vadd.f32 0.0, %v610
  %612 = vdwg.mxu0
  %v613 = vadd.f32 %v529, %v551
  %v614 = vadd.f32 %v530, %v571
  %v615 = vadd.f32 %v531, %v591
  %v616 = vadd.f32 %v532, %v611
  %v617 = vxor.u32 %v613, 2147483648
  %v618 = vmul.f32 %v617, 1.442695
  %v619 = vpow.pop %v618
  %v620 = vadd.f32 %v619, 1.0
  %v621 = vrcp.pop %v620
  %v622 = vmul.f32 %v620, %v621
  %v623 = vsub.f32 1.0, %v622
  %v624 = vmul.f32 %v621, %v623
  %v625 = vadd.f32 %v621, %v624
  %vm626 = vweird.f32 %v620
  %vm627 = vweird.f32 %v621
  %vm628 = vmor %vm626, %vm627
  %v629 = vsel %vm628, %v621, %v625
  %v630 = vand.u32 2147483647, %v620
  %vm631 = vcmp.eq.f32.partialorder %v630, 8.507059e+37
  %v632 = vand.u32 %v620, 2147483648
  %v633 = vor.u32 1.1754944e-38, %v632
  %v634 = vsel %vm631, %v633, %v629
  %v635 = vmul.f32 1.0, %v634
  %v636 = vxor.u32 %v614, 2147483648
  %v637 = vmul.f32 %v636, 1.442695
  %v638 = vpow.pop %v637
  %v639 = vadd.f32 %v638, 1.0
  %v640 = vrcp.pop %v639
  %v641 = vmul.f32 %v639, %v640
  %v642 = vsub.f32 1.0, %v641
  %v643 = vmul.f32 %v640, %v642
  %v644 = vadd.f32 %v640, %v643
  %vm645 = vweird.f32 %v639
  %vm646 = vweird.f32 %v640
  %vm647 = vmor %vm645, %vm646
  %v648 = vsel %vm647, %v640, %v644
  %v649 = vand.u32 2147483647, %v639
  %vm650 = vcmp.eq.f32.partialorder %v649, 8.507059e+37
  %v651 = vand.u32 %v639, 2147483648
  %v652 = vor.u32 1.1754944e-38, %v651
  %v653 = vsel %vm650, %v652, %v648
  %v654 = vmul.f32 1.0, %v653
  %v655 = vtanh.pop %v615
  %v656 = vxor.u32 %v616, 2147483648
  %v657 = vmul.f32 %v656, 1.442695
  %v658 = vpow.pop %v657
  %v659 = vadd.f32 %v658, 1.0
  %v660 = vrcp.pop %v659
  %v661 = vmul.f32 %v659, %v660
  %v662 = vsub.f32 1.0, %v661
  %v663 = vmul.f32 %v660, %v662
  %v664 = vadd.f32 %v660, %v663
  %vm665 = vweird.f32 %v659
  %vm666 = vweird.f32 %v660
  %vm667 = vmor %vm665, %vm666
  %v668 = vsel %vm667, %v660, %v664
  %v669 = vand.u32 2147483647, %v659
  %vm670 = vcmp.eq.f32.partialorder %v669, 8.507059e+37
  %v671 = vand.u32 %v659, 2147483648
  %v672 = vor.u32 1.1754944e-38, %v671
  %v673 = vsel %vm670, %v672, %v668
  %v674 = vmul.f32 1.0, %v673
  %v675 = vmul.f32 %v654, %v524
  %v676 = vmul.f32 %v635, %v655
  %v677 = vadd.f32 %v675, %v676
  %v678 = vtanh.pop %v677
  %v679 = vmul.f32 %v674, %v678
  %s680 = scalar_lea.vmem [#allocation2], 8
  %681 = vst [vmem:[%s680] sm:$0xff] %v679
  %s682 = scalar_lea.vmem [#allocation3], 64
  %v683 = vld [vmem:[%s682] sm:$0xff]
  %v684 = vld [vmem:[%s682 + $0x8] sm:$0xff]
  %v685 = vld [vmem:[%s682 + $0x10] sm:$0xff]
  %v686 = vld [vmem:[%s682 + $0x18] sm:$0xff]
  %687 = vmatpush.msra.mxu0 %v92
  %688 = vmatpush.msra.mxu0 %v88
  %689 = vmatpush.msra.mxu0 %v84
  %690 = vmatpush.msra.mxu0 %v80
  %691 = vmatpush.msra.mxu0 %v76
  %692 = vmatpush.msra.mxu0 %v72
  %693 = vmatpush.msra.mxu0 %v68
  %694 = vmatpush.msra.mxu0 %v64
  %695 = vmatpush.msra.mxu0 %v60
  %696 = vmatpush.msra.mxu0 %v56
  %697 = vmatpush.msra.mxu0 %v52
  %698 = vmatpush.msra.mxu0 %v48
  %699 = vmatpush.msra.mxu0 %v44
  %700 = vmatpush.msra.mxu0 %v40
  %701 = vmatpush.msra.mxu0 %v36
  %702 = vmatpush.msra.mxu0 %v32
  %703 = vmatmul.f32.gmra.mxu0 %v679
  %v704 = vpop.f32.mrf.mxu0
  %v705 = vadd.f32 0.0, %v704
  %706 = vdwg.mxu0
  %707 = vmatpush.msra.mxu0 %v93
  %708 = vmatpush.msra.mxu0 %v89
  %709 = vmatpush.msra.mxu0 %v85
  %710 = vmatpush.msra.mxu0 %v81
  %711 = vmatpush.msra.mxu0 %v77
  %712 = vmatpush.msra.mxu0 %v73
  %713 = vmatpush.msra.mxu0 %v69
  %714 = vmatpush.msra.mxu0 %v65
  %715 = vmatpush.msra.mxu0 %v61
  %716 = vmatpush.msra.mxu0 %v57
  %717 = vmatpush.msra.mxu0 %v53
  %718 = vmatpush.msra.mxu0 %v49
  %719 = vmatpush.msra.mxu0 %v45
  %720 = vmatpush.msra.mxu0 %v41
  %721 = vmatpush.msra.mxu0 %v37
  %722 = vmatpush.msra.mxu0 %v33
  %723 = vmatmul.f32.gmra.mxu0 %v679
  %v724 = vpop.f32.mrf.mxu0
  %v725 = vadd.f32 0.0, %v724
  %726 = vdwg.mxu0
  %727 = vmatpush.msra.mxu0 %v94
  %728 = vmatpush.msra.mxu0 %v90
  %729 = vmatpush.msra.mxu0 %v86
  %730 = vmatpush.msra.mxu0 %v82
  %731 = vmatpush.msra.mxu0 %v78
  %732 = vmatpush.msra.mxu0 %v74
  %733 = vmatpush.msra.mxu0 %v70
  %734 = vmatpush.msra.mxu0 %v66
  %735 = vmatpush.msra.mxu0 %v62
  %736 = vmatpush.msra.mxu0 %v58
  %737 = vmatpush.msra.mxu0 %v54
  %738 = vmatpush.msra.mxu0 %v50
  %739 = vmatpush.msra.mxu0 %v46
  %740 = vmatpush.msra.mxu0 %v42
  %741 = vmatpush.msra.mxu0 %v38
  %742 = vmatpush.msra.mxu0 %v34
  %743 = vmatmul.f32.gmra.mxu0 %v679
  %v744 = vpop.f32.mrf.mxu0
  %v745 = vadd.f32 0.0, %v744
  %746 = vdwg.mxu0
  %747 = vmatpush.msra.mxu0 %v95
  %748 = vmatpush.msra.mxu0 %v91
  %749 = vmatpush.msra.mxu0 %v87
  %750 = vmatpush.msra.mxu0 %v83
  %751 = vmatpush.msra.mxu0 %v79
  %752 = vmatpush.msra.mxu0 %v75
  %753 = vmatpush.msra.mxu0 %v71
  %754 = vmatpush.msra.mxu0 %v67
  %755 = vmatpush.msra.mxu0 %v63
  %756 = vmatpush.msra.mxu0 %v59
  %757 = vmatpush.msra.mxu0 %v55
  %758 = vmatpush.msra.mxu0 %v51
  %759 = vmatpush.msra.mxu0 %v47
  %760 = vmatpush.msra.mxu0 %v43
  %761 = vmatpush.msra.mxu0 %v39
  %762 = vmatpush.msra.mxu0 %v35
  %763 = vmatmul.f32.gmra.mxu0 %v679
  %v764 = vpop.f32.mrf.mxu0
  %v765 = vadd.f32 0.0, %v764
  %766 = vdwg.mxu0
  %v767 = vadd.f32 %v683, %v705
  %v768 = vadd.f32 %v684, %v725
  %v769 = vadd.f32 %v685, %v745
  %v770 = vadd.f32 %v686, %v765
  %v771 = vxor.u32 %v767, 2147483648
  %v772 = vmul.f32 %v771, 1.442695
  %v773 = vpow.pop %v772
  %v774 = vadd.f32 %v773, 1.0
  %v775 = vrcp.pop %v774
  %v776 = vmul.f32 %v774, %v775
  %v777 = vsub.f32 1.0, %v776
  %v778 = vmul.f32 %v775, %v777
  %v779 = vadd.f32 %v775, %v778
  %vm780 = vweird.f32 %v774
  %vm781 = vweird.f32 %v775
  %vm782 = vmor %vm780, %vm781
  %v783 = vsel %vm782, %v775, %v779
  %v784 = vand.u32 2147483647, %v774
  %vm785 = vcmp.eq.f32.partialorder %v784, 8.507059e+37
  %v786 = vand.u32 %v774, 2147483648
  %v787 = vor.u32 1.1754944e-38, %v786
  %v788 = vsel %vm785, %v787, %v783
  %v789 = vmul.f32 1.0, %v788
  %v790 = vxor.u32 %v768, 2147483648
  %v791 = vmul.f32 %v790, 1.442695
  %v792 = vpow.pop %v791
  %v793 = vadd.f32 %v792, 1.0
  %v794 = vrcp.pop %v793
  %v795 = vmul.f32 %v793, %v794
  %v796 = vsub.f32 1.0, %v795
  %v797 = vmul.f32 %v794, %v796
  %v798 = vadd.f32 %v794, %v797
  %vm799 = vweird.f32 %v793
  %vm800 = vweird.f32 %v794
  %vm801 = vmor %vm799, %vm800
  %v802 = vsel %vm801, %v794, %v798
  %v803 = vand.u32 2147483647, %v793
  %vm804 = vcmp.eq.f32.partialorder %v803, 8.507059e+37
  %v805 = vand.u32 %v793, 2147483648
  %v806 = vor.u32 1.1754944e-38, %v805
  %v807 = vsel %vm804, %v806, %v802
  %v808 = vmul.f32 1.0, %v807
  %v809 = vtanh.pop %v769
  %v810 = vxor.u32 %v770, 2147483648
  %v811 = vmul.f32 %v810, 1.442695
  %v812 = vpow.pop %v811
  %v813 = vadd.f32 %v812, 1.0
  %v814 = vrcp.pop %v813
  %v815 = vmul.f32 %v813, %v814
  %v816 = vsub.f32 1.0, %v815
  %v817 = vmul.f32 %v814, %v816
  %v818 = vadd.f32 %v814, %v817
  %vm819 = vweird.f32 %v813
  %vm820 = vweird.f32 %v814
  %vm821 = vmor %vm819, %vm820
  %v822 = vsel %vm821, %v814, %v818
  %v823 = vand.u32 2147483647, %v813
  %vm824 = vcmp.eq.f32.partialorder %v823, 8.507059e+37
  %v825 = vand.u32 %v813, 2147483648
  %v826 = vor.u32 1.1754944e-38, %v825
  %v827 = vsel %vm824, %v826, %v822
  %v828 = vmul.f32 1.0, %v827
  %v829 = vmul.f32 %v808, %v677
  %v830 = vmul.f32 %v789, %v809
  %v831 = vadd.f32 %v829, %v830
  %v832 = vtanh.pop %v831
  %v833 = vmul.f32 %v828, %v832
  %s834 = scalar_lea.vmem [#allocation2], 16
  %835 = vst [vmem:[%s834] sm:$0xff] %v833
  %s836 = scalar_lea.vmem [#allocation3], 96
  %v837 = vld [vmem:[%s836] sm:$0xff]
  %v838 = vld [vmem:[%s836 + $0x8] sm:$0xff]
  %v839 = vld [vmem:[%s836 + $0x10] sm:$0xff]
  %v840 = vld [vmem:[%s836 + $0x18] sm:$0xff]
  %841 = vmatpush.msra.mxu0 %v92
  %842 = vmatpush.msra.mxu0 %v88
  %843 = vmatpush.msra.mxu0 %v84
  %844 = vmatpush.msra.mxu0 %v80
  %845 = vmatpush.msra.mxu0 %v76
  %846 = vmatpush.msra.mxu0 %v72
  %847 = vmatpush.msra.mxu0 %v68
  %848 = vmatpush.msra.mxu0 %v64
  %849 = vmatpush.msra.mxu0 %v60
  %850 = vmatpush.msra.mxu0 %v56
  %851 = vmatpush.msra.mxu0 %v52
  %852 = vmatpush.msra.mxu0 %v48
  %853 = vmatpush.msra.mxu0 %v44
  %854 = vmatpush.msra.mxu0 %v40
  %855 = vmatpush.msra.mxu0 %v36
  %856 = vmatpush.msra.mxu0 %v32
  %857 = vmatmul.f32.gmra.mxu0 %v833
  %v858 = vpop.f32.mrf.mxu0
  %v859 = vadd.f32 0.0, %v858
  %860 = vdwg.mxu0
  %861 = vmatpush.msra.mxu0 %v93
  %862 = vmatpush.msra.mxu0 %v89
  %863 = vmatpush.msra.mxu0 %v85
  %864 = vmatpush.msra.mxu0 %v81
  %865 = vmatpush.msra.mxu0 %v77
  %866 = vmatpush.msra.mxu0 %v73
  %867 = vmatpush.msra.mxu0 %v69
  %868 = vmatpush.msra.mxu0 %v65
  %869 = vmatpush.msra.mxu0 %v61
  %870 = vmatpush.msra.mxu0 %v57
  %871 = vmatpush.msra.mxu0 %v53
  %872 = vmatpush.msra.mxu0 %v49
  %873 = vmatpush.msra.mxu0 %v45
  %874 = vmatpush.msra.mxu0 %v41
  %875 = vmatpush.msra.mxu0 %v37
  %876 = vmatpush.msra.mxu0 %v33
  %877 = vmatmul.f32.gmra.mxu0 %v833
  %v878 = vpop.f32.mrf.mxu0
  %v879 = vadd.f32 0.0, %v878
  %880 = vdwg.mxu0
  %881 = vmatpush.msra.mxu0 %v94
  %882 = vmatpush.msra.mxu0 %v90
  %883 = vmatpush.msra.mxu0 %v86
  %884 = vmatpush.msra.mxu0 %v82
  %885 = vmatpush.msra.mxu0 %v78
  %886 = vmatpush.msra.mxu0 %v74
  %887 = vmatpush.msra.mxu0 %v70
  %888 = vmatpush.msra.mxu0 %v66
  %889 = vmatpush.msra.mxu0 %v62
  %890 = vmatpush.msra.mxu0 %v58
  %891 = vmatpush.msra.mxu0 %v54
  %892 = vmatpush.msra.mxu0 %v50
  %893 = vmatpush.msra.mxu0 %v46
  %894 = vmatpush.msra.mxu0 %v42
  %895 = vmatpush.msra.mxu0 %v38
  %896 = vmatpush.msra.mxu0 %v34
  %897 = vmatmul.f32.gmra.mxu0 %v833
  %v898 = vpop.f32.mrf.mxu0
  %v899 = vadd.f32 0.0, %v898
  %900 = vdwg.mxu0
  %901 = vmatpush.msra.mxu0 %v95
  %902 = vmatpush.msra.mxu0 %v91
  %903 = vmatpush.msra.mxu0 %v87
  %904 = vmatpush.msra.mxu0 %v83
  %905 = vmatpush.msra.mxu0 %v79
  %906 = vmatpush.msra.mxu0 %v75
  %907 = vmatpush.msra.mxu0 %v71
  %908 = vmatpush.msra.mxu0 %v67
  %909 = vmatpush.msra.mxu0 %v63
  %910 = vmatpush.msra.mxu0 %v59
  %911 = vmatpush.msra.mxu0 %v55
  %912 = vmatpush.msra.mxu0 %v51
  %913 = vmatpush.msra.mxu0 %v47
  %914 = vmatpush.msra.mxu0 %v43
  %915 = vmatpush.msra.mxu0 %v39
  %916 = vmatpush.msra.mxu0 %v35
  %917 = vmatmul.f32.gmra.mxu0 %v833
  %v918 = vpop.f32.mrf.mxu0
  %v919 = vadd.f32 0.0, %v918
  %920 = vdwg.mxu0
  %v921 = vadd.f32 %v837, %v859
  %v922 = vadd.f32 %v838, %v879
  %v923 = vadd.f32 %v839, %v899
  %v924 = vadd.f32 %v840, %v919
  %v925 = vxor.u32 %v921, 2147483648
  %v926 = vmul.f32 %v925, 1.442695
  %v927 = vpow.pop %v926
  %v928 = vadd.f32 %v927, 1.0
  %v929 = vrcp.pop %v928
  %v930 = vmul.f32 %v928, %v929
  %v931 = vsub.f32 1.0, %v930
  %v932 = vmul.f32 %v929, %v931
  %v933 = vadd.f32 %v929, %v932
  %vm934 = vweird.f32 %v928
  %vm935 = vweird.f32 %v929
  %vm936 = vmor %vm934, %vm935
  %v937 = vsel %vm936, %v929, %v933
  %v938 = vand.u32 2147483647, %v928
  %vm939 = vcmp.eq.f32.partialorder %v938, 8.507059e+37
  %v940 = vand.u32 %v928, 2147483648
  %v941 = vor.u32 1.1754944e-38, %v940
  %v942 = vsel %vm939, %v941, %v937
  %v943 = vmul.f32 1.0, %v942
  %v944 = vxor.u32 %v922, 2147483648
  %v945 = vmul.f32 %v944, 1.442695
  %v946 = vpow.pop %v945
  %v947 = vadd.f32 %v946, 1.0
  %v948 = vrcp.pop %v947
  %v949 = vmul.f32 %v947, %v948
  %v950 = vsub.f32 1.0, %v949
  %v951 = vmul.f32 %v948, %v950
  %v952 = vadd.f32 %v948, %v951
  %vm953 = vweird.f32 %v947
  %vm954 = vweird.f32 %v948
  %vm955 = vmor %vm953, %vm954
  %v956 = vsel %vm955, %v948, %v952
  %v957 = vand.u32 2147483647, %v947
  %vm958 = vcmp.eq.f32.partialorder %v957, 8.507059e+37
  %v959 = vand.u32 %v947, 2147483648
  %v960 = vor.u32 1.1754944e-38, %v959
  %v961 = vsel %vm958, %v960, %v956
  %v962 = vmul.f32 1.0, %v961
  %v963 = vtanh.pop %v923
  %v964 = vxor.u32 %v924, 2147483648
  %v965 = vmul.f32 %v964, 1.442695
  %v966 = vpow.pop %v965
  %v967 = vadd.f32 %v966, 1.0
  %v968 = vrcp.pop %v967
  %v969 = vmul.f32 %v967, %v968
  %v970 = vsub.f32 1.0, %v969
  %v971 = vmul.f32 %v968, %v970
  %v972 = vadd.f32 %v968, %v971
  %vm973 = vweird.f32 %v967
  %vm974 = vweird.f32 %v968
  %vm975 = vmor %vm973, %vm974
  %v976 = vsel %vm975, %v968, %v972
  %v977 = vand.u32 2147483647, %v967
  %vm978 = vcmp.eq.f32.partialorder %v977, 8.507059e+37
  %v979 = vand.u32 %v967, 2147483648
  %v980 = vor.u32 1.1754944e-38, %v979
  %v981 = vsel %vm978, %v980, %v976
  %v982 = vmul.f32 1.0, %v981
  %v983 = vmul.f32 %v962, %v831
  %v984 = vmul.f32 %v943, %v963
  %v985 = vadd.f32 %v983, %v984
  %v986 = vtanh.pop %v985
  %v987 = vmul.f32 %v982, %v986
  %s988 = scalar_lea.vmem [#allocation2], 24
  %989 = vst [vmem:[%s988] sm:$0xff] %v987
  %s990 = scalar_lea.vmem [#allocation3], 128
  %v991 = vld [vmem:[%s990] sm:$0xff]
  %v992 = vld [vmem:[%s990 + $0x8] sm:$0xff]
  %v993 = vld [vmem:[%s990 + $0x10] sm:$0xff]
  %v994 = vld [vmem:[%s990 + $0x18] sm:$0xff]
  %995 = vmatpush.msra.mxu0 %v92
  %996 = vmatpush.msra.mxu0 %v88
  %997 = vmatpush.msra.mxu0 %v84
  %998 = vmatpush.msra.mxu0 %v80
  %999 = vmatpush.msra.mxu0 %v76
  %1000 = vmatpush.msra.mxu0 %v72
  %1001 = vmatpush.msra.mxu0 %v68
  %1002 = vmatpush.msra.mxu0 %v64
  %1003 = vmatpush.msra.mxu0 %v60
  %1004 = vmatpush.msra.mxu0 %v56
  %1005 = vmatpush.msra.mxu0 %v52
  %1006 = vmatpush.msra.mxu0 %v48
  %1007 = vmatpush.msra.mxu0 %v44
  %1008 = vmatpush.msra.mxu0 %v40
  %1009 = vmatpush.msra.mxu0 %v36
  %1010 = vmatpush.msra.mxu0 %v32
  %1011 = vmatmul.f32.gmra.mxu0 %v987
  %v1012 = vpop.f32.mrf.mxu0
  %v1013 = vadd.f32 0.0, %v1012
  %1014 = vdwg.mxu0
  %1015 = vmatpush.msra.mxu0 %v93
  %1016 = vmatpush.msra.mxu0 %v89
  %1017 = vmatpush.msra.mxu0 %v85
  %1018 = vmatpush.msra.mxu0 %v81
  %1019 = vmatpush.msra.mxu0 %v77
  %1020 = vmatpush.msra.mxu0 %v73
  %1021 = vmatpush.msra.mxu0 %v69
  %1022 = vmatpush.msra.mxu0 %v65
  %1023 = vmatpush.msra.mxu0 %v61
  %1024 = vmatpush.msra.mxu0 %v57
  %1025 = vmatpush.msra.mxu0 %v53
  %1026 = vmatpush.msra.mxu0 %v49
  %1027 = vmatpush.msra.mxu0 %v45
  %1028 = vmatpush.msra.mxu0 %v41
  %1029 = vmatpush.msra.mxu0 %v37
  %1030 = vmatpush.msra.mxu0 %v33
  %1031 = vmatmul.f32.gmra.mxu0 %v987
  %v1032 = vpop.f32.mrf.mxu0
  %v1033 = vadd.f32 0.0, %v1032
  %1034 = vdwg.mxu0
  %1035 = vmatpush.msra.mxu0 %v94
  %1036 = vmatpush.msra.mxu0 %v90
  %1037 = vmatpush.msra.mxu0 %v86
  %1038 = vmatpush.msra.mxu0 %v82
  %1039 = vmatpush.msra.mxu0 %v78
  %1040 = vmatpush.msra.mxu0 %v74
  %1041 = vmatpush.msra.mxu0 %v70
  %1042 = vmatpush.msra.mxu0 %v66
  %1043 = vmatpush.msra.mxu0 %v62
  %1044 = vmatpush.msra.mxu0 %v58
  %1045 = vmatpush.msra.mxu0 %v54
  %1046 = vmatpush.msra.mxu0 %v50
  %1047 = vmatpush.msra.mxu0 %v46
  %1048 = vmatpush.msra.mxu0 %v42
  %1049 = vmatpush.msra.mxu0 %v38
  %1050 = vmatpush.msra.mxu0 %v34
  %1051 = vmatmul.f32.gmra.mxu0 %v987
  %v1052 = vpop.f32.mrf.mxu0
  %v1053 = vadd.f32 0.0, %v1052
  %1054 = vdwg.mxu0
  %1055 = vmatpush.msra.mxu0 %v95
  %1056 = vmatpush.msra.mxu0 %v91
  %1057 = vmatpush.msra.mxu0 %v87
  %1058 = vmatpush.msra.mxu0 %v83
  %1059 = vmatpush.msra.mxu0 %v79
  %1060 = vmatpush.msra.mxu0 %v75
  %1061 = vmatpush.msra.mxu0 %v71
  %1062 = vmatpush.msra.mxu0 %v67
  %1063 = vmatpush.msra.mxu0 %v63
  %1064 = vmatpush.msra.mxu0 %v59
  %1065 = vmatpush.msra.mxu0 %v55
  %1066 = vmatpush.msra.mxu0 %v51
  %1067 = vmatpush.msra.mxu0 %v47
  %1068 = vmatpush.msra.mxu0 %v43
  %1069 = vmatpush.msra.mxu0 %v39
  %1070 = vmatpush.msra.mxu0 %v35
  %1071 = vmatmul.f32.gmra.mxu0 %v987
  %v1072 = vpop.f32.mrf.mxu0
  %v1073 = vadd.f32 0.0, %v1072
  %1074 = vdwg.mxu0
  %v1075 = vadd.f32 %v991, %v1013
  %v1076 = vadd.f32 %v992, %v1033
  %v1077 = vadd.f32 %v993, %v1053
  %v1078 = vadd.f32 %v994, %v1073
  %v1079 = vxor.u32 %v1075, 2147483648
  %v1080 = vmul.f32 %v1079, 1.442695
  %v1081 = vpow.pop %v1080
  %v1082 = vadd.f32 %v1081, 1.0
  %v1083 = vrcp.pop %v1082
  %v1084 = vmul.f32 %v1082, %v1083
  %v1085 = vsub.f32 1.0, %v1084
  %v1086 = vmul.f32 %v1083, %v1085
  %v1087 = vadd.f32 %v1083, %v1086
  %vm1088 = vweird.f32 %v1082
  %vm1089 = vweird.f32 %v1083
  %vm1090 = vmor %vm1088, %vm1089
  %v1091 = vsel %vm1090, %v1083, %v1087
  %v1092 = vand.u32 2147483647, %v1082
  %vm1093 = vcmp.eq.f32.partialorder %v1092, 8.507059e+37
  %v1094 = vand.u32 %v1082, 2147483648
  %v1095 = vor.u32 1.1754944e-38, %v1094
  %v1096 = vsel %vm1093, %v1095, %v1091
  %v1097 = vmul.f32 1.0, %v1096
  %v1098 = vxor.u32 %v1076, 2147483648
  %v1099 = vmul.f32 %v1098, 1.442695
  %v1100 = vpow.pop %v1099
  %v1101 = vadd.f32 %v1100, 1.0
  %v1102 = vrcp.pop %v1101
  %v1103 = vmul.f32 %v1101, %v1102
  %v1104 = vsub.f32 1.0, %v1103
  %v1105 = vmul.f32 %v1102, %v1104
  %v1106 = vadd.f32 %v1102, %v1105
  %vm1107 = vweird.f32 %v1101
  %vm1108 = vweird.f32 %v1102
  %vm1109 = vmor %vm1107, %vm1108
  %v1110 = vsel %vm1109, %v1102, %v1106
  %v1111 = vand.u32 2147483647, %v1101
  %vm1112 = vcmp.eq.f32.partialorder %v1111, 8.507059e+37
  %v1113 = vand.u32 %v1101, 2147483648
  %v1114 = vor.u32 1.1754944e-38, %v1113
  %v1115 = vsel %vm1112, %v1114, %v1110
  %v1116 = vmul.f32 1.0, %v1115
  %v1117 = vtanh.pop %v1077
  %v1118 = vxor.u32 %v1078, 2147483648
  %v1119 = vmul.f32 %v1118, 1.442695
  %v1120 = vpow.pop %v1119
  %v1121 = vadd.f32 %v1120, 1.0
  %v1122 = vrcp.pop %v1121
  %v1123 = vmul.f32 %v1121, %v1122
  %v1124 = vsub.f32 1.0, %v1123
  %v1125 = vmul.f32 %v1122, %v1124
  %v1126 = vadd.f32 %v1122, %v1125
  %vm1127 = vweird.f32 %v1121
  %vm1128 = vweird.f32 %v1122
  %vm1129 = vmor %vm1127, %vm1128
  %v1130 = vsel %vm1129, %v1122, %v1126
  %v1131 = vand.u32 2147483647, %v1121
  %vm1132 = vcmp.eq.f32.partialorder %v1131, 8.507059e+37
  %v1133 = vand.u32 %v1121, 2147483648
  %v1134 = vor.u32 1.1754944e-38, %v1133
  %v1135 = vsel %vm1132, %v1134, %v1130
  %v1136 = vmul.f32 1.0, %v1135
  %v1137 = vmul.f32 %v1116, %v985
  %v1138 = vmul.f32 %v1097, %v1117
  %v1139 = vadd.f32 %v1137, %v1138
  %v1140 = vtanh.pop %v1139
  %v1141 = vmul.f32 %v1136, %v1140
  %s1142 = scalar_lea.vmem [#allocation2], 32
  %1143 = vst [vmem:[%s1142] sm:$0xff] %v1141
  %s1144 = scalar_lea.vmem [#allocation3], 160
  %v1145 = vld [vmem:[%s1144] sm:$0xff]
  %v1146 = vld [vmem:[%s1144 + $0x8] sm:$0xff]
  %v1147 = vld [vmem:[%s1144 + $0x10] sm:$0xff]
  %v1148 = vld [vmem:[%s1144 + $0x18] sm:$0xff]
  %1149 = vmatpush.msra.mxu0 %v92
  %1150 = vmatpush.msra.mxu0 %v88
  %1151 = vmatpush.msra.mxu0 %v84
  %1152 = vmatpush.msra.mxu0 %v80
  %1153 = vmatpush.msra.mxu0 %v76
  %1154 = vmatpush.msra.mxu0 %v72
  %1155 = vmatpush.msra.mxu0 %v68
  %1156 = vmatpush.msra.mxu0 %v64
  %1157 = vmatpush.msra.mxu0 %v60
  %1158 = vmatpush.msra.mxu0 %v56
  %1159 = vmatpush.msra.mxu0 %v52
  %1160 = vmatpush.msra.mxu0 %v48
  %1161 = vmatpush.msra.mxu0 %v44
  %1162 = vmatpush.msra.mxu0 %v40
  %1163 = vmatpush.msra.mxu0 %v36
  %1164 = vmatpush.msra.mxu0 %v32
  %1165 = vmatmul.f32.gmra.mxu0 %v1141
  %v1166 = vpop.f32.mrf.mxu0
  %v1167 = vadd.f32 0.0, %v1166
  %1168 = vdwg.mxu0
  %1169 = vmatpush.msra.mxu0 %v93
  %1170 = vmatpush.msra.mxu0 %v89
  %1171 = vmatpush.msra.mxu0 %v85
  %1172 = vmatpush.msra.mxu0 %v81
  %1173 = vmatpush.msra.mxu0 %v77
  %1174 = vmatpush.msra.mxu0 %v73
  %1175 = vmatpush.msra.mxu0 %v69
  %1176 = vmatpush.msra.mxu0 %v65
  %1177 = vmatpush.msra.mxu0 %v61
  %1178 = vmatpush.msra.mxu0 %v57
  %1179 = vmatpush.msra.mxu0 %v53
  %1180 = vmatpush.msra.mxu0 %v49
  %1181 = vmatpush.msra.mxu0 %v45
  %1182 = vmatpush.msra.mxu0 %v41
  %1183 = vmatpush.msra.mxu0 %v37
  %1184 = vmatpush.msra.mxu0 %v33
  %1185 = vmatmul.f32.gmra.mxu0 %v1141
  %v1186 = vpop.f32.mrf.mxu0
  %v1187 = vadd.f32 0.0, %v1186
  %1188 = vdwg.mxu0
  %1189 = vmatpush.msra.mxu0 %v94
  %1190 = vmatpush.msra.mxu0 %v90
  %1191 = vmatpush.msra.mxu0 %v86
  %1192 = vmatpush.msra.mxu0 %v82
  %1193 = vmatpush.msra.mxu0 %v78
  %1194 = vmatpush.msra.mxu0 %v74
  %1195 = vmatpush.msra.mxu0 %v70
  %1196 = vmatpush.msra.mxu0 %v66
  %1197 = vmatpush.msra.mxu0 %v62
  %1198 = vmatpush.msra.mxu0 %v58
  %1199 = vmatpush.msra.mxu0 %v54
  %1200 = vmatpush.msra.mxu0 %v50
  %1201 = vmatpush.msra.mxu0 %v46
  %1202 = vmatpush.msra.mxu0 %v42
  %1203 = vmatpush.msra.mxu0 %v38
  %1204 = vmatpush.msra.mxu0 %v34
  %1205 = vmatmul.f32.gmra.mxu0 %v1141
  %v1206 = vpop.f32.mrf.mxu0
  %v1207 = vadd.f32 0.0, %v1206
  %1208 = vdwg.mxu0
  %1209 = vmatpush.msra.mxu0 %v95
  %1210 = vmatpush.msra.mxu0 %v91
  %1211 = vmatpush.msra.mxu0 %v87
  %1212 = vmatpush.msra.mxu0 %v83
  %1213 = vmatpush.msra.mxu0 %v79
  %1214 = vmatpush.msra.mxu0 %v75
  %1215 = vmatpush.msra.mxu0 %v71
  %1216 = vmatpush.msra.mxu0 %v67
  %1217 = vmatpush.msra.mxu0 %v63
  %1218 = vmatpush.msra.mxu0 %v59
  %1219 = vmatpush.msra.mxu0 %v55
  %1220 = vmatpush.msra.mxu0 %v51
  %1221 = vmatpush.msra.mxu0 %v47
  %1222 = vmatpush.msra.mxu0 %v43
  %1223 = vmatpush.msra.mxu0 %v39
  %1224 = vmatpush.msra.mxu0 %v35
  %1225 = vmatmul.f32.gmra.mxu0 %v1141
  %v1226 = vpop.f32.mrf.mxu0
  %v1227 = vadd.f32 0.0, %v1226
  %1228 = vdwg.mxu0
  %v1229 = vadd.f32 %v1145, %v1167
  %v1230 = vadd.f32 %v1146, %v1187
  %v1231 = vadd.f32 %v1147, %v1207
  %v1232 = vadd.f32 %v1148, %v1227
  %v1233 = vxor.u32 %v1229, 2147483648
  %v1234 = vmul.f32 %v1233, 1.442695
  %v1235 = vpow.pop %v1234
  %v1236 = vadd.f32 %v1235, 1.0
  %v1237 = vrcp.pop %v1236
  %v1238 = vmul.f32 %v1236, %v1237
  %v1239 = vsub.f32 1.0, %v1238
  %v1240 = vmul.f32 %v1237, %v1239
  %v1241 = vadd.f32 %v1237, %v1240
  %vm1242 = vweird.f32 %v1236
  %vm1243 = vweird.f32 %v1237
  %vm1244 = vmor %vm1242, %vm1243
  %v1245 = vsel %vm1244, %v1237, %v1241
  %v1246 = vand.u32 2147483647, %v1236
  %vm1247 = vcmp.eq.f32.partialorder %v1246, 8.507059e+37
  %v1248 = vand.u32 %v1236, 2147483648
  %v1249 = vor.u32 1.1754944e-38, %v1248
  %v1250 = vsel %vm1247, %v1249, %v1245
  %v1251 = vmul.f32 1.0, %v1250
  %v1252 = vxor.u32 %v1230, 2147483648
  %v1253 = vmul.f32 %v1252, 1.442695
  %v1254 = vpow.pop %v1253
  %v1255 = vadd.f32 %v1254, 1.0
  %v1256 = vrcp.pop %v1255
  %v1257 = vmul.f32 %v1255, %v1256
  %v1258 = vsub.f32 1.0, %v1257
  %v1259 = vmul.f32 %v1256, %v1258
  %v1260 = vadd.f32 %v1256, %v1259
  %vm1261 = vweird.f32 %v1255
  %vm1262 = vweird.f32 %v1256
  %vm1263 = vmor %vm1261, %vm1262
  %v1264 = vsel %vm1263, %v1256, %v1260
  %v1265 = vand.u32 2147483647, %v1255
  %vm1266 = vcmp.eq.f32.partialorder %v1265, 8.507059e+37
  %v1267 = vand.u32 %v1255, 2147483648
  %v1268 = vor.u32 1.1754944e-38, %v1267
  %v1269 = vsel %vm1266, %v1268, %v1264
  %v1270 = vmul.f32 1.0, %v1269
  %v1271 = vtanh.pop %v1231
  %v1272 = vxor.u32 %v1232, 2147483648
  %v1273 = vmul.f32 %v1272, 1.442695
  %v1274 = vpow.pop %v1273
  %v1275 = vadd.f32 %v1274, 1.0
  %v1276 = vrcp.pop %v1275
  %v1277 = vmul.f32 %v1275, %v1276
  %v1278 = vsub.f32 1.0, %v1277
  %v1279 = vmul.f32 %v1276, %v1278
  %v1280 = vadd.f32 %v1276, %v1279
  %vm1281 = vweird.f32 %v1275
  %vm1282 = vweird.f32 %v1276
  %vm1283 = vmor %vm1281, %vm1282
  %v1284 = vsel %vm1283, %v1276, %v1280
  %v1285 = vand.u32 2147483647, %v1275
  %vm1286 = vcmp.eq.f32.partialorder %v1285, 8.507059e+37
  %v1287 = vand.u32 %v1275, 2147483648
  %v1288 = vor.u32 1.1754944e-38, %v1287
  %v1289 = vsel %vm1286, %v1288, %v1284
  %v1290 = vmul.f32 1.0, %v1289
  %v1291 = vmul.f32 %v1270, %v1139
  %v1292 = vmul.f32 %v1251, %v1271
  %v1293 = vadd.f32 %v1291, %v1292
  %v1294 = vtanh.pop %v1293
  %v1295 = vmul.f32 %v1290, %v1294
  %s1296 = scalar_lea.vmem [#allocation2], 40
  %1297 = vst [vmem:[%s1296] sm:$0xff] %v1295
  %s1298 = scalar_lea.vmem [#allocation3], 192
  %v1299 = vld [vmem:[%s1298] sm:$0xff]
  %v1300 = vld [vmem:[%s1298 + $0x8] sm:$0xff]
  %v1301 = vld [vmem:[%s1298 + $0x10] sm:$0xff]
  %v1302 = vld [vmem:[%s1298 + $0x18] sm:$0xff]
  %1303 = vmatpush.msra.mxu0 %v92
  %1304 = vmatpush.msra.mxu0 %v88
  %1305 = vmatpush.msra.mxu0 %v84
  %1306 = vmatpush.msra.mxu0 %v80
  %1307 = vmatpush.msra.mxu0 %v76
  %1308 = vmatpush.msra.mxu0 %v72
  %1309 = vmatpush.msra.mxu0 %v68
  %1310 = vmatpush.msra.mxu0 %v64
  %1311 = vmatpush.msra.mxu0 %v60
  %1312 = vmatpush.msra.mxu0 %v56
  %1313 = vmatpush.msra.mxu0 %v52
  %1314 = vmatpush.msra.mxu0 %v48
  %1315 = vmatpush.msra.mxu0 %v44
  %1316 = vmatpush.msra.mxu0 %v40
  %1317 = vmatpush.msra.mxu0 %v36
  %1318 = vmatpush.msra.mxu0 %v32
  %1319 = vmatmul.f32.gmra.mxu0 %v1295
  %v1320 = vpop.f32.mrf.mxu0
  %v1321 = vadd.f32 0.0, %v1320
  %1322 = vdwg.mxu0
  %1323 = vmatpush.msra.mxu0 %v93
  %1324 = vmatpush.msra.mxu0 %v89
  %1325 = vmatpush.msra.mxu0 %v85
  %1326 = vmatpush.msra.mxu0 %v81
  %1327 = vmatpush.msra.mxu0 %v77
  %1328 = vmatpush.msra.mxu0 %v73
  %1329 = vmatpush.msra.mxu0 %v69
  %1330 = vmatpush.msra.mxu0 %v65
  %1331 = vmatpush.msra.mxu0 %v61
  %1332 = vmatpush.msra.mxu0 %v57
  %1333 = vmatpush.msra.mxu0 %v53
  %1334 = vmatpush.msra.mxu0 %v49
  %1335 = vmatpush.msra.mxu0 %v45
  %1336 = vmatpush.msra.mxu0 %v41
  %1337 = vmatpush.msra.mxu0 %v37
  %1338 = vmatpush.msra.mxu0 %v33
  %1339 = vmatmul.f32.gmra.mxu0 %v1295
  %v1340 = vpop.f32.mrf.mxu0
  %v1341 = vadd.f32 0.0, %v1340
  %1342 = vdwg.mxu0
  %1343 = vmatpush.msra.mxu0 %v94
  %1344 = vmatpush.msra.mxu0 %v90
  %1345 = vmatpush.msra.mxu0 %v86
  %1346 = vmatpush.msra.mxu0 %v82
  %1347 = vmatpush.msra.mxu0 %v78
  %1348 = vmatpush.msra.mxu0 %v74
  %1349 = vmatpush.msra.mxu0 %v70
  %1350 = vmatpush.msra.mxu0 %v66
  %1351 = vmatpush.msra.mxu0 %v62
  %1352 = vmatpush.msra.mxu0 %v58
  %1353 = vmatpush.msra.mxu0 %v54
  %1354 = vmatpush.msra.mxu0 %v50
  %1355 = vmatpush.msra.mxu0 %v46
  %1356 = vmatpush.msra.mxu0 %v42
  %1357 = vmatpush.msra.mxu0 %v38
  %1358 = vmatpush.msra.mxu0 %v34
  %1359 = vmatmul.f32.gmra.mxu0 %v1295
  %v1360 = vpop.f32.mrf.mxu0
  %v1361 = vadd.f32 0.0, %v1360
  %1362 = vdwg.mxu0
  %1363 = vmatpush.msra.mxu0 %v95
  %1364 = vmatpush.msra.mxu0 %v91
  %1365 = vmatpush.msra.mxu0 %v87
  %1366 = vmatpush.msra.mxu0 %v83
  %1367 = vmatpush.msra.mxu0 %v79
  %1368 = vmatpush.msra.mxu0 %v75
  %1369 = vmatpush.msra.mxu0 %v71
  %1370 = vmatpush.msra.mxu0 %v67
  %1371 = vmatpush.msra.mxu0 %v63
  %1372 = vmatpush.msra.mxu0 %v59
  %1373 = vmatpush.msra.mxu0 %v55
  %1374 = vmatpush.msra.mxu0 %v51
  %1375 = vmatpush.msra.mxu0 %v47
  %1376 = vmatpush.msra.mxu0 %v43
  %1377 = vmatpush.msra.mxu0 %v39
  %1378 = vmatpush.msra.mxu0 %v35
  %1379 = vmatmul.f32.gmra.mxu0 %v1295
  %v1380 = vpop.f32.mrf.mxu0
  %v1381 = vadd.f32 0.0, %v1380
  %1382 = vdwg.mxu0
  %v1383 = vadd.f32 %v1299, %v1321
  %v1384 = vadd.f32 %v1300, %v1341
  %v1385 = vadd.f32 %v1301, %v1361
  %v1386 = vadd.f32 %v1302, %v1381
  %v1387 = vxor.u32 %v1383, 2147483648
  %v1388 = vmul.f32 %v1387, 1.442695
  %v1389 = vpow.pop %v1388
  %v1390 = vadd.f32 %v1389, 1.0
  %v1391 = vrcp.pop %v1390
  %v1392 = vmul.f32 %v1390, %v1391
  %v1393 = vsub.f32 1.0, %v1392
  %v1394 = vmul.f32 %v1391, %v1393
  %v1395 = vadd.f32 %v1391, %v1394
  %vm1396 = vweird.f32 %v1390
  %vm1397 = vweird.f32 %v1391
  %vm1398 = vmor %vm1396, %vm1397
  %v1399 = vsel %vm1398, %v1391, %v1395
  %v1400 = vand.u32 2147483647, %v1390
  %vm1401 = vcmp.eq.f32.partialorder %v1400, 8.507059e+37
  %v1402 = vand.u32 %v1390, 2147483648
  %v1403 = vor.u32 1.1754944e-38, %v1402
  %v1404 = vsel %vm1401, %v1403, %v1399
  %v1405 = vmul.f32 1.0, %v1404
  %v1406 = vxor.u32 %v1384, 2147483648
  %v1407 = vmul.f32 %v1406, 1.442695
  %v1408 = vpow.pop %v1407
  %v1409 = vadd.f32 %v1408, 1.0
  %v1410 = vrcp.pop %v1409
  %v1411 = vmul.f32 %v1409, %v1410
  %v1412 = vsub.f32 1.0, %v1411
  %v1413 = vmul.f32 %v1410, %v1412
  %v1414 = vadd.f32 %v1410, %v1413
  %vm1415 = vweird.f32 %v1409
  %vm1416 = vweird.f32 %v1410
  %vm1417 = vmor %vm1415, %vm1416
  %v1418 = vsel %vm1417, %v1410, %v1414
  %v1419 = vand.u32 2147483647, %v1409
  %vm1420 = vcmp.eq.f32.partialorder %v1419, 8.507059e+37
  %v1421 = vand.u32 %v1409, 2147483648
  %v1422 = vor.u32 1.1754944e-38, %v1421
  %v1423 = vsel %vm1420, %v1422, %v1418
  %v1424 = vmul.f32 1.0, %v1423
  %v1425 = vtanh.pop %v1385
  %v1426 = vxor.u32 %v1386, 2147483648
  %v1427 = vmul.f32 %v1426, 1.442695
  %v1428 = vpow.pop %v1427
  %v1429 = vadd.f32 %v1428, 1.0
  %v1430 = vrcp.pop %v1429
  %v1431 = vmul.f32 %v1429, %v1430
  %v1432 = vsub.f32 1.0, %v1431
  %v1433 = vmul.f32 %v1430, %v1432
  %v1434 = vadd.f32 %v1430, %v1433
  %vm1435 = vweird.f32 %v1429
  %vm1436 = vweird.f32 %v1430
  %vm1437 = vmor %vm1435, %vm1436
  %v1438 = vsel %vm1437, %v1430, %v1434
  %v1439 = vand.u32 2147483647, %v1429
  %vm1440 = vcmp.eq.f32.partialorder %v1439, 8.507059e+37
  %v1441 = vand.u32 %v1429, 2147483648
  %v1442 = vor.u32 1.1754944e-38, %v1441
  %v1443 = vsel %vm1440, %v1442, %v1438
  %v1444 = vmul.f32 1.0, %v1443
  %v1445 = vmul.f32 %v1424, %v1293
  %v1446 = vmul.f32 %v1405, %v1425
  %v1447 = vadd.f32 %v1445, %v1446
  %v1448 = vtanh.pop %v1447
  %v1449 = vmul.f32 %v1444, %v1448
  %s1450 = scalar_lea.vmem [#allocation2], 48
  %1451 = vst [vmem:[%s1450] sm:$0xff] %v1449
  %s1452 = scalar_lea.vmem [#allocation3], 224
  %v1453 = vld [vmem:[%s1452] sm:$0xff]
  %v1454 = vld [vmem:[%s1452 + $0x8] sm:$0xff]
  %v1455 = vld [vmem:[%s1452 + $0x10] sm:$0xff]
  %v1456 = vld [vmem:[%s1452 + $0x18] sm:$0xff]
  %1457 = vmatpush.msra.mxu0 %v92
  %1458 = vmatpush.msra.mxu0 %v88
  %1459 = vmatpush.msra.mxu0 %v84
  %1460 = vmatpush.msra.mxu0 %v80
  %1461 = vmatpush.msra.mxu0 %v76
  %1462 = vmatpush.msra.mxu0 %v72
  %1463 = vmatpush.msra.mxu0 %v68
  %1464 = vmatpush.msra.mxu0 %v64
  %1465 = vmatpush.msra.mxu0 %v60
  %1466 = vmatpush.msra.mxu0 %v56
  %1467 = vmatpush.msra.mxu0 %v52
  %1468 = vmatpush.msra.mxu0 %v48
  %1469 = vmatpush.msra.mxu0 %v44
  %1470 = vmatpush.msra.mxu0 %v40
  %1471 = vmatpush.msra.mxu0 %v36
  %1472 = vmatpush.msra.mxu0 %v32
  %1473 = vmatmul.f32.gmra.mxu0 %v1449
  %v1474 = vpop.f32.mrf.mxu0
  %v1475 = vadd.f32 0.0, %v1474
  %1476 = vdwg.mxu0
  %1477 = vmatpush.msra.mxu0 %v93
  %1478 = vmatpush.msra.mxu0 %v89
  %1479 = vmatpush.msra.mxu0 %v85
  %1480 = vmatpush.msra.mxu0 %v81
  %1481 = vmatpush.msra.mxu0 %v77
  %1482 = vmatpush.msra.mxu0 %v73
  %1483 = vmatpush.msra.mxu0 %v69
  %1484 = vmatpush.msra.mxu0 %v65
  %1485 = vmatpush.msra.mxu0 %v61
  %1486 = vmatpush.msra.mxu0 %v57
  %1487 = vmatpush.msra.mxu0 %v53
  %1488 = vmatpush.msra.mxu0 %v49
  %1489 = vmatpush.msra.mxu0 %v45
  %1490 = vmatpush.msra.mxu0 %v41
  %1491 = vmatpush.msra.mxu0 %v37
  %1492 = vmatpush.msra.mxu0 %v33
  %1493 = vmatmul.f32.gmra.mxu0 %v1449
  %v1494 = vpop.f32.mrf.mxu0
  %v1495 = vadd.f32 0.0, %v1494
  %1496 = vdwg.mxu0
  %1497 = vmatpush.msra.mxu0 %v94
  %1498 = vmatpush.msra.mxu0 %v90
  %1499 = vmatpush.msra.mxu0 %v86
  %1500 = vmatpush.msra.mxu0 %v82
  %1501 = vmatpush.msra.mxu0 %v78
  %1502 = vmatpush.msra.mxu0 %v74
  %1503 = vmatpush.msra.mxu0 %v70
  %1504 = vmatpush.msra.mxu0 %v66
  %1505 = vmatpush.msra.mxu0 %v62
  %1506 = vmatpush.msra.mxu0 %v58
  %1507 = vmatpush.msra.mxu0 %v54
  %1508 = vmatpush.msra.mxu0 %v50
  %1509 = vmatpush.msra.mxu0 %v46
  %1510 = vmatpush.msra.mxu0 %v42
  %1511 = vmatpush.msra.mxu0 %v38
  %1512 = vmatpush.msra.mxu0 %v34
  %1513 = vmatmul.f32.gmra.mxu0 %v1449
  %v1514 = vpop.f32.mrf.mxu0
  %v1515 = vadd.f32 0.0, %v1514
  %1516 = vdwg.mxu0
  %1517 = vmatpush.msra.mxu0 %v95
  %1518 = vmatpush.msra.mxu0 %v91
  %1519 = vmatpush.msra.mxu0 %v87
  %1520 = vmatpush.msra.mxu0 %v83
  %1521 = vmatpush.msra.mxu0 %v79
  %1522 = vmatpush.msra.mxu0 %v75
  %1523 = vmatpush.msra.mxu0 %v71
  %1524 = vmatpush.msra.mxu0 %v67
  %1525 = vmatpush.msra.mxu0 %v63
  %1526 = vmatpush.msra.mxu0 %v59
  %1527 = vmatpush.msra.mxu0 %v55
  %1528 = vmatpush.msra.mxu0 %v51
  %1529 = vmatpush.msra.mxu0 %v47
  %1530 = vmatpush.msra.mxu0 %v43
  %1531 = vmatpush.msra.mxu0 %v39
  %1532 = vmatpush.msra.mxu0 %v35
  %1533 = vmatmul.f32.gmra.mxu0 %v1449
  %v1534 = vpop.f32.mrf.mxu0
  %v1535 = vadd.f32 0.0, %v1534
  %1536 = vdwg.mxu0
  %v1537 = vadd.f32 %v1453, %v1475
  %v1538 = vadd.f32 %v1454, %v1495
  %v1539 = vadd.f32 %v1455, %v1515
  %v1540 = vadd.f32 %v1456, %v1535
  %v1541 = vxor.u32 %v1537, 2147483648
  %v1542 = vmul.f32 %v1541, 1.442695
  %v1543 = vpow.pop %v1542
  %v1544 = vadd.f32 %v1543, 1.0
  %v1545 = vrcp.pop %v1544
  %v1546 = vmul.f32 %v1544, %v1545
  %v1547 = vsub.f32 1.0, %v1546
  %v1548 = vmul.f32 %v1545, %v1547
  %v1549 = vadd.f32 %v1545, %v1548
  %vm1550 = vweird.f32 %v1544
  %vm1551 = vweird.f32 %v1545
  %vm1552 = vmor %vm1550, %vm1551
  %v1553 = vsel %vm1552, %v1545, %v1549
  %v1554 = vand.u32 2147483647, %v1544
  %vm1555 = vcmp.eq.f32.partialorder %v1554, 8.507059e+37
  %v1556 = vand.u32 %v1544, 2147483648
  %v1557 = vor.u32 1.1754944e-38, %v1556
  %v1558 = vsel %vm1555, %v1557, %v1553
  %v1559 = vmul.f32 1.0, %v1558
  %v1560 = vxor.u32 %v1538, 2147483648
  %v1561 = vmul.f32 %v1560, 1.442695
  %v1562 = vpow.pop %v1561
  %v1563 = vadd.f32 %v1562, 1.0
  %v1564 = vrcp.pop %v1563
  %v1565 = vmul.f32 %v1563, %v1564
  %v1566 = vsub.f32 1.0, %v1565
  %v1567 = vmul.f32 %v1564, %v1566
  %v1568 = vadd.f32 %v1564, %v1567
  %vm1569 = vweird.f32 %v1563
  %vm1570 = vweird.f32 %v1564
  %vm1571 = vmor %vm1569, %vm1570
  %v1572 = vsel %vm1571, %v1564, %v1568
  %v1573 = vand.u32 2147483647, %v1563
  %vm1574 = vcmp.eq.f32.partialorder %v1573, 8.507059e+37
  %v1575 = vand.u32 %v1563, 2147483648
  %v1576 = vor.u32 1.1754944e-38, %v1575
  %v1577 = vsel %vm1574, %v1576, %v1572
  %v1578 = vmul.f32 1.0, %v1577
  %v1579 = vtanh.pop %v1539
  %v1580 = vxor.u32 %v1540, 2147483648
  %v1581 = vmul.f32 %v1580, 1.442695
  %v1582 = vpow.pop %v1581
  %v1583 = vadd.f32 %v1582, 1.0
  %v1584 = vrcp.pop %v1583
  %v1585 = vmul.f32 %v1583, %v1584
  %v1586 = vsub.f32 1.0, %v1585
  %v1587 = vmul.f32 %v1584, %v1586
  %v1588 = vadd.f32 %v1584, %v1587
  %vm1589 = vweird.f32 %v1583
  %vm1590 = vweird.f32 %v1584
  %vm1591 = vmor %vm1589, %vm1590
  %v1592 = vsel %vm1591, %v1584, %v1588
  %v1593 = vand.u32 2147483647, %v1583
  %vm1594 = vcmp.eq.f32.partialorder %v1593, 8.507059e+37
  %v1595 = vand.u32 %v1583, 2147483648
  %v1596 = vor.u32 1.1754944e-38, %v1595
  %v1597 = vsel %vm1594, %v1596, %v1592
  %v1598 = vmul.f32 1.0, %v1597
  %v1599 = vmul.f32 %v1578, %v1447
  %v1600 = vmul.f32 %v1559, %v1579
  %v1601 = vadd.f32 %v1599, %v1600
  %v1602 = vtanh.pop %v1601
  %v1603 = vmul.f32 %v1598, %v1602
  %s1604 = scalar_lea.vmem [#allocation2], 56
  %1605 = vst [vmem:[%s1604] sm:$0xff] %v1603
  %1606 = vst [vmem:[%s9] sm:$0xff] %v1603
  %1607 = vst [vmem:[%s10] sm:$0xff] %v1601
  %s1608 = scalar_lea.vmem %s2, 512
  %v1609 = vld [vmem:[%s1608] sm:$0xff]
  %v1610 = vld [vmem:[%s1608 + $0x8] sm:$0xff]
  %v1611 = vld [vmem:[%s1608 + $0x10] sm:$0xff]
  %v1612 = vld [vmem:[%s1608 + $0x18] sm:$0xff]
  %v1613 = vld [vmem:[%s1608 + $0x20] sm:$0xff]
  %v1614 = vld [vmem:[%s1608 + $0x28] sm:$0xff]
  %v1615 = vld [vmem:[%s1608 + $0x30] sm:$0xff]
  %v1616 = vld [vmem:[%s1608 + $0x38] sm:$0xff]
  %v1617 = vld [vmem:[%s1608 + $0x40] sm:$0xff]
  %v1618 = vld [vmem:[%s1608 + $0x48] sm:$0xff]
  %v1619 = vld [vmem:[%s1608 + $0x50] sm:$0xff]
  %v1620 = vld [vmem:[%s1608 + $0x58] sm:$0xff]
  %v1621 = vld [vmem:[%s1608 + $0x60] sm:$0xff]
  %v1622 = vld [vmem:[%s1608 + $0x68] sm:$0xff]
  %v1623 = vld [vmem:[%s1608 + $0x70] sm:$0xff]
  %v1624 = vld [vmem:[%s1608 + $0x78] sm:$0xff]
  %v1625 = vld [vmem:[%s1608 + $0x80] sm:$0xff]
  %v1626 = vld [vmem:[%s1608 + $0x88] sm:$0xff]
  %v1627 = vld [vmem:[%s1608 + $0x90] sm:$0xff]
  %v1628 = vld [vmem:[%s1608 + $0x98] sm:$0xff]
  %v1629 = vld [vmem:[%s1608 + $0xa0] sm:$0xff]
  %v1630 = vld [vmem:[%s1608 + $0xa8] sm:$0xff]
  %v1631 = vld [vmem:[%s1608 + $0xb0] sm:$0xff]
  %v1632 = vld [vmem:[%s1608 + $0xb8] sm:$0xff]
  %v1633 = vld [vmem:[%s1608 + $0xc0] sm:$0xff]
  %v1634 = vld [vmem:[%s1608 + $0xc8] sm:$0xff]
  %v1635 = vld [vmem:[%s1608 + $0xd0] sm:$0xff]
  %v1636 = vld [vmem:[%s1608 + $0xd8] sm:$0xff]
  %v1637 = vld [vmem:[%s1608 + $0xe0] sm:$0xff]
  %v1638 = vld [vmem:[%s1608 + $0xe8] sm:$0xff]
  %v1639 = vld [vmem:[%s1608 + $0xf0] sm:$0xff]
  %v1640 = vld [vmem:[%s1608 + $0xf8] sm:$0xff]
  %v1641 = vld [vmem:[%s1608 + $0x100] sm:$0xff]
  %v1642 = vld [vmem:[%s1608 + $0x108] sm:$0xff]
  %v1643 = vld [vmem:[%s1608 + $0x110] sm:$0xff]
  %v1644 = vld [vmem:[%s1608 + $0x118] sm:$0xff]
  %v1645 = vld [vmem:[%s1608 + $0x120] sm:$0xff]
  %v1646 = vld [vmem:[%s1608 + $0x128] sm:$0xff]
  %v1647 = vld [vmem:[%s1608 + $0x130] sm:$0xff]
  %v1648 = vld [vmem:[%s1608 + $0x138] sm:$0xff]
  %v1649 = vld [vmem:[%s1608 + $0x140] sm:$0xff]
  %v1650 = vld [vmem:[%s1608 + $0x148] sm:$0xff]
  %v1651 = vld [vmem:[%s1608 + $0x150] sm:$0xff]
  %v1652 = vld [vmem:[%s1608 + $0x158] sm:$0xff]
  %v1653 = vld [vmem:[%s1608 + $0x160] sm:$0xff]
  %v1654 = vld [vmem:[%s1608 + $0x168] sm:$0xff]
  %v1655 = vld [vmem:[%s1608 + $0x170] sm:$0xff]
  %v1656 = vld [vmem:[%s1608 + $0x178] sm:$0xff]
  %v1657 = vld [vmem:[%s1608 + $0x180] sm:$0xff]
  %v1658 = vld [vmem:[%s1608 + $0x188] sm:$0xff]
  %v1659 = vld [vmem:[%s1608 + $0x190] sm:$0xff]
  %v1660 = vld [vmem:[%s1608 + $0x198] sm:$0xff]
  %v1661 = vld [vmem:[%s1608 + $0x1a0] sm:$0xff]
  %v1662 = vld [vmem:[%s1608 + $0x1a8] sm:$0xff]
  %v1663 = vld [vmem:[%s1608 + $0x1b0] sm:$0xff]
  %v1664 = vld [vmem:[%s1608 + $0x1b8] sm:$0xff]
  %v1665 = vld [vmem:[%s1608 + $0x1c0] sm:$0xff]
  %v1666 = vld [vmem:[%s1608 + $0x1c8] sm:$0xff]
  %v1667 = vld [vmem:[%s1608 + $0x1d0] sm:$0xff]
  %v1668 = vld [vmem:[%s1608 + $0x1d8] sm:$0xff]
  %v1669 = vld [vmem:[%s1608 + $0x1e0] sm:$0xff]
  %v1670 = vld [vmem:[%s1608 + $0x1e8] sm:$0xff]
  %v1671 = vld [vmem:[%s1608 + $0x1f0] sm:$0xff]
  %v1672 = vld [vmem:[%s1608 + $0x1f8] sm:$0xff]
  %s1673 = scalar_lea.vmem %s3, 4
  %v1674 = vld [vmem:[%s1673] sm:$0xf]
  %s1675 = scalar_lea.vmem %s1, 512
  %v1676 = vld [vmem:[%s1675] sm:$0xff]
  %v1677 = vld [vmem:[%s1675 + $0x8] sm:$0xff]
  %v1678 = vld [vmem:[%s1675 + $0x10] sm:$0xff]
  %v1679 = vld [vmem:[%s1675 + $0x18] sm:$0xff]
  %v1680 = vld [vmem:[%s1675 + $0x20] sm:$0xff]
  %v1681 = vld [vmem:[%s1675 + $0x28] sm:$0xff]
  %v1682 = vld [vmem:[%s1675 + $0x30] sm:$0xff]
  %v1683 = vld [vmem:[%s1675 + $0x38] sm:$0xff]
  %v1684 = vld [vmem:[%s1675 + $0x40] sm:$0xff]
  %v1685 = vld [vmem:[%s1675 + $0x48] sm:$0xff]
  %v1686 = vld [vmem:[%s1675 + $0x50] sm:$0xff]
  %v1687 = vld [vmem:[%s1675 + $0x58] sm:$0xff]
  %v1688 = vld [vmem:[%s1675 + $0x60] sm:$0xff]
  %v1689 = vld [vmem:[%s1675 + $0x68] sm:$0xff]
  %v1690 = vld [vmem:[%s1675 + $0x70] sm:$0xff]
  %v1691 = vld [vmem:[%s1675 + $0x78] sm:$0xff]
  %v1692 = vld [vmem:[%s1675 + $0x80] sm:$0xff]
  %v1693 = vld [vmem:[%s1675 + $0x88] sm:$0xff]
  %v1694 = vld [vmem:[%s1675 + $0x90] sm:$0xff]
  %v1695 = vld [vmem:[%s1675 + $0x98] sm:$0xff]
  %v1696 = vld [vmem:[%s1675 + $0xa0] sm:$0xff]
  %v1697 = vld [vmem:[%s1675 + $0xa8] sm:$0xff]
  %v1698 = vld [vmem:[%s1675 + $0xb0] sm:$0xff]
  %v1699 = vld [vmem:[%s1675 + $0xb8] sm:$0xff]
  %v1700 = vld [vmem:[%s1675 + $0xc0] sm:$0xff]
  %v1701 = vld [vmem:[%s1675 + $0xc8] sm:$0xff]
  %v1702 = vld [vmem:[%s1675 + $0xd0] sm:$0xff]
  %v1703 = vld [vmem:[%s1675 + $0xd8] sm:$0xff]
  %v1704 = vld [vmem:[%s1675 + $0xe0] sm:$0xff]
  %v1705 = vld [vmem:[%s1675 + $0xe8] sm:$0xff]
  %v1706 = vld [vmem:[%s1675 + $0xf0] sm:$0xff]
  %v1707 = vld [vmem:[%s1675 + $0xf8] sm:$0xff]
  %v1708 = vld [vmem:[%s1675 + $0x100] sm:$0xff]
  %v1709 = vld [vmem:[%s1675 + $0x108] sm:$0xff]
  %v1710 = vld [vmem:[%s1675 + $0x110] sm:$0xff]
  %v1711 = vld [vmem:[%s1675 + $0x118] sm:$0xff]
  %v1712 = vld [vmem:[%s1675 + $0x120] sm:$0xff]
  %v1713 = vld [vmem:[%s1675 + $0x128] sm:$0xff]
  %v1714 = vld [vmem:[%s1675 + $0x130] sm:$0xff]
  %v1715 = vld [vmem:[%s1675 + $0x138] sm:$0xff]
  %v1716 = vld [vmem:[%s1675 + $0x140] sm:$0xff]
  %v1717 = vld [vmem:[%s1675 + $0x148] sm:$0xff]
  %v1718 = vld [vmem:[%s1675 + $0x150] sm:$0xff]
  %v1719 = vld [vmem:[%s1675 + $0x158] sm:$0xff]
  %v1720 = vld [vmem:[%s1675 + $0x160] sm:$0xff]
  %v1721 = vld [vmem:[%s1675 + $0x168] sm:$0xff]
  %v1722 = vld [vmem:[%s1675 + $0x170] sm:$0xff]
  %v1723 = vld [vmem:[%s1675 + $0x178] sm:$0xff]
  %v1724 = vld [vmem:[%s1675 + $0x180] sm:$0xff]
  %v1725 = vld [vmem:[%s1675 + $0x188] sm:$0xff]
  %v1726 = vld [vmem:[%s1675 + $0x190] sm:$0xff]
  %v1727 = vld [vmem:[%s1675 + $0x198] sm:$0xff]
  %v1728 = vld [vmem:[%s1675 + $0x1a0] sm:$0xff]
  %v1729 = vld [vmem:[%s1675 + $0x1a8] sm:$0xff]
  %v1730 = vld [vmem:[%s1675 + $0x1b0] sm:$0xff]
  %v1731 = vld [vmem:[%s1675 + $0x1b8] sm:$0xff]
  %v1732 = vld [vmem:[%s1675 + $0x1c0] sm:$0xff]
  %v1733 = vld [vmem:[%s1675 + $0x1c8] sm:$0xff]
  %v1734 = vld [vmem:[%s1675 + $0x1d0] sm:$0xff]
  %v1735 = vld [vmem:[%s1675 + $0x1d8] sm:$0xff]
  %v1736 = vld [vmem:[%s1675 + $0x1e0] sm:$0xff]
  %v1737 = vld [vmem:[%s1675 + $0x1e8] sm:$0xff]
  %v1738 = vld [vmem:[%s1675 + $0x1f0] sm:$0xff]
  %v1739 = vld [vmem:[%s1675 + $0x1f8] sm:$0xff]
  %s1740 = scalar_lea.vmem %s4, 8
  %v1741 = vld [vmem:[%s1740] sm:$0xff]
  %s1742 = scalar_lea.vmem %s5, 8
  %v1743 = vld [vmem:[%s1742] sm:$0xff]
  %v1744 = vld [vmem:[#allocation2] sm:$0xff]
  %v1745 = vld [vmem:[#allocation2 + $0x8] sm:$0xff]
  %v1746 = vld [vmem:[#allocation2 + $0x10] sm:$0xff]
  %v1747 = vld [vmem:[#allocation2 + $0x18] sm:$0xff]
  %v1748 = vld [vmem:[#allocation2 + $0x20] sm:$0xff]
  %v1749 = vld [vmem:[#allocation2 + $0x28] sm:$0xff]
  %v1750 = vld [vmem:[#allocation2 + $0x30] sm:$0xff]
  %v1751 = vld [vmem:[#allocation2 + $0x38] sm:$0xff]
  %v1753 = vperm.slane %v1674, 0
  %v1754 = vperm.slane %v1674, 1
  %v1755 = vperm.slane %v1674, 2
  %v1756 = vperm.slane %v1674, 3
  %1761 = vmatpush.msra.mxu0 %v1736
  %1762 = vmatpush.msra.mxu0 %v1732
  %1763 = vmatpush.msra.mxu0 %v1728
  %1764 = vmatpush.msra.mxu0 %v1724
  %1765 = vmatpush.msra.mxu0 %v1720
  %1766 = vmatpush.msra.mxu0 %v1716
  %1767 = vmatpush.msra.mxu0 %v1712
  %1768 = vmatpush.msra.mxu0 %v1708
  %1769 = vmatpush.msra.mxu0 %v1704
  %1770 = vmatpush.msra.mxu0 %v1700
  %1771 = vmatpush.msra.mxu0 %v1696
  %1772 = vmatpush.msra.mxu0 %v1692
  %1773 = vmatpush.msra.mxu0 %v1688
  %1774 = vmatpush.msra.mxu0 %v1684
  %1775 = vmatpush.msra.mxu0 %v1680
  %1776 = vmatpush.msra.mxu0 %v1676
  %1777 = vmatmul.f32.gmra.mxu0 %v1744
  %v1778 = vpop.f32.mrf.mxu0
  %v1779 = vadd.f32 %v1753, %v1778
  %1780 = vmatmul.f32.gmra.mxu0 %v1745
  %v1781 = vpop.f32.mrf.mxu0
  %v1782 = vadd.f32 %v1753, %v1781
  %1783 = vmatmul.f32.gmra.mxu0 %v1746
  %v1784 = vpop.f32.mrf.mxu0
  %v1785 = vadd.f32 %v1753, %v1784
  %1786 = vmatmul.f32.gmra.mxu0 %v1747
  %v1787 = vpop.f32.mrf.mxu0
  %v1788 = vadd.f32 %v1753, %v1787
  %1789 = vmatmul.f32.gmra.mxu0 %v1748
  %v1790 = vpop.f32.mrf.mxu0
  %v1791 = vadd.f32 %v1753, %v1790
  %1792 = vmatmul.f32.gmra.mxu0 %v1749
  %v1793 = vpop.f32.mrf.mxu0
  %v1794 = vadd.f32 %v1753, %v1793
  %1795 = vmatmul.f32.gmra.mxu0 %v1750
  %v1796 = vpop.f32.mrf.mxu0
  %v1797 = vadd.f32 %v1753, %v1796
  %1798 = vmatmul.f32.gmra.mxu0 %v1751
  %v1799 = vpop.f32.mrf.mxu0
  %v1800 = vadd.f32 %v1753, %v1799
  %1801 = vdwg.mxu0
  %1802 = vmatpush.msra.mxu0 %v1737
  %1803 = vmatpush.msra.mxu0 %v1733
  %1804 = vmatpush.msra.mxu0 %v1729
  %1805 = vmatpush.msra.mxu0 %v1725
  %1806 = vmatpush.msra.mxu0 %v1721
  %1807 = vmatpush.msra.mxu0 %v1717
  %1808 = vmatpush.msra.mxu0 %v1713
  %1809 = vmatpush.msra.mxu0 %v1709
  %1810 = vmatpush.msra.mxu0 %v1705
  %1811 = vmatpush.msra.mxu0 %v1701
  %1812 = vmatpush.msra.mxu0 %v1697
  %1813 = vmatpush.msra.mxu0 %v1693
  %1814 = vmatpush.msra.mxu0 %v1689
  %1815 = vmatpush.msra.mxu0 %v1685
  %1816 = vmatpush.msra.mxu0 %v1681
  %1817 = vmatpush.msra.mxu0 %v1677
  %1818 = vmatmul.f32.gmra.mxu0 %v1744
  %v1819 = vpop.f32.mrf.mxu0
  %v1820 = vadd.f32 %v1754, %v1819
  %1821 = vmatmul.f32.gmra.mxu0 %v1745
  %v1822 = vpop.f32.mrf.mxu0
  %v1823 = vadd.f32 %v1754, %v1822
  %1824 = vmatmul.f32.gmra.mxu0 %v1746
  %v1825 = vpop.f32.mrf.mxu0
  %v1826 = vadd.f32 %v1754, %v1825
  %1827 = vmatmul.f32.gmra.mxu0 %v1747
  %v1828 = vpop.f32.mrf.mxu0
  %v1829 = vadd.f32 %v1754, %v1828
  %1830 = vmatmul.f32.gmra.mxu0 %v1748
  %v1831 = vpop.f32.mrf.mxu0
  %v1832 = vadd.f32 %v1754, %v1831
  %1833 = vmatmul.f32.gmra.mxu0 %v1749
  %v1834 = vpop.f32.mrf.mxu0
  %v1835 = vadd.f32 %v1754, %v1834
  %1836 = vmatmul.f32.gmra.mxu0 %v1750
  %v1837 = vpop.f32.mrf.mxu0
  %v1838 = vadd.f32 %v1754, %v1837
  %1839 = vmatmul.f32.gmra.mxu0 %v1751
  %v1840 = vpop.f32.mrf.mxu0
  %v1841 = vadd.f32 %v1754, %v1840
  %1842 = vdwg.mxu0
  %1843 = vmatpush.msra.mxu0 %v1738
  %1844 = vmatpush.msra.mxu0 %v1734
  %1845 = vmatpush.msra.mxu0 %v1730
  %1846 = vmatpush.msra.mxu0 %v1726
  %1847 = vmatpush.msra.mxu0 %v1722
  %1848 = vmatpush.msra.mxu0 %v1718
  %1849 = vmatpush.msra.mxu0 %v1714
  %1850 = vmatpush.msra.mxu0 %v1710
  %1851 = vmatpush.msra.mxu0 %v1706
  %1852 = vmatpush.msra.mxu0 %v1702
  %1853 = vmatpush.msra.mxu0 %v1698
  %1854 = vmatpush.msra.mxu0 %v1694
  %1855 = vmatpush.msra.mxu0 %v1690
  %1856 = vmatpush.msra.mxu0 %v1686
  %1857 = vmatpush.msra.mxu0 %v1682
  %1858 = vmatpush.msra.mxu0 %v1678
  %1859 = vmatmul.f32.gmra.mxu0 %v1744
  %v1860 = vpop.f32.mrf.mxu0
  %v1861 = vadd.f32 %v1755, %v1860
  %1862 = vmatmul.f32.gmra.mxu0 %v1745
  %v1863 = vpop.f32.mrf.mxu0
  %v1864 = vadd.f32 %v1755, %v1863
  %1865 = vmatmul.f32.gmra.mxu0 %v1746
  %v1866 = vpop.f32.mrf.mxu0
  %v1867 = vadd.f32 %v1755, %v1866
  %1868 = vmatmul.f32.gmra.mxu0 %v1747
  %v1869 = vpop.f32.mrf.mxu0
  %v1870 = vadd.f32 %v1755, %v1869
  %1871 = vmatmul.f32.gmra.mxu0 %v1748
  %v1872 = vpop.f32.mrf.mxu0
  %v1873 = vadd.f32 %v1755, %v1872
  %1874 = vmatmul.f32.gmra.mxu0 %v1749
  %v1875 = vpop.f32.mrf.mxu0
  %v1876 = vadd.f32 %v1755, %v1875
  %1877 = vmatmul.f32.gmra.mxu0 %v1750
  %v1878 = vpop.f32.mrf.mxu0
  %v1879 = vadd.f32 %v1755, %v1878
  %1880 = vmatmul.f32.gmra.mxu0 %v1751
  %v1881 = vpop.f32.mrf.mxu0
  %v1882 = vadd.f32 %v1755, %v1881
  %1883 = vdwg.mxu0
  %1884 = vmatpush.msra.mxu0 %v1739
  %1885 = vmatpush.msra.mxu0 %v1735
  %1886 = vmatpush.msra.mxu0 %v1731
  %1887 = vmatpush.msra.mxu0 %v1727
  %1888 = vmatpush.msra.mxu0 %v1723
  %1889 = vmatpush.msra.mxu0 %v1719
  %1890 = vmatpush.msra.mxu0 %v1715
  %1891 = vmatpush.msra.mxu0 %v1711
  %1892 = vmatpush.msra.mxu0 %v1707
  %1893 = vmatpush.msra.mxu0 %v1703
  %1894 = vmatpush.msra.mxu0 %v1699
  %1895 = vmatpush.msra.mxu0 %v1695
  %1896 = vmatpush.msra.mxu0 %v1691
  %1897 = vmatpush.msra.mxu0 %v1687
  %1898 = vmatpush.msra.mxu0 %v1683
  %1899 = vmatpush.msra.mxu0 %v1679
  %1900 = vmatmul.f32.gmra.mxu0 %v1744
  %v1901 = vpop.f32.mrf.mxu0
  %v1902 = vadd.f32 %v1756, %v1901
  %1903 = vmatmul.f32.gmra.mxu0 %v1745
  %v1904 = vpop.f32.mrf.mxu0
  %v1905 = vadd.f32 %v1756, %v1904
  %1906 = vmatmul.f32.gmra.mxu0 %v1746
  %v1907 = vpop.f32.mrf.mxu0
  %v1908 = vadd.f32 %v1756, %v1907
  %1909 = vmatmul.f32.gmra.mxu0 %v1747
  %v1910 = vpop.f32.mrf.mxu0
  %v1911 = vadd.f32 %v1756, %v1910
  %1912 = vmatmul.f32.gmra.mxu0 %v1748
  %v1913 = vpop.f32.mrf.mxu0
  %v1914 = vadd.f32 %v1756, %v1913
  %1915 = vmatmul.f32.gmra.mxu0 %v1749
  %v1916 = vpop.f32.mrf.mxu0
  %v1917 = vadd.f32 %v1756, %v1916
  %1918 = vmatmul.f32.gmra.mxu0 %v1750
  %v1919 = vpop.f32.mrf.mxu0
  %v1920 = vadd.f32 %v1756, %v1919
  %1921 = vmatmul.f32.gmra.mxu0 %v1751
  %v1922 = vpop.f32.mrf.mxu0
  %v1923 = vadd.f32 %v1756, %v1922
  %1924 = vdwg.mxu0
  %1925 = vst [vmem:[#allocation3] sm:$0xff] %v1779
  %1926 = vst [vmem:[#allocation3 + $0x8] sm:$0xff] %v1820
  %1927 = vst [vmem:[#allocation3 + $0x10] sm:$0xff] %v1861
  %1928 = vst [vmem:[#allocation3 + $0x18] sm:$0xff] %v1902
  %1929 = vst [vmem:[#allocation3 + $0x20] sm:$0xff] %v1782
  %1930 = vst [vmem:[#allocation3 + $0x28] sm:$0xff] %v1823
  %1931 = vst [vmem:[#allocation3 + $0x30] sm:$0xff] %v1864
  %1932 = vst [vmem:[#allocation3 + $0x38] sm:$0xff] %v1905
  %1933 = vst [vmem:[#allocation3 + $0x40] sm:$0xff] %v1785
  %1934 = vst [vmem:[#allocation3 + $0x48] sm:$0xff] %v1826
  %1935 = vst [vmem:[#allocation3 + $0x50] sm:$0xff] %v1867
  %1936 = vst [vmem:[#allocation3 + $0x58] sm:$0xff] %v1908
  %1937 = vst [vmem:[#allocation3 + $0x60] sm:$0xff] %v1788
  %1938 = vst [vmem:[#allocation3 + $0x68] sm:$0xff] %v1829
  %1939 = vst [vmem:[#allocation3 + $0x70] sm:$0xff] %v1870
  %1940 = vst [vmem:[#allocation3 + $0x78] sm:$0xff] %v1911
  %1941 = vst [vmem:[#allocation3 + $0x80] sm:$0xff] %v1791
  %1942 = vst [vmem:[#allocation3 + $0x88] sm:$0xff] %v1832
  %1943 = vst [vmem:[#allocation3 + $0x90] sm:$0xff] %v1873
  %1944 = vst [vmem:[#allocation3 + $0x98] sm:$0xff] %v1914
  %1945 = vst [vmem:[#allocation3 + $0xa0] sm:$0xff] %v1794
  %1946 = vst [vmem:[#allocation3 + $0xa8] sm:$0xff] %v1835
  %1947 = vst [vmem:[#allocation3 + $0xb0] sm:$0xff] %v1876
  %1948 = vst [vmem:[#allocation3 + $0xb8] sm:$0xff] %v1917
  %1949 = vst [vmem:[#allocation3 + $0xc0] sm:$0xff] %v1797
  %1950 = vst [vmem:[#allocation3 + $0xc8] sm:$0xff] %v1838
  %1951 = vst [vmem:[#allocation3 + $0xd0] sm:$0xff] %v1879
  %1952 = vst [vmem:[#allocation3 + $0xd8] sm:$0xff] %v1920
  %1953 = vst [vmem:[#allocation3 + $0xe0] sm:$0xff] %v1800
  %1954 = vst [vmem:[#allocation3 + $0xe8] sm:$0xff] %v1841
  %1955 = vst [vmem:[#allocation3 + $0xf0] sm:$0xff] %v1882
  %1956 = vst [vmem:[#allocation3 + $0xf8] sm:$0xff] %v1923
  %v1957 = vld [vmem:[#allocation3] sm:$0xff]
  %v1958 = vld [vmem:[#allocation3 + $0x8] sm:$0xff]
  %v1959 = vld [vmem:[#allocation3 + $0x10] sm:$0xff]
  %v1960 = vld [vmem:[#allocation3 + $0x18] sm:$0xff]
  %1961 = vmatpush.msra.mxu0 %v1669
  %1962 = vmatpush.msra.mxu0 %v1665
  %1963 = vmatpush.msra.mxu0 %v1661
  %1964 = vmatpush.msra.mxu0 %v1657
  %1965 = vmatpush.msra.mxu0 %v1653
  %1966 = vmatpush.msra.mxu0 %v1649
  %1967 = vmatpush.msra.mxu0 %v1645
  %1968 = vmatpush.msra.mxu0 %v1641
  %1969 = vmatpush.msra.mxu0 %v1637
  %1970 = vmatpush.msra.mxu0 %v1633
  %1971 = vmatpush.msra.mxu0 %v1629
  %1972 = vmatpush.msra.mxu0 %v1625
  %1973 = vmatpush.msra.mxu0 %v1621
  %1974 = vmatpush.msra.mxu0 %v1617
  %1975 = vmatpush.msra.mxu0 %v1613
  %1976 = vmatpush.msra.mxu0 %v1609
  %1977 = vmatmul.f32.gmra.mxu0 %v1741
  %v1978 = vpop.f32.mrf.mxu0
  %v1979 = vadd.f32 0.0, %v1978
  %1980 = vdwg.mxu0
  %1981 = vmatpush.msra.mxu0 %v1670
  %1982 = vmatpush.msra.mxu0 %v1666
  %1983 = vmatpush.msra.mxu0 %v1662
  %1984 = vmatpush.msra.mxu0 %v1658
  %1985 = vmatpush.msra.mxu0 %v1654
  %1986 = vmatpush.msra.mxu0 %v1650
  %1987 = vmatpush.msra.mxu0 %v1646
  %1988 = vmatpush.msra.mxu0 %v1642
  %1989 = vmatpush.msra.mxu0 %v1638
  %1990 = vmatpush.msra.mxu0 %v1634
  %1991 = vmatpush.msra.mxu0 %v1630
  %1992 = vmatpush.msra.mxu0 %v1626
  %1993 = vmatpush.msra.mxu0 %v1622
  %1994 = vmatpush.msra.mxu0 %v1618
  %1995 = vmatpush.msra.mxu0 %v1614
  %1996 = vmatpush.msra.mxu0 %v1610
  %1997 = vmatmul.f32.gmra.mxu0 %v1741
  %v1998 = vpop.f32.mrf.mxu0
  %v1999 = vadd.f32 0.0, %v1998
  %2000 = vdwg.mxu0
  %2001 = vmatpush.msra.mxu0 %v1671
  %2002 = vmatpush.msra.mxu0 %v1667
  %2003 = vmatpush.msra.mxu0 %v1663
  %2004 = vmatpush.msra.mxu0 %v1659
  %2005 = vmatpush.msra.mxu0 %v1655
  %2006 = vmatpush.msra.mxu0 %v1651
  %2007 = vmatpush.msra.mxu0 %v1647
  %2008 = vmatpush.msra.mxu0 %v1643
  %2009 = vmatpush.msra.mxu0 %v1639
  %2010 = vmatpush.msra.mxu0 %v1635
  %2011 = vmatpush.msra.mxu0 %v1631
  %2012 = vmatpush.msra.mxu0 %v1627
  %2013 = vmatpush.msra.mxu0 %v1623
  %2014 = vmatpush.msra.mxu0 %v1619
  %2015 = vmatpush.msra.mxu0 %v1615
  %2016 = vmatpush.msra.mxu0 %v1611
  %2017 = vmatmul.f32.gmra.mxu0 %v1741
  %v2018 = vpop.f32.mrf.mxu0
  %v2019 = vadd.f32 0.0, %v2018
  %2020 = vdwg.mxu0
  %2021 = vmatpush.msra.mxu0 %v1672
  %2022 = vmatpush.msra.mxu0 %v1668
  %2023 = vmatpush.msra.mxu0 %v1664
  %2024 = vmatpush.msra.mxu0 %v1660
  %2025 = vmatpush.msra.mxu0 %v1656
  %2026 = vmatpush.msra.mxu0 %v1652
  %2027 = vmatpush.msra.mxu0 %v1648
  %2028 = vmatpush.msra.mxu0 %v1644
  %2029 = vmatpush.msra.mxu0 %v1640
  %2030 = vmatpush.msra.mxu0 %v1636
  %2031 = vmatpush.msra.mxu0 %v1632
  %2032 = vmatpush.msra.mxu0 %v1628
  %2033 = vmatpush.msra.mxu0 %v1624
  %2034 = vmatpush.msra.mxu0 %v1620
  %2035 = vmatpush.msra.mxu0 %v1616
  %2036 = vmatpush.msra.mxu0 %v1612
  %2037 = vmatmul.f32.gmra.mxu0 %v1741
  %v2038 = vpop.f32.mrf.mxu0
  %v2039 = vadd.f32 0.0, %v2038
  %2040 = vdwg.mxu0
  %v2041 = vadd.f32 %v1957, %v1979
  %v2042 = vadd.f32 %v1958, %v1999
  %v2043 = vadd.f32 %v1959, %v2019
  %v2044 = vadd.f32 %v1960, %v2039
  %v2045 = vxor.u32 %v2041, 2147483648
  %v2046 = vmul.f32 %v2045, 1.442695
  %v2047 = vpow.pop %v2046
  %v2048 = vadd.f32 %v2047, 1.0
  %v2049 = vrcp.pop %v2048
  %v2050 = vmul.f32 %v2048, %v2049
  %v2051 = vsub.f32 1.0, %v2050
  %v2052 = vmul.f32 %v2049, %v2051
  %v2053 = vadd.f32 %v2049, %v2052
  %vm2054 = vweird.f32 %v2048
  %vm2055 = vweird.f32 %v2049
  %vm2056 = vmor %vm2054, %vm2055
  %v2057 = vsel %vm2056, %v2049, %v2053
  %v2058 = vand.u32 2147483647, %v2048
  %vm2059 = vcmp.eq.f32.partialorder %v2058, 8.507059e+37
  %v2060 = vand.u32 %v2048, 2147483648
  %v2061 = vor.u32 1.1754944e-38, %v2060
  %v2062 = vsel %vm2059, %v2061, %v2057
  %v2063 = vmul.f32 1.0, %v2062
  %v2064 = vxor.u32 %v2042, 2147483648
  %v2065 = vmul.f32 %v2064, 1.442695
  %v2066 = vpow.pop %v2065
  %v2067 = vadd.f32 %v2066, 1.0
  %v2068 = vrcp.pop %v2067
  %v2069 = vmul.f32 %v2067, %v2068
  %v2070 = vsub.f32 1.0, %v2069
  %v2071 = vmul.f32 %v2068, %v2070
  %v2072 = vadd.f32 %v2068, %v2071
  %vm2073 = vweird.f32 %v2067
  %vm2074 = vweird.f32 %v2068
  %vm2075 = vmor %vm2073, %vm2074
  %v2076 = vsel %vm2075, %v2068, %v2072
  %v2077 = vand.u32 2147483647, %v2067
  %vm2078 = vcmp.eq.f32.partialorder %v2077, 8.507059e+37
  %v2079 = vand.u32 %v2067, 2147483648
  %v2080 = vor.u32 1.1754944e-38, %v2079
  %v2081 = vsel %vm2078, %v2080, %v2076
  %v2082 = vmul.f32 1.0, %v2081
  %v2083 = vtanh.pop %v2043
  %v2084 = vxor.u32 %v2044, 2147483648
  %v2085 = vmul.f32 %v2084, 1.442695
  %v2086 = vpow.pop %v2085
  %v2087 = vadd.f32 %v2086, 1.0
  %v2088 = vrcp.pop %v2087
  %v2089 = vmul.f32 %v2087, %v2088
  %v2090 = vsub.f32 1.0, %v2089
  %v2091 = vmul.f32 %v2088, %v2090
  %v2092 = vadd.f32 %v2088, %v2091
  %vm2093 = vweird.f32 %v2087
  %vm2094 = vweird.f32 %v2088
  %vm2095 = vmor %vm2093, %vm2094
  %v2096 = vsel %vm2095, %v2088, %v2092
  %v2097 = vand.u32 2147483647, %v2087
  %vm2098 = vcmp.eq.f32.partialorder %v2097, 8.507059e+37
  %v2099 = vand.u32 %v2087, 2147483648
  %v2100 = vor.u32 1.1754944e-38, %v2099
  %v2101 = vsel %vm2098, %v2100, %v2096
  %v2102 = vmul.f32 1.0, %v2101
  %v2103 = vmul.f32 %v2082, %v1743
  %v2104 = vmul.f32 %v2063, %v2083
  %v2105 = vadd.f32 %v2103, %v2104
  %v2106 = vtanh.pop %v2105
  %v2107 = vmul.f32 %v2102, %v2106
  %v2108 = vld [vmem:[%s528] sm:$0xff]
  %v2109 = vld [vmem:[%s528 + $0x8] sm:$0xff]
  %v2110 = vld [vmem:[%s528 + $0x10] sm:$0xff]
  %v2111 = vld [vmem:[%s528 + $0x18] sm:$0xff]
  %2112 = vmatpush.msra.mxu0 %v1669
  %2113 = vmatpush.msra.mxu0 %v1665
  %2114 = vmatpush.msra.mxu0 %v1661
  %2115 = vmatpush.msra.mxu0 %v1657
  %2116 = vmatpush.msra.mxu0 %v1653
  %2117 = vmatpush.msra.mxu0 %v1649
  %2118 = vmatpush.msra.mxu0 %v1645
  %2119 = vmatpush.msra.mxu0 %v1641
  %2120 = vmatpush.msra.mxu0 %v1637
  %2121 = vmatpush.msra.mxu0 %v1633
  %2122 = vmatpush.msra.mxu0 %v1629
  %2123 = vmatpush.msra.mxu0 %v1625
  %2124 = vmatpush.msra.mxu0 %v1621
  %2125 = vmatpush.msra.mxu0 %v1617
  %2126 = vmatpush.msra.mxu0 %v1613
  %2127 = vmatpush.msra.mxu0 %v1609
  %2128 = vmatmul.f32.gmra.mxu0 %v2107
  %v2129 = vpop.f32.mrf.mxu0
  %v2130 = vadd.f32 0.0, %v2129
  %2131 = vdwg.mxu0
  %2132 = vmatpush.msra.mxu0 %v1670
  %2133 = vmatpush.msra.mxu0 %v1666
  %2134 = vmatpush.msra.mxu0 %v1662
  %2135 = vmatpush.msra.mxu0 %v1658
  %2136 = vmatpush.msra.mxu0 %v1654
  %2137 = vmatpush.msra.mxu0 %v1650
  %2138 = vmatpush.msra.mxu0 %v1646
  %2139 = vmatpush.msra.mxu0 %v1642
  %2140 = vmatpush.msra.mxu0 %v1638
  %2141 = vmatpush.msra.mxu0 %v1634
  %2142 = vmatpush.msra.mxu0 %v1630
  %2143 = vmatpush.msra.mxu0 %v1626
  %2144 = vmatpush.msra.mxu0 %v1622
  %2145 = vmatpush.msra.mxu0 %v1618
  %2146 = vmatpush.msra.mxu0 %v1614
  %2147 = vmatpush.msra.mxu0 %v1610
  %2148 = vmatmul.f32.gmra.mxu0 %v2107
  %v2149 = vpop.f32.mrf.mxu0
  %v2150 = vadd.f32 0.0, %v2149
  %2151 = vdwg.mxu0
  %2152 = vmatpush.msra.mxu0 %v1671
  %2153 = vmatpush.msra.mxu0 %v1667
  %2154 = vmatpush.msra.mxu0 %v1663
  %2155 = vmatpush.msra.mxu0 %v1659
  %2156 = vmatpush.msra.mxu0 %v1655
  %2157 = vmatpush.msra.mxu0 %v1651
  %2158 = vmatpush.msra.mxu0 %v1647
  %2159 = vmatpush.msra.mxu0 %v1643
  %2160 = vmatpush.msra.mxu0 %v1639
  %2161 = vmatpush.msra.mxu0 %v1635
  %2162 = vmatpush.msra.mxu0 %v1631
  %2163 = vmatpush.msra.mxu0 %v1627
  %2164 = vmatpush.msra.mxu0 %v1623
  %2165 = vmatpush.msra.mxu0 %v1619
  %2166 = vmatpush.msra.mxu0 %v1615
  %2167 = vmatpush.msra.mxu0 %v1611
  %2168 = vmatmul.f32.gmra.mxu0 %v2107
  %v2169 = vpop.f32.mrf.mxu0
  %v2170 = vadd.f32 0.0, %v2169
  %2171 = vdwg.mxu0
  %2172 = vmatpush.msra.mxu0 %v1672
  %2173 = vmatpush.msra.mxu0 %v1668
  %2174 = vmatpush.msra.mxu0 %v1664
  %2175 = vmatpush.msra.mxu0 %v1660
  %2176 = vmatpush.msra.mxu0 %v1656
  %2177 = vmatpush.msra.mxu0 %v1652
  %2178 = vmatpush.msra.mxu0 %v1648
  %2179 = vmatpush.msra.mxu0 %v1644
  %2180 = vmatpush.msra.mxu0 %v1640
  %2181 = vmatpush.msra.mxu0 %v1636
  %2182 = vmatpush.msra.mxu0 %v1632
  %2183 = vmatpush.msra.mxu0 %v1628
  %2184 = vmatpush.msra.mxu0 %v1624
  %2185 = vmatpush.msra.mxu0 %v1620
  %2186 = vmatpush.msra.mxu0 %v1616
  %2187 = vmatpush.msra.mxu0 %v1612
  %2188 = vmatmul.f32.gmra.mxu0 %v2107
  %v2189 = vpop.f32.mrf.mxu0
  %v2190 = vadd.f32 0.0, %v2189
  %2191 = vdwg.mxu0
  %v2192 = vadd.f32 %v2108, %v2130
  %v2193 = vadd.f32 %v2109, %v2150
  %v2194 = vadd.f32 %v2110, %v2170
  %v2195 = vadd.f32 %v2111, %v2190
  %v2196 = vxor.u32 %v2192, 2147483648
  %v2197 = vmul.f32 %v2196, 1.442695
  %v2198 = vpow.pop %v2197
  %v2199 = vadd.f32 %v2198, 1.0
  %v2200 = vrcp.pop %v2199
  %v2201 = vmul.f32 %v2199, %v2200
  %v2202 = vsub.f32 1.0, %v2201
  %v2203 = vmul.f32 %v2200, %v2202
  %v2204 = vadd.f32 %v2200, %v2203
  %vm2205 = vweird.f32 %v2199
  %vm2206 = vweird.f32 %v2200
  %vm2207 = vmor %vm2205, %vm2206
  %v2208 = vsel %vm2207, %v2200, %v2204
  %v2209 = vand.u32 2147483647, %v2199
  %vm2210 = vcmp.eq.f32.partialorder %v2209, 8.507059e+37
  %v2211 = vand.u32 %v2199, 2147483648
  %v2212 = vor.u32 1.1754944e-38, %v2211
  %v2213 = vsel %vm2210, %v2212, %v2208
  %v2214 = vmul.f32 1.0, %v2213
  %v2215 = vxor.u32 %v2193, 2147483648
  %v2216 = vmul.f32 %v2215, 1.442695
  %v2217 = vpow.pop %v2216
  %v2218 = vadd.f32 %v2217, 1.0
  %v2219 = vrcp.pop %v2218
  %v2220 = vmul.f32 %v2218, %v2219
  %v2221 = vsub.f32 1.0, %v2220
  %v2222 = vmul.f32 %v2219, %v2221
  %v2223 = vadd.f32 %v2219, %v2222
  %vm2224 = vweird.f32 %v2218
  %vm2225 = vweird.f32 %v2219
  %vm2226 = vmor %vm2224, %vm2225
  %v2227 = vsel %vm2226, %v2219, %v2223
  %v2228 = vand.u32 2147483647, %v2218
  %vm2229 = vcmp.eq.f32.partialorder %v2228, 8.507059e+37
  %v2230 = vand.u32 %v2218, 2147483648
  %v2231 = vor.u32 1.1754944e-38, %v2230
  %v2232 = vsel %vm2229, %v2231, %v2227
  %v2233 = vmul.f32 1.0, %v2232
  %v2234 = vtanh.pop %v2194
  %v2235 = vxor.u32 %v2195, 2147483648
  %v2236 = vmul.f32 %v2235, 1.442695
  %v2237 = vpow.pop %v2236
  %v2238 = vadd.f32 %v2237, 1.0
  %v2239 = vrcp.pop %v2238
  %v2240 = vmul.f32 %v2238, %v2239
  %v2241 = vsub.f32 1.0, %v2240
  %v2242 = vmul.f32 %v2239, %v2241
  %v2243 = vadd.f32 %v2239, %v2242
  %vm2244 = vweird.f32 %v2238
  %vm2245 = vweird.f32 %v2239
  %vm2246 = vmor %vm2244, %vm2245
  %v2247 = vsel %vm2246, %v2239, %v2243
  %v2248 = vand.u32 2147483647, %v2238
  %vm2249 = vcmp.eq.f32.partialorder %v2248, 8.507059e+37
  %v2250 = vand.u32 %v2238, 2147483648
  %v2251 = vor.u32 1.1754944e-38, %v2250
  %v2252 = vsel %vm2249, %v2251, %v2247
  %v2253 = vmul.f32 1.0, %v2252
  %v2254 = vmul.f32 %v2233, %v2105
  %v2255 = vmul.f32 %v2214, %v2234
  %v2256 = vadd.f32 %v2254, %v2255
  %v2257 = vtanh.pop %v2256
  %v2258 = vmul.f32 %v2253, %v2257
  %v2259 = vld [vmem:[%s682] sm:$0xff]
  %v2260 = vld [vmem:[%s682 + $0x8] sm:$0xff]
  %v2261 = vld [vmem:[%s682 + $0x10] sm:$0xff]
  %v2262 = vld [vmem:[%s682 + $0x18] sm:$0xff]
  %2263 = vmatpush.msra.mxu0 %v1669
  %2264 = vmatpush.msra.mxu0 %v1665
  %2265 = vmatpush.msra.mxu0 %v1661
  %2266 = vmatpush.msra.mxu0 %v1657
  %2267 = vmatpush.msra.mxu0 %v1653
  %2268 = vmatpush.msra.mxu0 %v1649
  %2269 = vmatpush.msra.mxu0 %v1645
  %2270 = vmatpush.msra.mxu0 %v1641
  %2271 = vmatpush.msra.mxu0 %v1637
  %2272 = vmatpush.msra.mxu0 %v1633
  %2273 = vmatpush.msra.mxu0 %v1629
  %2274 = vmatpush.msra.mxu0 %v1625
  %2275 = vmatpush.msra.mxu0 %v1621
  %2276 = vmatpush.msra.mxu0 %v1617
  %2277 = vmatpush.msra.mxu0 %v1613
  %2278 = vmatpush.msra.mxu0 %v1609
  %2279 = vmatmul.f32.gmra.mxu0 %v2258
  %v2280 = vpop.f32.mrf.mxu0
  %v2281 = vadd.f32 0.0, %v2280
  %2282 = vdwg.mxu0
  %2283 = vmatpush.msra.mxu0 %v1670
  %2284 = vmatpush.msra.mxu0 %v1666
  %2285 = vmatpush.msra.mxu0 %v1662
  %2286 = vmatpush.msra.mxu0 %v1658
  %2287 = vmatpush.msra.mxu0 %v1654
  %2288 = vmatpush.msra.mxu0 %v1650
  %2289 = vmatpush.msra.mxu0 %v1646
  %2290 = vmatpush.msra.mxu0 %v1642
  %2291 = vmatpush.msra.mxu0 %v1638
  %2292 = vmatpush.msra.mxu0 %v1634
  %2293 = vmatpush.msra.mxu0 %v1630
  %2294 = vmatpush.msra.mxu0 %v1626
  %2295 = vmatpush.msra.mxu0 %v1622
  %2296 = vmatpush.msra.mxu0 %v1618
  %2297 = vmatpush.msra.mxu0 %v1614
  %2298 = vmatpush.msra.mxu0 %v1610
  %2299 = vmatmul.f32.gmra.mxu0 %v2258
  %v2300 = vpop.f32.mrf.mxu0
  %v2301 = vadd.f32 0.0, %v2300
  %2302 = vdwg.mxu0
  %2303 = vmatpush.msra.mxu0 %v1671
  %2304 = vmatpush.msra.mxu0 %v1667
  %2305 = vmatpush.msra.mxu0 %v1663
  %2306 = vmatpush.msra.mxu0 %v1659
  %2307 = vmatpush.msra.mxu0 %v1655
  %2308 = vmatpush.msra.mxu0 %v1651
  %2309 = vmatpush.msra.mxu0 %v1647
  %2310 = vmatpush.msra.mxu0 %v1643
  %2311 = vmatpush.msra.mxu0 %v1639
  %2312 = vmatpush.msra.mxu0 %v1635
  %2313 = vmatpush.msra.mxu0 %v1631
  %2314 = vmatpush.msra.mxu0 %v1627
  %2315 = vmatpush.msra.mxu0 %v1623
  %2316 = vmatpush.msra.mxu0 %v1619
  %2317 = vmatpush.msra.mxu0 %v1615
  %2318 = vmatpush.msra.mxu0 %v1611
  %2319 = vmatmul.f32.gmra.mxu0 %v2258
  %v2320 = vpop.f32.mrf.mxu0
  %v2321 = vadd.f32 0.0, %v2320
  %2322 = vdwg.mxu0
  %2323 = vmatpush.msra.mxu0 %v1672
  %2324 = vmatpush.msra.mxu0 %v1668
  %2325 = vmatpush.msra.mxu0 %v1664
  %2326 = vmatpush.msra.mxu0 %v1660
  %2327 = vmatpush.msra.mxu0 %v1656
  %2328 = vmatpush.msra.mxu0 %v1652
  %2329 = vmatpush.msra.mxu0 %v1648
  %2330 = vmatpush.msra.mxu0 %v1644
  %2331 = vmatpush.msra.mxu0 %v1640
  %2332 = vmatpush.msra.mxu0 %v1636
  %2333 = vmatpush.msra.mxu0 %v1632
  %2334 = vmatpush.msra.mxu0 %v1628
  %2335 = vmatpush.msra.mxu0 %v1624
  %2336 = vmatpush.msra.mxu0 %v1620
  %2337 = vmatpush.msra.mxu0 %v1616
  %2338 = vmatpush.msra.mxu0 %v1612
  %2339 = vmatmul.f32.gmra.mxu0 %v2258
  %v2340 = vpop.f32.mrf.mxu0
  %v2341 = vadd.f32 0.0, %v2340
  %2342 = vdwg.mxu0
  %v2343 = vadd.f32 %v2259, %v2281
  %v2344 = vadd.f32 %v2260, %v2301
  %v2345 = vadd.f32 %v2261, %v2321
  %v2346 = vadd.f32 %v2262, %v2341
  %v2347 = vxor.u32 %v2343, 2147483648
  %v2348 = vmul.f32 %v2347, 1.442695
  %v2349 = vpow.pop %v2348
  %v2350 = vadd.f32 %v2349, 1.0
  %v2351 = vrcp.pop %v2350
  %v2352 = vmul.f32 %v2350, %v2351
  %v2353 = vsub.f32 1.0, %v2352
  %v2354 = vmul.f32 %v2351, %v2353
  %v2355 = vadd.f32 %v2351, %v2354
  %vm2356 = vweird.f32 %v2350
  %vm2357 = vweird.f32 %v2351
  %vm2358 = vmor %vm2356, %vm2357
  %v2359 = vsel %vm2358, %v2351, %v2355
  %v2360 = vand.u32 2147483647, %v2350
  %vm2361 = vcmp.eq.f32.partialorder %v2360, 8.507059e+37
  %v2362 = vand.u32 %v2350, 2147483648
  %v2363 = vor.u32 1.1754944e-38, %v2362
  %v2364 = vsel %vm2361, %v2363, %v2359
  %v2365 = vmul.f32 1.0, %v2364
  %v2366 = vxor.u32 %v2344, 2147483648
  %v2367 = vmul.f32 %v2366, 1.442695
  %v2368 = vpow.pop %v2367
  %v2369 = vadd.f32 %v2368, 1.0
  %v2370 = vrcp.pop %v2369
  %v2371 = vmul.f32 %v2369, %v2370
  %v2372 = vsub.f32 1.0, %v2371
  %v2373 = vmul.f32 %v2370, %v2372
  %v2374 = vadd.f32 %v2370, %v2373
  %vm2375 = vweird.f32 %v2369
  %vm2376 = vweird.f32 %v2370
  %vm2377 = vmor %vm2375, %vm2376
  %v2378 = vsel %vm2377, %v2370, %v2374
  %v2379 = vand.u32 2147483647, %v2369
  %vm2380 = vcmp.eq.f32.partialorder %v2379, 8.507059e+37
  %v2381 = vand.u32 %v2369, 2147483648
  %v2382 = vor.u32 1.1754944e-38, %v2381
  %v2383 = vsel %vm2380, %v2382, %v2378
  %v2384 = vmul.f32 1.0, %v2383
  %v2385 = vtanh.pop %v2345
  %v2386 = vxor.u32 %v2346, 2147483648
  %v2387 = vmul.f32 %v2386, 1.442695
  %v2388 = vpow.pop %v2387
  %v2389 = vadd.f32 %v2388, 1.0
  %v2390 = vrcp.pop %v2389
  %v2391 = vmul.f32 %v2389, %v2390
  %v2392 = vsub.f32 1.0, %v2391
  %v2393 = vmul.f32 %v2390, %v2392
  %v2394 = vadd.f32 %v2390, %v2393
  %vm2395 = vweird.f32 %v2389
  %vm2396 = vweird.f32 %v2390
  %vm2397 = vmor %vm2395, %vm2396
  %v2398 = vsel %vm2397, %v2390, %v2394
  %v2399 = vand.u32 2147483647, %v2389
  %vm2400 = vcmp.eq.f32.partialorder %v2399, 8.507059e+37
  %v2401 = vand.u32 %v2389, 2147483648
  %v2402 = vor.u32 1.1754944e-38, %v2401
  %v2403 = vsel %vm2400, %v2402, %v2398
  %v2404 = vmul.f32 1.0, %v2403
  %v2405 = vmul.f32 %v2384, %v2256
  %v2406 = vmul.f32 %v2365, %v2385
  %v2407 = vadd.f32 %v2405, %v2406
  %v2408 = vtanh.pop %v2407
  %v2409 = vmul.f32 %v2404, %v2408
  %v2410 = vld [vmem:[%s836] sm:$0xff]
  %v2411 = vld [vmem:[%s836 + $0x8] sm:$0xff]
  %v2412 = vld [vmem:[%s836 + $0x10] sm:$0xff]
  %v2413 = vld [vmem:[%s836 + $0x18] sm:$0xff]
  %2414 = vmatpush.msra.mxu0 %v1669
  %2415 = vmatpush.msra.mxu0 %v1665
  %2416 = vmatpush.msra.mxu0 %v1661
  %2417 = vmatpush.msra.mxu0 %v1657
  %2418 = vmatpush.msra.mxu0 %v1653
  %2419 = vmatpush.msra.mxu0 %v1649
  %2420 = vmatpush.msra.mxu0 %v1645
  %2421 = vmatpush.msra.mxu0 %v1641
  %2422 = vmatpush.msra.mxu0 %v1637
  %2423 = vmatpush.msra.mxu0 %v1633
  %2424 = vmatpush.msra.mxu0 %v1629
  %2425 = vmatpush.msra.mxu0 %v1625
  %2426 = vmatpush.msra.mxu0 %v1621
  %2427 = vmatpush.msra.mxu0 %v1617
  %2428 = vmatpush.msra.mxu0 %v1613
  %2429 = vmatpush.msra.mxu0 %v1609
  %2430 = vmatmul.f32.gmra.mxu0 %v2409
  %v2431 = vpop.f32.mrf.mxu0
  %v2432 = vadd.f32 0.0, %v2431
  %2433 = vdwg.mxu0
  %2434 = vmatpush.msra.mxu0 %v1670
  %2435 = vmatpush.msra.mxu0 %v1666
  %2436 = vmatpush.msra.mxu0 %v1662
  %2437 = vmatpush.msra.mxu0 %v1658
  %2438 = vmatpush.msra.mxu0 %v1654
  %2439 = vmatpush.msra.mxu0 %v1650
  %2440 = vmatpush.msra.mxu0 %v1646
  %2441 = vmatpush.msra.mxu0 %v1642
  %2442 = vmatpush.msra.mxu0 %v1638
  %2443 = vmatpush.msra.mxu0 %v1634
  %2444 = vmatpush.msra.mxu0 %v1630
  %2445 = vmatpush.msra.mxu0 %v1626
  %2446 = vmatpush.msra.mxu0 %v1622
  %2447 = vmatpush.msra.mxu0 %v1618
  %2448 = vmatpush.msra.mxu0 %v1614
  %2449 = vmatpush.msra.mxu0 %v1610
  %2450 = vmatmul.f32.gmra.mxu0 %v2409
  %v2451 = vpop.f32.mrf.mxu0
  %v2452 = vadd.f32 0.0, %v2451
  %2453 = vdwg.mxu0
  %2454 = vmatpush.msra.mxu0 %v1671
  %2455 = vmatpush.msra.mxu0 %v1667
  %2456 = vmatpush.msra.mxu0 %v1663
  %2457 = vmatpush.msra.mxu0 %v1659
  %2458 = vmatpush.msra.mxu0 %v1655
  %2459 = vmatpush.msra.mxu0 %v1651
  %2460 = vmatpush.msra.mxu0 %v1647
  %2461 = vmatpush.msra.mxu0 %v1643
  %2462 = vmatpush.msra.mxu0 %v1639
  %2463 = vmatpush.msra.mxu0 %v1635
  %2464 = vmatpush.msra.mxu0 %v1631
  %2465 = vmatpush.msra.mxu0 %v1627
  %2466 = vmatpush.msra.mxu0 %v1623
  %2467 = vmatpush.msra.mxu0 %v1619
  %2468 = vmatpush.msra.mxu0 %v1615
  %2469 = vmatpush.msra.mxu0 %v1611
  %2470 = vmatmul.f32.gmra.mxu0 %v2409
  %v2471 = vpop.f32.mrf.mxu0
  %v2472 = vadd.f32 0.0, %v2471
  %2473 = vdwg.mxu0
  %2474 = vmatpush.msra.mxu0 %v1672
  %2475 = vmatpush.msra.mxu0 %v1668
  %2476 = vmatpush.msra.mxu0 %v1664
  %2477 = vmatpush.msra.mxu0 %v1660
  %2478 = vmatpush.msra.mxu0 %v1656
  %2479 = vmatpush.msra.mxu0 %v1652
  %2480 = vmatpush.msra.mxu0 %v1648
  %2481 = vmatpush.msra.mxu0 %v1644
  %2482 = vmatpush.msra.mxu0 %v1640
  %2483 = vmatpush.msra.mxu0 %v1636
  %2484 = vmatpush.msra.mxu0 %v1632
  %2485 = vmatpush.msra.mxu0 %v1628
  %2486 = vmatpush.msra.mxu0 %v1624
  %2487 = vmatpush.msra.mxu0 %v1620
  %2488 = vmatpush.msra.mxu0 %v1616
  %2489 = vmatpush.msra.mxu0 %v1612
  %2490 = vmatmul.f32.gmra.mxu0 %v2409
  %v2491 = vpop.f32.mrf.mxu0
  %v2492 = vadd.f32 0.0, %v2491
  %2493 = vdwg.mxu0
  %v2494 = vadd.f32 %v2410, %v2432
  %v2495 = vadd.f32 %v2411, %v2452
  %v2496 = vadd.f32 %v2412, %v2472
  %v2497 = vadd.f32 %v2413, %v2492
  %v2498 = vxor.u32 %v2494, 2147483648
  %v2499 = vmul.f32 %v2498, 1.442695
  %v2500 = vpow.pop %v2499
  %v2501 = vadd.f32 %v2500, 1.0
  %v2502 = vrcp.pop %v2501
  %v2503 = vmul.f32 %v2501, %v2502
  %v2504 = vsub.f32 1.0, %v2503
  %v2505 = vmul.f32 %v2502, %v2504
  %v2506 = vadd.f32 %v2502, %v2505
  %vm2507 = vweird.f32 %v2501
  %vm2508 = vweird.f32 %v2502
  %vm2509 = vmor %vm2507, %vm2508
  %v2510 = vsel %vm2509, %v2502, %v2506
  %v2511 = vand.u32 2147483647, %v2501
  %vm2512 = vcmp.eq.f32.partialorder %v2511, 8.507059e+37
  %v2513 = vand.u32 %v2501, 2147483648
  %v2514 = vor.u32 1.1754944e-38, %v2513
  %v2515 = vsel %vm2512, %v2514, %v2510
  %v2516 = vmul.f32 1.0, %v2515
  %v2517 = vxor.u32 %v2495, 2147483648
  %v2518 = vmul.f32 %v2517, 1.442695
  %v2519 = vpow.pop %v2518
  %v2520 = vadd.f32 %v2519, 1.0
  %v2521 = vrcp.pop %v2520
  %v2522 = vmul.f32 %v2520, %v2521
  %v2523 = vsub.f32 1.0, %v2522
  %v2524 = vmul.f32 %v2521, %v2523
  %v2525 = vadd.f32 %v2521, %v2524
  %vm2526 = vweird.f32 %v2520
  %vm2527 = vweird.f32 %v2521
  %vm2528 = vmor %vm2526, %vm2527
  %v2529 = vsel %vm2528, %v2521, %v2525
  %v2530 = vand.u32 2147483647, %v2520
  %vm2531 = vcmp.eq.f32.partialorder %v2530, 8.507059e+37
  %v2532 = vand.u32 %v2520, 2147483648
  %v2533 = vor.u32 1.1754944e-38, %v2532
  %v2534 = vsel %vm2531, %v2533, %v2529
  %v2535 = vmul.f32 1.0, %v2534
  %v2536 = vtanh.pop %v2496
  %v2537 = vxor.u32 %v2497, 2147483648
  %v2538 = vmul.f32 %v2537, 1.442695
  %v2539 = vpow.pop %v2538
  %v2540 = vadd.f32 %v2539, 1.0
  %v2541 = vrcp.pop %v2540
  %v2542 = vmul.f32 %v2540, %v2541
  %v2543 = vsub.f32 1.0, %v2542
  %v2544 = vmul.f32 %v2541, %v2543
  %v2545 = vadd.f32 %v2541, %v2544
  %vm2546 = vweird.f32 %v2540
  %vm2547 = vweird.f32 %v2541
  %vm2548 = vmor %vm2546, %vm2547
  %v2549 = vsel %vm2548, %v2541, %v2545
  %v2550 = vand.u32 2147483647, %v2540
  %vm2551 = vcmp.eq.f32.partialorder %v2550, 8.507059e+37
  %v2552 = vand.u32 %v2540, 2147483648
  %v2553 = vor.u32 1.1754944e-38, %v2552
  %v2554 = vsel %vm2551, %v2553, %v2549
  %v2555 = vmul.f32 1.0, %v2554
  %v2556 = vmul.f32 %v2535, %v2407
  %v2557 = vmul.f32 %v2516, %v2536
  %v2558 = vadd.f32 %v2556, %v2557
  %v2559 = vtanh.pop %v2558
  %v2560 = vmul.f32 %v2555, %v2559
  %v2561 = vld [vmem:[%s990] sm:$0xff]
  %v2562 = vld [vmem:[%s990 + $0x8] sm:$0xff]
  %v2563 = vld [vmem:[%s990 + $0x10] sm:$0xff]
  %v2564 = vld [vmem:[%s990 + $0x18] sm:$0xff]
  %2565 = vmatpush.msra.mxu0 %v1669
  %2566 = vmatpush.msra.mxu0 %v1665
  %2567 = vmatpush.msra.mxu0 %v1661
  %2568 = vmatpush.msra.mxu0 %v1657
  %2569 = vmatpush.msra.mxu0 %v1653
  %2570 = vmatpush.msra.mxu0 %v1649
  %2571 = vmatpush.msra.mxu0 %v1645
  %2572 = vmatpush.msra.mxu0 %v1641
  %2573 = vmatpush.msra.mxu0 %v1637
  %2574 = vmatpush.msra.mxu0 %v1633
  %2575 = vmatpush.msra.mxu0 %v1629
  %2576 = vmatpush.msra.mxu0 %v1625
  %2577 = vmatpush.msra.mxu0 %v1621
  %2578 = vmatpush.msra.mxu0 %v1617
  %2579 = vmatpush.msra.mxu0 %v1613
  %2580 = vmatpush.msra.mxu0 %v1609
  %2581 = vmatmul.f32.gmra.mxu0 %v2560
  %v2582 = vpop.f32.mrf.mxu0
  %v2583 = vadd.f32 0.0, %v2582
  %2584 = vdwg.mxu0
  %2585 = vmatpush.msra.mxu0 %v1670
  %2586 = vmatpush.msra.mxu0 %v1666
  %2587 = vmatpush.msra.mxu0 %v1662
  %2588 = vmatpush.msra.mxu0 %v1658
  %2589 = vmatpush.msra.mxu0 %v1654
  %2590 = vmatpush.msra.mxu0 %v1650
  %2591 = vmatpush.msra.mxu0 %v1646
  %2592 = vmatpush.msra.mxu0 %v1642
  %2593 = vmatpush.msra.mxu0 %v1638
  %2594 = vmatpush.msra.mxu0 %v1634
  %2595 = vmatpush.msra.mxu0 %v1630
  %2596 = vmatpush.msra.mxu0 %v1626
  %2597 = vmatpush.msra.mxu0 %v1622
  %2598 = vmatpush.msra.mxu0 %v1618
  %2599 = vmatpush.msra.mxu0 %v1614
  %2600 = vmatpush.msra.mxu0 %v1610
  %2601 = vmatmul.f32.gmra.mxu0 %v2560
  %v2602 = vpop.f32.mrf.mxu0
  %v2603 = vadd.f32 0.0, %v2602
  %2604 = vdwg.mxu0
  %2605 = vmatpush.msra.mxu0 %v1671
  %2606 = vmatpush.msra.mxu0 %v1667
  %2607 = vmatpush.msra.mxu0 %v1663
  %2608 = vmatpush.msra.mxu0 %v1659
  %2609 = vmatpush.msra.mxu0 %v1655
  %2610 = vmatpush.msra.mxu0 %v1651
  %2611 = vmatpush.msra.mxu0 %v1647
  %2612 = vmatpush.msra.mxu0 %v1643
  %2613 = vmatpush.msra.mxu0 %v1639
  %2614 = vmatpush.msra.mxu0 %v1635
  %2615 = vmatpush.msra.mxu0 %v1631
  %2616 = vmatpush.msra.mxu0 %v1627
  %2617 = vmatpush.msra.mxu0 %v1623
  %2618 = vmatpush.msra.mxu0 %v1619
  %2619 = vmatpush.msra.mxu0 %v1615
  %2620 = vmatpush.msra.mxu0 %v1611
  %2621 = vmatmul.f32.gmra.mxu0 %v2560
  %v2622 = vpop.f32.mrf.mxu0
  %v2623 = vadd.f32 0.0, %v2622
  %2624 = vdwg.mxu0
  %2625 = vmatpush.msra.mxu0 %v1672
  %2626 = vmatpush.msra.mxu0 %v1668
  %2627 = vmatpush.msra.mxu0 %v1664
  %2628 = vmatpush.msra.mxu0 %v1660
  %2629 = vmatpush.msra.mxu0 %v1656
  %2630 = vmatpush.msra.mxu0 %v1652
  %2631 = vmatpush.msra.mxu0 %v1648
  %2632 = vmatpush.msra.mxu0 %v1644
  %2633 = vmatpush.msra.mxu0 %v1640
  %2634 = vmatpush.msra.mxu0 %v1636
  %2635 = vmatpush.msra.mxu0 %v1632
  %2636 = vmatpush.msra.mxu0 %v1628
  %2637 = vmatpush.msra.mxu0 %v1624
  %2638 = vmatpush.msra.mxu0 %v1620
  %2639 = vmatpush.msra.mxu0 %v1616
  %2640 = vmatpush.msra.mxu0 %v1612
  %2641 = vmatmul.f32.gmra.mxu0 %v2560
  %v2642 = vpop.f32.mrf.mxu0
  %v2643 = vadd.f32 0.0, %v2642
  %2644 = vdwg.mxu0
  %v2645 = vadd.f32 %v2561, %v2583
  %v2646 = vadd.f32 %v2562, %v2603
  %v2647 = vadd.f32 %v2563, %v2623
  %v2648 = vadd.f32 %v2564, %v2643
  %v2649 = vxor.u32 %v2645, 2147483648
  %v2650 = vmul.f32 %v2649, 1.442695
  %v2651 = vpow.pop %v2650
  %v2652 = vadd.f32 %v2651, 1.0
  %v2653 = vrcp.pop %v2652
  %v2654 = vmul.f32 %v2652, %v2653
  %v2655 = vsub.f32 1.0, %v2654
  %v2656 = vmul.f32 %v2653, %v2655
  %v2657 = vadd.f32 %v2653, %v2656
  %vm2658 = vweird.f32 %v2652
  %vm2659 = vweird.f32 %v2653
  %vm2660 = vmor %vm2658, %vm2659
  %v2661 = vsel %vm2660, %v2653, %v2657
  %v2662 = vand.u32 2147483647, %v2652
  %vm2663 = vcmp.eq.f32.partialorder %v2662, 8.507059e+37
  %v2664 = vand.u32 %v2652, 2147483648
  %v2665 = vor.u32 1.1754944e-38, %v2664
  %v2666 = vsel %vm2663, %v2665, %v2661
  %v2667 = vmul.f32 1.0, %v2666
  %v2668 = vxor.u32 %v2646, 2147483648
  %v2669 = vmul.f32 %v2668, 1.442695
  %v2670 = vpow.pop %v2669
  %v2671 = vadd.f32 %v2670, 1.0
  %v2672 = vrcp.pop %v2671
  %v2673 = vmul.f32 %v2671, %v2672
  %v2674 = vsub.f32 1.0, %v2673
  %v2675 = vmul.f32 %v2672, %v2674
  %v2676 = vadd.f32 %v2672, %v2675
  %vm2677 = vweird.f32 %v2671
  %vm2678 = vweird.f32 %v2672
  %vm2679 = vmor %vm2677, %vm2678
  %v2680 = vsel %vm2679, %v2672, %v2676
  %v2681 = vand.u32 2147483647, %v2671
  %vm2682 = vcmp.eq.f32.partialorder %v2681, 8.507059e+37
  %v2683 = vand.u32 %v2671, 2147483648
  %v2684 = vor.u32 1.1754944e-38, %v2683
  %v2685 = vsel %vm2682, %v2684, %v2680
  %v2686 = vmul.f32 1.0, %v2685
  %v2687 = vtanh.pop %v2647
  %v2688 = vxor.u32 %v2648, 2147483648
  %v2689 = vmul.f32 %v2688, 1.442695
  %v2690 = vpow.pop %v2689
  %v2691 = vadd.f32 %v2690, 1.0
  %v2692 = vrcp.pop %v2691
  %v2693 = vmul.f32 %v2691, %v2692
  %v2694 = vsub.f32 1.0, %v2693
  %v2695 = vmul.f32 %v2692, %v2694
  %v2696 = vadd.f32 %v2692, %v2695
  %vm2697 = vweird.f32 %v2691
  %vm2698 = vweird.f32 %v2692
  %vm2699 = vmor %vm2697, %vm2698
  %v2700 = vsel %vm2699, %v2692, %v2696
  %v2701 = vand.u32 2147483647, %v2691
  %vm2702 = vcmp.eq.f32.partialorder %v2701, 8.507059e+37
  %v2703 = vand.u32 %v2691, 2147483648
  %v2704 = vor.u32 1.1754944e-38, %v2703
  %v2705 = vsel %vm2702, %v2704, %v2700
  %v2706 = vmul.f32 1.0, %v2705
  %v2707 = vmul.f32 %v2686, %v2558
  %v2708 = vmul.f32 %v2667, %v2687
  %v2709 = vadd.f32 %v2707, %v2708
  %v2710 = vtanh.pop %v2709
  %v2711 = vmul.f32 %v2706, %v2710
  %v2712 = vld [vmem:[%s1144] sm:$0xff]
  %v2713 = vld [vmem:[%s1144 + $0x8] sm:$0xff]
  %v2714 = vld [vmem:[%s1144 + $0x10] sm:$0xff]
  %v2715 = vld [vmem:[%s1144 + $0x18] sm:$0xff]
  %2716 = vmatpush.msra.mxu0 %v1669
  %2717 = vmatpush.msra.mxu0 %v1665
  %2718 = vmatpush.msra.mxu0 %v1661
  %2719 = vmatpush.msra.mxu0 %v1657
  %2720 = vmatpush.msra.mxu0 %v1653
  %2721 = vmatpush.msra.mxu0 %v1649
  %2722 = vmatpush.msra.mxu0 %v1645
  %2723 = vmatpush.msra.mxu0 %v1641
  %2724 = vmatpush.msra.mxu0 %v1637
  %2725 = vmatpush.msra.mxu0 %v1633
  %2726 = vmatpush.msra.mxu0 %v1629
  %2727 = vmatpush.msra.mxu0 %v1625
  %2728 = vmatpush.msra.mxu0 %v1621
  %2729 = vmatpush.msra.mxu0 %v1617
  %2730 = vmatpush.msra.mxu0 %v1613
  %2731 = vmatpush.msra.mxu0 %v1609
  %2732 = vmatmul.f32.gmra.mxu0 %v2711
  %v2733 = vpop.f32.mrf.mxu0
  %v2734 = vadd.f32 0.0, %v2733
  %2735 = vdwg.mxu0
  %2736 = vmatpush.msra.mxu0 %v1670
  %2737 = vmatpush.msra.mxu0 %v1666
  %2738 = vmatpush.msra.mxu0 %v1662
  %2739 = vmatpush.msra.mxu0 %v1658
  %2740 = vmatpush.msra.mxu0 %v1654
  %2741 = vmatpush.msra.mxu0 %v1650
  %2742 = vmatpush.msra.mxu0 %v1646
  %2743 = vmatpush.msra.mxu0 %v1642
  %2744 = vmatpush.msra.mxu0 %v1638
  %2745 = vmatpush.msra.mxu0 %v1634
  %2746 = vmatpush.msra.mxu0 %v1630
  %2747 = vmatpush.msra.mxu0 %v1626
  %2748 = vmatpush.msra.mxu0 %v1622
  %2749 = vmatpush.msra.mxu0 %v1618
  %2750 = vmatpush.msra.mxu0 %v1614
  %2751 = vmatpush.msra.mxu0 %v1610
  %2752 = vmatmul.f32.gmra.mxu0 %v2711
  %v2753 = vpop.f32.mrf.mxu0
  %v2754 = vadd.f32 0.0, %v2753
  %2755 = vdwg.mxu0
  %2756 = vmatpush.msra.mxu0 %v1671
  %2757 = vmatpush.msra.mxu0 %v1667
  %2758 = vmatpush.msra.mxu0 %v1663
  %2759 = vmatpush.msra.mxu0 %v1659
  %2760 = vmatpush.msra.mxu0 %v1655
  %2761 = vmatpush.msra.mxu0 %v1651
  %2762 = vmatpush.msra.mxu0 %v1647
  %2763 = vmatpush.msra.mxu0 %v1643
  %2764 = vmatpush.msra.mxu0 %v1639
  %2765 = vmatpush.msra.mxu0 %v1635
  %2766 = vmatpush.msra.mxu0 %v1631
  %2767 = vmatpush.msra.mxu0 %v1627
  %2768 = vmatpush.msra.mxu0 %v1623
  %2769 = vmatpush.msra.mxu0 %v1619
  %2770 = vmatpush.msra.mxu0 %v1615
  %2771 = vmatpush.msra.mxu0 %v1611
  %2772 = vmatmul.f32.gmra.mxu0 %v2711
  %v2773 = vpop.f32.mrf.mxu0
  %v2774 = vadd.f32 0.0, %v2773
  %2775 = vdwg.mxu0
  %2776 = vmatpush.msra.mxu0 %v1672
  %2777 = vmatpush.msra.mxu0 %v1668
  %2778 = vmatpush.msra.mxu0 %v1664
  %2779 = vmatpush.msra.mxu0 %v1660
  %2780 = vmatpush.msra.mxu0 %v1656
  %2781 = vmatpush.msra.mxu0 %v1652
  %2782 = vmatpush.msra.mxu0 %v1648
  %2783 = vmatpush.msra.mxu0 %v1644
  %2784 = vmatpush.msra.mxu0 %v1640
  %2785 = vmatpush.msra.mxu0 %v1636
  %2786 = vmatpush.msra.mxu0 %v1632
  %2787 = vmatpush.msra.mxu0 %v1628
  %2788 = vmatpush.msra.mxu0 %v1624
  %2789 = vmatpush.msra.mxu0 %v1620
  %2790 = vmatpush.msra.mxu0 %v1616
  %2791 = vmatpush.msra.mxu0 %v1612
  %2792 = vmatmul.f32.gmra.mxu0 %v2711
  %v2793 = vpop.f32.mrf.mxu0
  %v2794 = vadd.f32 0.0, %v2793
  %2795 = vdwg.mxu0
  %v2796 = vadd.f32 %v2712, %v2734
  %v2797 = vadd.f32 %v2713, %v2754
  %v2798 = vadd.f32 %v2714, %v2774
  %v2799 = vadd.f32 %v2715, %v2794
  %v2800 = vxor.u32 %v2796, 2147483648
  %v2801 = vmul.f32 %v2800, 1.442695
  %v2802 = vpow.pop %v2801
  %v2803 = vadd.f32 %v2802, 1.0
  %v2804 = vrcp.pop %v2803
  %v2805 = vmul.f32 %v2803, %v2804
  %v2806 = vsub.f32 1.0, %v2805
  %v2807 = vmul.f32 %v2804, %v2806
  %v2808 = vadd.f32 %v2804, %v2807
  %vm2809 = vweird.f32 %v2803
  %vm2810 = vweird.f32 %v2804
  %vm2811 = vmor %vm2809, %vm2810
  %v2812 = vsel %vm2811, %v2804, %v2808
  %v2813 = vand.u32 2147483647, %v2803
  %vm2814 = vcmp.eq.f32.partialorder %v2813, 8.507059e+37
  %v2815 = vand.u32 %v2803, 2147483648
  %v2816 = vor.u32 1.1754944e-38, %v2815
  %v2817 = vsel %vm2814, %v2816, %v2812
  %v2818 = vmul.f32 1.0, %v2817
  %v2819 = vxor.u32 %v2797, 2147483648
  %v2820 = vmul.f32 %v2819, 1.442695
  %v2821 = vpow.pop %v2820
  %v2822 = vadd.f32 %v2821, 1.0
  %v2823 = vrcp.pop %v2822
  %v2824 = vmul.f32 %v2822, %v2823
  %v2825 = vsub.f32 1.0, %v2824
  %v2826 = vmul.f32 %v2823, %v2825
  %v2827 = vadd.f32 %v2823, %v2826
  %vm2828 = vweird.f32 %v2822
  %vm2829 = vweird.f32 %v2823
  %vm2830 = vmor %vm2828, %vm2829
  %v2831 = vsel %vm2830, %v2823, %v2827
  %v2832 = vand.u32 2147483647, %v2822
  %vm2833 = vcmp.eq.f32.partialorder %v2832, 8.507059e+37
  %v2834 = vand.u32 %v2822, 2147483648
  %v2835 = vor.u32 1.1754944e-38, %v2834
  %v2836 = vsel %vm2833, %v2835, %v2831
  %v2837 = vmul.f32 1.0, %v2836
  %v2838 = vtanh.pop %v2798
  %v2839 = vxor.u32 %v2799, 2147483648
  %v2840 = vmul.f32 %v2839, 1.442695
  %v2841 = vpow.pop %v2840
  %v2842 = vadd.f32 %v2841, 1.0
  %v2843 = vrcp.pop %v2842
  %v2844 = vmul.f32 %v2842, %v2843
  %v2845 = vsub.f32 1.0, %v2844
  %v2846 = vmul.f32 %v2843, %v2845
  %v2847 = vadd.f32 %v2843, %v2846
  %vm2848 = vweird.f32 %v2842
  %vm2849 = vweird.f32 %v2843
  %vm2850 = vmor %vm2848, %vm2849
  %v2851 = vsel %vm2850, %v2843, %v2847
  %v2852 = vand.u32 2147483647, %v2842
  %vm2853 = vcmp.eq.f32.partialorder %v2852, 8.507059e+37
  %v2854 = vand.u32 %v2842, 2147483648
  %v2855 = vor.u32 1.1754944e-38, %v2854
  %v2856 = vsel %vm2853, %v2855, %v2851
  %v2857 = vmul.f32 1.0, %v2856
  %v2858 = vmul.f32 %v2837, %v2709
  %v2859 = vmul.f32 %v2818, %v2838
  %v2860 = vadd.f32 %v2858, %v2859
  %v2861 = vtanh.pop %v2860
  %v2862 = vmul.f32 %v2857, %v2861
  %v2863 = vld [vmem:[%s1298] sm:$0xff]
  %v2864 = vld [vmem:[%s1298 + $0x8] sm:$0xff]
  %v2865 = vld [vmem:[%s1298 + $0x10] sm:$0xff]
  %v2866 = vld [vmem:[%s1298 + $0x18] sm:$0xff]
  %2867 = vmatpush.msra.mxu0 %v1669
  %2868 = vmatpush.msra.mxu0 %v1665
  %2869 = vmatpush.msra.mxu0 %v1661
  %2870 = vmatpush.msra.mxu0 %v1657
  %2871 = vmatpush.msra.mxu0 %v1653
  %2872 = vmatpush.msra.mxu0 %v1649
  %2873 = vmatpush.msra.mxu0 %v1645
  %2874 = vmatpush.msra.mxu0 %v1641
  %2875 = vmatpush.msra.mxu0 %v1637
  %2876 = vmatpush.msra.mxu0 %v1633
  %2877 = vmatpush.msra.mxu0 %v1629
  %2878 = vmatpush.msra.mxu0 %v1625
  %2879 = vmatpush.msra.mxu0 %v1621
  %2880 = vmatpush.msra.mxu0 %v1617
  %2881 = vmatpush.msra.mxu0 %v1613
  %2882 = vmatpush.msra.mxu0 %v1609
  %2883 = vmatmul.f32.gmra.mxu0 %v2862
  %v2884 = vpop.f32.mrf.mxu0
  %v2885 = vadd.f32 0.0, %v2884
  %2886 = vdwg.mxu0
  %2887 = vmatpush.msra.mxu0 %v1670
  %2888 = vmatpush.msra.mxu0 %v1666
  %2889 = vmatpush.msra.mxu0 %v1662
  %2890 = vmatpush.msra.mxu0 %v1658
  %2891 = vmatpush.msra.mxu0 %v1654
  %2892 = vmatpush.msra.mxu0 %v1650
  %2893 = vmatpush.msra.mxu0 %v1646
  %2894 = vmatpush.msra.mxu0 %v1642
  %2895 = vmatpush.msra.mxu0 %v1638
  %2896 = vmatpush.msra.mxu0 %v1634
  %2897 = vmatpush.msra.mxu0 %v1630
  %2898 = vmatpush.msra.mxu0 %v1626
  %2899 = vmatpush.msra.mxu0 %v1622
  %2900 = vmatpush.msra.mxu0 %v1618
  %2901 = vmatpush.msra.mxu0 %v1614
  %2902 = vmatpush.msra.mxu0 %v1610
  %2903 = vmatmul.f32.gmra.mxu0 %v2862
  %v2904 = vpop.f32.mrf.mxu0
  %v2905 = vadd.f32 0.0, %v2904
  %2906 = vdwg.mxu0
  %2907 = vmatpush.msra.mxu0 %v1671
  %2908 = vmatpush.msra.mxu0 %v1667
  %2909 = vmatpush.msra.mxu0 %v1663
  %2910 = vmatpush.msra.mxu0 %v1659
  %2911 = vmatpush.msra.mxu0 %v1655
  %2912 = vmatpush.msra.mxu0 %v1651
  %2913 = vmatpush.msra.mxu0 %v1647
  %2914 = vmatpush.msra.mxu0 %v1643
  %2915 = vmatpush.msra.mxu0 %v1639
  %2916 = vmatpush.msra.mxu0 %v1635
  %2917 = vmatpush.msra.mxu0 %v1631
  %2918 = vmatpush.msra.mxu0 %v1627
  %2919 = vmatpush.msra.mxu0 %v1623
  %2920 = vmatpush.msra.mxu0 %v1619
  %2921 = vmatpush.msra.mxu0 %v1615
  %2922 = vmatpush.msra.mxu0 %v1611
  %2923 = vmatmul.f32.gmra.mxu0 %v2862
  %v2924 = vpop.f32.mrf.mxu0
  %v2925 = vadd.f32 0.0, %v2924
  %2926 = vdwg.mxu0
  %2927 = vmatpush.msra.mxu0 %v1672
  %2928 = vmatpush.msra.mxu0 %v1668
  %2929 = vmatpush.msra.mxu0 %v1664
  %2930 = vmatpush.msra.mxu0 %v1660
  %2931 = vmatpush.msra.mxu0 %v1656
  %2932 = vmatpush.msra.mxu0 %v1652
  %2933 = vmatpush.msra.mxu0 %v1648
  %2934 = vmatpush.msra.mxu0 %v1644
  %2935 = vmatpush.msra.mxu0 %v1640
  %2936 = vmatpush.msra.mxu0 %v1636
  %2937 = vmatpush.msra.mxu0 %v1632
  %2938 = vmatpush.msra.mxu0 %v1628
  %2939 = vmatpush.msra.mxu0 %v1624
  %2940 = vmatpush.msra.mxu0 %v1620
  %2941 = vmatpush.msra.mxu0 %v1616
  %2942 = vmatpush.msra.mxu0 %v1612
  %2943 = vmatmul.f32.gmra.mxu0 %v2862
  %v2944 = vpop.f32.mrf.mxu0
  %v2945 = vadd.f32 0.0, %v2944
  %2946 = vdwg.mxu0
  %v2947 = vadd.f32 %v2863, %v2885
  %v2948 = vadd.f32 %v2864, %v2905
  %v2949 = vadd.f32 %v2865, %v2925
  %v2950 = vadd.f32 %v2866, %v2945
  %v2951 = vxor.u32 %v2947, 2147483648
  %v2952 = vmul.f32 %v2951, 1.442695
  %v2953 = vpow.pop %v2952
  %v2954 = vadd.f32 %v2953, 1.0
  %v2955 = vrcp.pop %v2954
  %v2956 = vmul.f32 %v2954, %v2955
  %v2957 = vsub.f32 1.0, %v2956
  %v2958 = vmul.f32 %v2955, %v2957
  %v2959 = vadd.f32 %v2955, %v2958
  %vm2960 = vweird.f32 %v2954
  %vm2961 = vweird.f32 %v2955
  %vm2962 = vmor %vm2960, %vm2961
  %v2963 = vsel %vm2962, %v2955, %v2959
  %v2964 = vand.u32 2147483647, %v2954
  %vm2965 = vcmp.eq.f32.partialorder %v2964, 8.507059e+37
  %v2966 = vand.u32 %v2954, 2147483648
  %v2967 = vor.u32 1.1754944e-38, %v2966
  %v2968 = vsel %vm2965, %v2967, %v2963
  %v2969 = vmul.f32 1.0, %v2968
  %v2970 = vxor.u32 %v2948, 2147483648
  %v2971 = vmul.f32 %v2970, 1.442695
  %v2972 = vpow.pop %v2971
  %v2973 = vadd.f32 %v2972, 1.0
  %v2974 = vrcp.pop %v2973
  %v2975 = vmul.f32 %v2973, %v2974
  %v2976 = vsub.f32 1.0, %v2975
  %v2977 = vmul.f32 %v2974, %v2976
  %v2978 = vadd.f32 %v2974, %v2977
  %vm2979 = vweird.f32 %v2973
  %vm2980 = vweird.f32 %v2974
  %vm2981 = vmor %vm2979, %vm2980
  %v2982 = vsel %vm2981, %v2974, %v2978
  %v2983 = vand.u32 2147483647, %v2973
  %vm2984 = vcmp.eq.f32.partialorder %v2983, 8.507059e+37
  %v2985 = vand.u32 %v2973, 2147483648
  %v2986 = vor.u32 1.1754944e-38, %v2985
  %v2987 = vsel %vm2984, %v2986, %v2982
  %v2988 = vmul.f32 1.0, %v2987
  %v2989 = vtanh.pop %v2949
  %v2990 = vxor.u32 %v2950, 2147483648
  %v2991 = vmul.f32 %v2990, 1.442695
  %v2992 = vpow.pop %v2991
  %v2993 = vadd.f32 %v2992, 1.0
  %v2994 = vrcp.pop %v2993
  %v2995 = vmul.f32 %v2993, %v2994
  %v2996 = vsub.f32 1.0, %v2995
  %v2997 = vmul.f32 %v2994, %v2996
  %v2998 = vadd.f32 %v2994, %v2997
  %vm2999 = vweird.f32 %v2993
  %vm3000 = vweird.f32 %v2994
  %vm3001 = vmor %vm2999, %vm3000
  %v3002 = vsel %vm3001, %v2994, %v2998
  %v3003 = vand.u32 2147483647, %v2993
  %vm3004 = vcmp.eq.f32.partialorder %v3003, 8.507059e+37
  %v3005 = vand.u32 %v2993, 2147483648
  %v3006 = vor.u32 1.1754944e-38, %v3005
  %v3007 = vsel %vm3004, %v3006, %v3002
  %v3008 = vmul.f32 1.0, %v3007
  %v3009 = vmul.f32 %v2988, %v2860
  %v3010 = vmul.f32 %v2969, %v2989
  %v3011 = vadd.f32 %v3009, %v3010
  %v3012 = vtanh.pop %v3011
  %v3013 = vmul.f32 %v3008, %v3012
  %v3014 = vld [vmem:[%s1452] sm:$0xff]
  %v3015 = vld [vmem:[%s1452 + $0x8] sm:$0xff]
  %v3016 = vld [vmem:[%s1452 + $0x10] sm:$0xff]
  %v3017 = vld [vmem:[%s1452 + $0x18] sm:$0xff]
  %3018 = vmatpush.msra.mxu0 %v1669
  %3019 = vmatpush.msra.mxu0 %v1665
  %3020 = vmatpush.msra.mxu0 %v1661
  %3021 = vmatpush.msra.mxu0 %v1657
  %3022 = vmatpush.msra.mxu0 %v1653
  %3023 = vmatpush.msra.mxu0 %v1649
  %3024 = vmatpush.msra.mxu0 %v1645
  %3025 = vmatpush.msra.mxu0 %v1641
  %3026 = vmatpush.msra.mxu0 %v1637
  %3027 = vmatpush.msra.mxu0 %v1633
  %3028 = vmatpush.msra.mxu0 %v1629
  %3029 = vmatpush.msra.mxu0 %v1625
  %3030 = vmatpush.msra.mxu0 %v1621
  %3031 = vmatpush.msra.mxu0 %v1617
  %3032 = vmatpush.msra.mxu0 %v1613
  %3033 = vmatpush.msra.mxu0 %v1609
  %3034 = vmatmul.f32.gmra.mxu0 %v3013
  %v3035 = vpop.f32.mrf.mxu0
  %v3036 = vadd.f32 0.0, %v3035
  %3037 = vdwg.mxu0
  %3038 = vmatpush.msra.mxu0 %v1670
  %3039 = vmatpush.msra.mxu0 %v1666
  %3040 = vmatpush.msra.mxu0 %v1662
  %3041 = vmatpush.msra.mxu0 %v1658
  %3042 = vmatpush.msra.mxu0 %v1654
  %3043 = vmatpush.msra.mxu0 %v1650
  %3044 = vmatpush.msra.mxu0 %v1646
  %3045 = vmatpush.msra.mxu0 %v1642
  %3046 = vmatpush.msra.mxu0 %v1638
  %3047 = vmatpush.msra.mxu0 %v1634
  %3048 = vmatpush.msra.mxu0 %v1630
  %3049 = vmatpush.msra.mxu0 %v1626
  %3050 = vmatpush.msra.mxu0 %v1622
  %3051 = vmatpush.msra.mxu0 %v1618
  %3052 = vmatpush.msra.mxu0 %v1614
  %3053 = vmatpush.msra.mxu0 %v1610
  %3054 = vmatmul.f32.gmra.mxu0 %v3013
  %v3055 = vpop.f32.mrf.mxu0
  %v3056 = vadd.f32 0.0, %v3055
  %3057 = vdwg.mxu0
  %3058 = vmatpush.msra.mxu0 %v1671
  %3059 = vmatpush.msra.mxu0 %v1667
  %3060 = vmatpush.msra.mxu0 %v1663
  %3061 = vmatpush.msra.mxu0 %v1659
  %3062 = vmatpush.msra.mxu0 %v1655
  %3063 = vmatpush.msra.mxu0 %v1651
  %3064 = vmatpush.msra.mxu0 %v1647
  %3065 = vmatpush.msra.mxu0 %v1643
  %3066 = vmatpush.msra.mxu0 %v1639
  %3067 = vmatpush.msra.mxu0 %v1635
  %3068 = vmatpush.msra.mxu0 %v1631
  %3069 = vmatpush.msra.mxu0 %v1627
  %3070 = vmatpush.msra.mxu0 %v1623
  %3071 = vmatpush.msra.mxu0 %v1619
  %3072 = vmatpush.msra.mxu0 %v1615
  %3073 = vmatpush.msra.mxu0 %v1611
  %3074 = vmatmul.f32.gmra.mxu0 %v3013
  %v3075 = vpop.f32.mrf.mxu0
  %v3076 = vadd.f32 0.0, %v3075
  %3077 = vdwg.mxu0
  %3078 = vmatpush.msra.mxu0 %v1672
  %3079 = vmatpush.msra.mxu0 %v1668
  %3080 = vmatpush.msra.mxu0 %v1664
  %3081 = vmatpush.msra.mxu0 %v1660
  %3082 = vmatpush.msra.mxu0 %v1656
  %3083 = vmatpush.msra.mxu0 %v1652
  %3084 = vmatpush.msra.mxu0 %v1648
  %3085 = vmatpush.msra.mxu0 %v1644
  %3086 = vmatpush.msra.mxu0 %v1640
  %3087 = vmatpush.msra.mxu0 %v1636
  %3088 = vmatpush.msra.mxu0 %v1632
  %3089 = vmatpush.msra.mxu0 %v1628
  %3090 = vmatpush.msra.mxu0 %v1624
  %3091 = vmatpush.msra.mxu0 %v1620
  %3092 = vmatpush.msra.mxu0 %v1616
  %3093 = vmatpush.msra.mxu0 %v1612
  %3094 = vmatmul.f32.gmra.mxu0 %v3013
  %v3095 = vpop.f32.mrf.mxu0
  %v3096 = vadd.f32 0.0, %v3095
  %3097 = vdwg.mxu0
  %v3098 = vadd.f32 %v3014, %v3036
  %v3099 = vadd.f32 %v3015, %v3056
  %v3100 = vadd.f32 %v3016, %v3076
  %v3101 = vadd.f32 %v3017, %v3096
  %v3102 = vxor.u32 %v3098, 2147483648
  %v3103 = vmul.f32 %v3102, 1.442695
  %v3104 = vpow.pop %v3103
  %v3105 = vadd.f32 %v3104, 1.0
  %v3106 = vrcp.pop %v3105
  %v3107 = vmul.f32 %v3105, %v3106
  %v3108 = vsub.f32 1.0, %v3107
  %v3109 = vmul.f32 %v3106, %v3108
  %v3110 = vadd.f32 %v3106, %v3109
  %vm3111 = vweird.f32 %v3105
  %vm3112 = vweird.f32 %v3106
  %vm3113 = vmor %vm3111, %vm3112
  %v3114 = vsel %vm3113, %v3106, %v3110
  %v3115 = vand.u32 2147483647, %v3105
  %vm3116 = vcmp.eq.f32.partialorder %v3115, 8.507059e+37
  %v3117 = vand.u32 %v3105, 2147483648
  %v3118 = vor.u32 1.1754944e-38, %v3117
  %v3119 = vsel %vm3116, %v3118, %v3114
  %v3120 = vmul.f32 1.0, %v3119
  %v3121 = vxor.u32 %v3099, 2147483648
  %v3122 = vmul.f32 %v3121, 1.442695
  %v3123 = vpow.pop %v3122
  %v3124 = vadd.f32 %v3123, 1.0
  %v3125 = vrcp.pop %v3124
  %v3126 = vmul.f32 %v3124, %v3125
  %v3127 = vsub.f32 1.0, %v3126
  %v3128 = vmul.f32 %v3125, %v3127
  %v3129 = vadd.f32 %v3125, %v3128
  %vm3130 = vweird.f32 %v3124
  %vm3131 = vweird.f32 %v3125
  %vm3132 = vmor %vm3130, %vm3131
  %v3133 = vsel %vm3132, %v3125, %v3129
  %v3134 = vand.u32 2147483647, %v3124
  %vm3135 = vcmp.eq.f32.partialorder %v3134, 8.507059e+37
  %v3136 = vand.u32 %v3124, 2147483648
  %v3137 = vor.u32 1.1754944e-38, %v3136
  %v3138 = vsel %vm3135, %v3137, %v3133
  %v3139 = vmul.f32 1.0, %v3138
  %v3140 = vtanh.pop %v3100
  %v3141 = vxor.u32 %v3101, 2147483648
  %v3142 = vmul.f32 %v3141, 1.442695
  %v3143 = vpow.pop %v3142
  %v3144 = vadd.f32 %v3143, 1.0
  %v3145 = vrcp.pop %v3144
  %v3146 = vmul.f32 %v3144, %v3145
  %v3147 = vsub.f32 1.0, %v3146
  %v3148 = vmul.f32 %v3145, %v3147
  %v3149 = vadd.f32 %v3145, %v3148
  %vm3150 = vweird.f32 %v3144
  %vm3151 = vweird.f32 %v3145
  %vm3152 = vmor %vm3150, %vm3151
  %v3153 = vsel %vm3152, %v3145, %v3149
  %v3154 = vand.u32 2147483647, %v3144
  %vm3155 = vcmp.eq.f32.partialorder %v3154, 8.507059e+37
  %v3156 = vand.u32 %v3144, 2147483648
  %v3157 = vor.u32 1.1754944e-38, %v3156
  %v3158 = vsel %vm3155, %v3157, %v3153
  %v3159 = vmul.f32 1.0, %v3158
  %v3160 = vmul.f32 %v3139, %v3011
  %v3161 = vmul.f32 %v3120, %v3140
  %v3162 = vadd.f32 %v3160, %v3161
  %v3163 = vtanh.pop %v3162
  %v3164 = vmul.f32 %v3159, %v3163
  %s3165 = scalar_lea.vmem %s9, 8
  %3166 = vst [vmem:[%s3165] sm:$0xff] %v3164
  %s3167 = scalar_lea.vmem %s10, 8
  %3168 = vst [vmem:[%s3167] sm:$0xff] %v3162
  %v3169 = vld [vmem:[%s6] sm:$0xff]
  %v3170 = vld [vmem:[%s6 + $0x8] sm:$0xff]
  %v3171 = vld [vmem:[%s6 + $0x10] sm:$0xff]
  %v3172 = vld [vmem:[%s6 + $0x18] sm:$0xff]
  %v3173 = vld [vmem:[%s6 + $0x20] sm:$0xff]
  %v3174 = vld [vmem:[%s6 + $0x28] sm:$0xff]
  %v3175 = vld [vmem:[%s6 + $0x30] sm:$0xff]
  %v3176 = vld [vmem:[%s6 + $0x38] sm:$0xff]
  %v3177 = vld [vmem:[%s6 + $0x40] sm:$0xff]
  %v3178 = vld [vmem:[%s6 + $0x48] sm:$0xff]
  %v3179 = vld [vmem:[%s6 + $0x50] sm:$0xff]
  %v3180 = vld [vmem:[%s6 + $0x58] sm:$0xff]
  %v3181 = vld [vmem:[%s6 + $0x60] sm:$0xff]
  %v3182 = vld [vmem:[%s6 + $0x68] sm:$0xff]
  %v3183 = vld [vmem:[%s6 + $0x70] sm:$0xff]
  %v3184 = vld [vmem:[%s6 + $0x78] sm:$0xff]
  %v3185 = vld [vmem:[%s7] sm:$0x1]
  %v3187 = vperm.slane %v3185, 0
  %3189 = vmatpush.msra.mxu0 %v3184
  %3190 = vmatpush.msra.mxu0 %v3183
  %3191 = vmatpush.msra.mxu0 %v3182
  %3192 = vmatpush.msra.mxu0 %v3181
  %3193 = vmatpush.msra.mxu0 %v3180
  %3194 = vmatpush.msra.mxu0 %v3179
  %3195 = vmatpush.msra.mxu0 %v3178
  %3196 = vmatpush.msra.mxu0 %v3177
  %3197 = vmatpush.msra.mxu0 %v3176
  %3198 = vmatpush.msra.mxu0 %v3175
  %3199 = vmatpush.msra.mxu0 %v3174
  %3200 = vmatpush.msra.mxu0 %v3173
  %3201 = vmatpush.msra.mxu0 %v3172
  %3202 = vmatpush.msra.mxu0 %v3171
  %3203 = vmatpush.msra.mxu0 %v3170
  %3204 = vmatpush.msra.mxu0 %v3169
  %3205 = vmatmul.f32.gmra.mxu0 %v3164
  %v3206 = vpop.f32.mrf.mxu0
  %v3207 = vadd.f32 %v3187, %v3206
  %3208 = vdwg.mxu0
  %3209 = vst [vmem:[%s8] sm:$0xff] %v3207
  // Predicated region
  $region34: #{lstm_model_forward.1} parent=0 // pred_check
    _
  $region35: #{lstm_model_forward.1} parent=0 // pred_check_branch
    %3211 = sbr.rel (0) target = $region37
  $region36: #{lstm_model_forward.1} parent=0 // pred_region
    _
  $region37: #{lstm_model_forward.1} parent=0 // pred_fallthru
    _
  // Predicated region
  $region38: #{lstm_model_forward.1} parent=0 // pred_check
    _
  $region39: #{lstm_model_forward.1} parent=0 // pred_check_branch
    %3213 = sbr.rel (0) target = $region41
  $region40: #{lstm_model_forward.1} parent=0 // pred_region
    _
  $region41: #{lstm_model_forward.1} parent=0 // pred_fallthru
    _
  // Predicated region
  $region42: #{lstm_model_forward.1} parent=0 // pred_check
    _
  $region43: #{lstm_model_forward.1} parent=0 // pred_check_branch
    %3215 = sbr.rel (0) target = $region45
  $region44: #{lstm_model_forward.1} parent=0 // pred_region
    _
  $region45: #{lstm_model_forward.1} parent=0 // pred_fallthru
    _
  // Predicated region
  $region46: #{lstm_model_forward.1} parent=0 // pred_check
    _
  $region47: #{lstm_model_forward.1} parent=0 // pred_check_branch
    %3217 = sbr.rel (0) target = $region49
  $region48: #{lstm_model_forward.1} parent=0 // pred_region
    _
  $region49: #{lstm_model_forward.1} parent=0 // pred_fallthru
    _
  // Predicated region
  $region50: #{lstm_model_forward.1} parent=0 // pred_check
    _
  $region51: #{lstm_model_forward.1} parent=0 // pred_check_branch
    %3219 = sbr.rel (0) target = $region53
  $region52: #{lstm_model_forward.1} parent=0 // pred_region
    _
  $region53: #{lstm_model_forward.1} parent=0 // pred_fallthru
    _
  // Predicated region
  $region54: #{lstm_model_forward.1} parent=0 // pred_check
    _
  $region55: #{lstm_model_forward.1} parent=0 // pred_check_branch
    %3221 = sbr.rel (0) target = $region57
  $region56: #{lstm_model_forward.1} parent=0 // pred_region
    _
  $region57: #{lstm_model_forward.1} parent=0 // pred_fallthru
    _

</llo_original>
